<compile_context>
chip_gen: v6e
topology: v6e:2x2x1
jax: 0.10.0
libtpu: 0.0.40
codegen_flags: <defaults>
</compile_context>

<pallas_src>
import functools

import jax
import jax.numpy as jnp
from jax.experimental import pallas as pl
from jax.experimental.pallas import tpu as pltpu

KS = 3          # every conv lowered here is a 3x3 (the 1x1 shortcut is fused in)
PAD_CIN = 8     # RGB input channels zero-padded to 8 (sublane multiple)


# ----------------------------------------------------------------------------
# Pallas kernels:  y^T[Cout, TM] = W[Cout, K] @ col^T[K, TM]  (+bias)(+res)(+relu)
# ----------------------------------------------------------------------------
def _conv_kernel(w_ref, x_ref, b_ref, o_ref, *, relu):
    acc = jnp.dot(w_ref[...], x_ref[...], preferred_element_type=jnp.float32)
    y = acc + b_ref[...]                       # (Cout, TM) + (Cout, 1)
    if relu:
        y = jnp.maximum(y, 0.0)
    o_ref[...] = y.astype(o_ref.dtype)


def _conv_res_kernel(w_ref, x_ref, b_ref, r_ref, o_ref, *, relu):
    acc = jnp.dot(w_ref[...], x_ref[...], preferred_element_type=jnp.float32)
    y = acc + b_ref[...] + r_ref[...].astype(jnp.float32)
    if relu:
        y = jnp.maximum(y, 0.0)
    o_ref[...] = y.astype(o_ref.dtype)


def _conv_dual_kernel(w_ref, x_ref, b1_ref, b2_ref, o1_ref, o2_ref, *, c1):
    # one matmul produces [conv1_out ; shortcut_out] stacked along Cout (sublanes)
    acc = jnp.dot(w_ref[...], x_ref[...], preferred_element_type=jnp.float32)
    y1 = jnp.maximum(acc[:c1] + b1_ref[...], 0.0)   # conv1 path: bias + relu
    y2 = acc[c1:] + b2_ref[...]                     # shortcut path: bias only
    o1_ref[...] = y1.astype(o1_ref.dtype)
    o2_ref[...] = y2.astype(o2_ref.dtype)


# ----------------------------------------------------------------------------
# Glue: transposed im2col + pallas_call wrappers
# ----------------------------------------------------------------------------
def _im2col_t(x, ksize, stride, pad):
    """x: (C, B, H, W) -> (ksize*ksize*C, B*Ho*Wo); tap order (kh, kw, ci)."""
    C, B, H, W = x.shape
    xp = jnp.pad(x, ((0, 0), (0, 0), (pad, pad), (pad, pad)))
    Ho = (H + 2 * pad - ksize) // stride + 1
    Wo = (W + 2 * pad - ksize) // stride + 1
    taps = []
    for kh in range(ksize):
        for kw in range(ksize):
            taps.append(xp[:, :, kh:kh + stride * Ho:stride,
                               kw:kw + stride * Wo:stride])
    col = jnp.concatenate(taps, axis=0)              # (k*k*C, B, Ho, Wo)
    return col.reshape(ksize * ksize * C, B * Ho * Wo), (B, Ho, Wo)


def _pick_tile(M):
    # prefer >=2 lane-aligned grid steps (megacore) without excessive tiny steps
    for tm in (512, 256, 128):
        if M % tm == 0 and M // tm >= 2:
            return tm
    return M


def conv_bn(x, cp, *, stride, relu, residual=None):
    """x: (Cin, B, H, W) bf16; cp['w']: (Cout, 9*Cin) bf16 (BN folded),
    cp['b']: (Cout, 1) f32."""
    w, b = cp["w"], cp["b"]
    Cout, K = w.shape
    col, (B, Ho, Wo) = _im2col_t(x, KS, stride, KS // 2)
    M = B * Ho * Wo
    TM = _pick_tile(M)
    grid = (M // TM,)

    in_specs = [
        pl.BlockSpec((Cout, K), lambda i: (0, 0)),
        pl.BlockSpec((K, TM), lambda i: (0, i)),
        pl.BlockSpec((Cout, 1), lambda i: (0, 0)),
    ]
    args = [w, col, b]
    if residual is not None:
        res = residual.reshape(Cout, M)
        in_specs.append(pl.BlockSpec((Cout, TM), lambda i: (0, i)))
        args.append(res)
        kernel = functools.partial(_conv_res_kernel, relu=relu)
    else:
        kernel = functools.partial(_conv_kernel, relu=relu)

    out = pl.pallas_call(
        kernel,
        out_shape=jax.ShapeDtypeStruct((Cout, M), jnp.bfloat16),
        grid=grid,
        in_specs=in_specs,
        out_specs=pl.BlockSpec((Cout, TM), lambda i: (0, i)),
        compiler_params=pltpu.CompilerParams(dimension_semantics=("parallel",)),
    )(*args)
    return out.reshape(Cout, B, Ho, Wo)


def conv_dual(x, cp, *, stride):
    """Fused conv1(3x3) + projection-shortcut(1x1, centre tap) for a
    downsampling block.  Returns (conv1_out_relu, shortcut_out)."""
    w, b1, b2 = cp["w"], cp["b1"], cp["b2"]
    C1, C2 = b1.shape[0], b2.shape[0]
    K = w.shape[1]
    col, (B, Ho, Wo) = _im2col_t(x, KS, stride, KS // 2)
    M = B * Ho * Wo
    TM = _pick_tile(M)
    grid = (M // TM,)

    out1, out2 = pl.pallas_call(
        functools.partial(_conv_dual_kernel, c1=C1),
        out_shape=(jax.ShapeDtypeStruct((C1, M), jnp.bfloat16),
                   jax.ShapeDtypeStruct((C2, M), jnp.bfloat16)),
        grid=grid,
        in_specs=[
            pl.BlockSpec((C1 + C2, K), lambda i: (0, 0)),
            pl.BlockSpec((K, TM), lambda i: (0, i)),
            pl.BlockSpec((C1, 1), lambda i: (0, 0)),
            pl.BlockSpec((C2, 1), lambda i: (0, 0)),
        ],
        out_specs=(pl.BlockSpec((C1, TM), lambda i: (0, i)),
                   pl.BlockSpec((C2, TM), lambda i: (0, i))),
        compiler_params=pltpu.CompilerParams(dimension_semantics=("parallel",)),
    )(w, col, b1, b2)
    return out1.reshape(C1, B, Ho, Wo), out2.reshape(C2, B, Ho, Wo)


# ----------------------------------------------------------------------------
# Model: BasicBlock pieces + NetHead17 forward (activations in (C,B,H,W) bf16)
# ----------------------------------------------------------------------------
def basic_block_identity(x, blk):
    out = conv_bn(x, blk["conv1"], stride=1, relu=True)
    out = conv_bn(out, blk["conv2"], stride=1, relu=True, residual=x)
    return out


def net_head17_forward(x_nchw, params):
    # x_nchw: (B, 3, H, W) float32  -> transposed (C, B, H, W), 3ch padded to 8
    x = jnp.transpose(x_nchw, (1, 0, 2, 3))
    x = jnp.pad(x, ((0, PAD_CIN - x.shape[0]), (0, 0), (0, 0), (0, 0)))
    x = x.astype(jnp.bfloat16)

    # conv1 + bn1 + relu
    x = conv_bn(x, params["conv1"], stride=1, relu=True)

    # layer1: identity blocks
    for blk in params["layer1"]:
        x = basic_block_identity(x, blk)

    # layer2[0]: downsampling block, shortcut fused into conv1's matmul
    blk0 = params["layer2"][0]
    out, sc = conv_dual(x, blk0["dual"], stride=2)
    x = conv_bn(out, blk0["conv2"], stride=1, relu=True, residual=sc)
    for blk in params["layer2"][1:]:
        x = basic_block_identity(x, blk)
    last = x                                    # last_layer_x = layer2 output

    # layer3[0] head: conv1+bn1+relu, conv2+bn2 (no residual / no final relu)
    x = conv_bn(last, params["layer3_0"]["conv1"], stride=2, relu=True)
    x = conv_bn(x, params["layer3_0"]["conv2"], stride=1, relu=False)

    # back to PyTorch NCHW / float32
    x_out = jnp.transpose(x, (1, 0, 2, 3)).astype(jnp.float32)
    last_out = jnp.transpose(last, (1, 0, 2, 3)).astype(jnp.float32)
    return x_out, last_out


# ----------------------------------------------------------------------------
# Deterministic parameters: eval-mode BN folded into bf16 weights at build time
# ----------------------------------------------------------------------------
def _conv_bn_raw(key, cout, cin, k):
    k1, k2, k3, k4, k5 = jax.random.split(key, 5)
    fan_in = cin * k * k
    return dict(
        w=jax.random.normal(k1, (cout, cin, k, k), jnp.float32) / jnp.sqrt(fan_in),
        gamma=1.0 + 0.1 * jax.random.normal(k2, (cout,), jnp.float32),
        beta=0.1 * jax.random.normal(k3, (cout,), jnp.float32),
        mean=0.1 * jax.random.normal(k4, (cout,), jnp.float32),
        var=1.0 + 0.1 * jax.random.uniform(k5, (cout,), jnp.float32),
    )


def _fold(raw, pad_cin_to=None):
    eps = 1e-5
    scale = raw["gamma"] / jnp.sqrt(raw["var"] + eps)
    bias = raw["beta"] - raw["mean"] * scale
    w = raw["w"]
    cout, cin, kh, kw = w.shape
    if pad_cin_to is not None and pad_cin_to > cin:
        w = jnp.pad(w, ((0, 0), (0, pad_cin_to - cin), (0, 0), (0, 0)))
        cin = pad_cin_to
    w2 = jnp.transpose(w, (0, 2, 3, 1)).reshape(cout, kh * kw * cin)  # (kh,kw,ci)
    w2 = (w2 * scale[:, None]).astype(jnp.bfloat16)
    return dict(w=w2, b=bias.reshape(cout, 1).astype(jnp.float32))


def _fold_dual(raw_conv1, raw_sc):
    p1 = _fold(raw_conv1)                       # (C1, 9*Cin)
    psc = _fold(raw_sc)                         # (C2, Cin)   (1x1 conv)
    c1, k = p1["w"].shape
    c2, cin = psc["w"].shape
    w_sc = jnp.zeros((c2, k), jnp.bfloat16)
    w_sc = w_sc.at[:, 4 * cin:5 * cin].set(psc["w"])   # centre tap (kh=1,kw=1)
    return dict(w=jnp.concatenate([p1["w"], w_sc], axis=0), b1=p1["b"], b2=psc["b"])


def init_and_prepare_params(key, in_ch=3, widths=(8, 16, 32), num_blocks=(3, 4)):
    # ResNet-34 block counts [3, 4, 6, 3]; widths scaled down from (64,128,256).
    keys = iter(jax.random.split(key, 64))
    p = {"conv1": _fold(_conv_bn_raw(next(keys), widths[0], in_ch, 3),
                        pad_cin_to=PAD_CIN)}
    p["layer1"] = [
        dict(conv1=_fold(_conv_bn_raw(next(keys), widths[0], widths[0], 3)),
             conv2=_fold(_conv_bn_raw(next(keys), widths[0], widths[0], 3)))
        for _ in range(num_blocks[0])
    ]
    l2 = [dict(dual=_fold_dual(_conv_bn_raw(next(keys), widths[1], widths[0], 3),
                               _conv_bn_raw(next(keys), widths[1], widths[0], 1)),
               conv2=_fold(_conv_bn_raw(next(keys), widths[1], widths[1], 3)))]
    for _ in range(num_blocks[1] - 1):
        l2.append(dict(conv1=_fold(_conv_bn_raw(next(keys), widths[1], widths[1], 3)),
                       conv2=_fold(_conv_bn_raw(next(keys), widths[1], widths[1], 3))))
    p["layer2"] = l2
    p["layer3_0"] = dict(
        conv1=_fold(_conv_bn_raw(next(keys), widths[2], widths[1], 3)),
        conv2=_fold(_conv_bn_raw(next(keys), widths[2], widths[2], 3)),
    )
    return p


# ----------------------------------------------------------------------------
if __name__ == "__main__":
    key = jax.random.PRNGKey(0)
    kp, kx = jax.random.split(key)
    params = init_and_prepare_params(kp)

    B, C, H, W = 2, 3, 32, 32                    # CIFAR-style NCHW input
    x = jax.random.normal(kx, (B, C, H, W), jnp.float32)

    fwd = jax.jit(net_head17_forward)
    out, last = jax.block_until_ready(fwd(x, params))

    assert out.shape == (B, 32, 8, 8), out.shape          # layer3[0] partial out
    assert last.shape == (B, 16, 16, 16), last.shape      # last_layer_x (layer2)
    assert bool(jnp.all(jnp.isfinite(out)))
    assert bool(jnp.all(jnp.isfinite(last)))
    print("KERNEL_OK")
</pallas_src>

<mosaic_0001>
module attributes {stable_mosaic.version = 11 : i64} {
  func.func @_conv_kernel(%arg0: i32, %arg1: memref<8x72xbf16, #tpu.memory_space<vmem>>, %arg2: memref<72x512xbf16, #tpu.memory_space<vmem>>, %arg3: memref<8x1xf32, #tpu.memory_space<vmem>>, %arg4: memref<8x512xbf16, #tpu.memory_space<vmem>>) attributes {dimension_semantics = [#tpu.dimension_semantics<parallel>], iteration_bounds = array<i64: 4>, scalar_prefetch = 0 : i64, scratch_operands = 0 : i64, tpu.core_type = #tpu.core_type<tc>, window_params = [{pipeline_mode = #tpu.pipeline_mode<synchronous>, transform_indices = @transform_0, window_bounds = array<i64: 8, 72>}, {transform_indices = @transform_1, window_bounds = array<i64: 72, 512>}, {pipeline_mode = #tpu.pipeline_mode<synchronous>, transform_indices = @transform_2, window_bounds = array<i64: 8, 1>}, {transform_indices = @transform_3, window_bounds = array<i64: 8, 512>}]} {
    %c0 = arith.constant 0 : index
    %c0_0 = arith.constant 0 : index
    %0 = vector.load %arg1[%c0, %c0_0] : memref<8x72xbf16, #tpu.memory_space<vmem>>, vector<8x72xbf16>
    %c0_1 = arith.constant 0 : index
    %c0_2 = arith.constant 0 : index
    %1 = vector.load %arg2[%c0_1, %c0_2] : memref<72x512xbf16, #tpu.memory_space<vmem>>, vector<72x512xbf16>
    %cst = arith.constant dense<0.000000e+00> : vector<8x512xf32>
    %2 = tpu.matmul %0, %1, %cst {dimension_numbers = #tpu.dot_dimension_numbers<[1], [0], [0], [1], [0, 0, 1, 1], [], []>} : vector<8x72xbf16>, vector<72x512xbf16>, vector<8x512xf32> -> vector<8x512xf32>
    %c0_3 = arith.constant 0 : index
    %c0_4 = arith.constant 0 : index
    %3 = vector.load %arg3[%c0_3, %c0_4] : memref<8x1xf32, #tpu.memory_space<vmem>>, vector<8x1xf32>
    %4 = vector.broadcast %3 : vector<8x1xf32> to vector<8x512xf32>
    %5 = arith.addf %2, %4 : vector<8x512xf32>
    %cst_5 = arith.constant 0.000000e+00 : f32
    %6 = vector.broadcast %cst_5 : f32 to vector<8x512xf32>
    %7 = arith.maximumf %5, %6 : vector<8x512xf32>
    %8 = arith.truncf %7 : vector<8x512xf32> to vector<8x512xbf16>
    %c0_6 = arith.constant 0 : index
    %c0_7 = arith.constant 0 : index
    %9 = vector.load %arg4[%c0_6, %c0_7] : memref<8x512xbf16, #tpu.memory_space<vmem>>, vector<8x512xbf16>
    tpu.vector_store %arg4[%c0_6, %c0_7], %8 {strides = array<i32>} : memref<8x512xbf16, #tpu.memory_space<vmem>>, vector<8x512xbf16>,
    return
  }
  func.func @transform_0(%arg0: i32) -> (i32, i32) {
    %c0_i32 = arith.constant 0 : i32
    %c0_i32_0 = arith.constant 0 : i32
    %c0_i32_1 = arith.constant 0 : i32
    return %c0_i32, %c0_i32_0 : i32, i32
  }
  func.func @transform_1(%arg0: i32) -> (i32, i32) {
    %c0_i32 = arith.constant 0 : i32
    %c0_i32_0 = arith.constant 0 : i32
    return %c0_i32, %arg0 : i32, i32
  }
  func.func @transform_2(%arg0: i32) -> (i32, i32) {
    %c0_i32 = arith.constant 0 : i32
    %c0_i32_0 = arith.constant 0 : i32
    %c0_i32_1 = arith.constant 0 : i32
    return %c0_i32, %c0_i32_0 : i32, i32
  }
  func.func @transform_3(%arg0: i32) -> (i32, i32) {
    %c0_i32 = arith.constant 0 : i32
    %c0_i32_0 = arith.constant 0 : i32
    return %c0_i32, %arg0 : i32, i32
  }
}

module attributes {stable_mosaic.version = 11 : i64} {
  func.func @_conv_res_kernel(%arg0: i32, %arg1: memref<8x72xbf16, #tpu.memory_space<vmem>>, %arg2: memref<72x512xbf16, #tpu.memory_space<vmem>>, %arg3: memref<8x1xf32, #tpu.memory_space<vmem>>, %arg4: memref<8x512xbf16, #tpu.memory_space<vmem>>, %arg5: memref<8x512xbf16, #tpu.memory_space<vmem>>) attributes {dimension_semantics = [#tpu.dimension_semantics<parallel>], iteration_bounds = array<i64: 4>, scalar_prefetch = 0 : i64, scratch_operands = 0 : i64, tpu.core_type = #tpu.core_type<tc>, window_params = [{pipeline_mode = #tpu.pipeline_mode<synchronous>, transform_indices = @transform_0, window_bounds = array<i64: 8, 72>}, {transform_indices = @transform_1, window_bounds = array<i64: 72, 512>}, {pipeline_mode = #tpu.pipeline_mode<synchronous>, transform_indices = @transform_2, window_bounds = array<i64: 8, 1>}, {transform_indices = @transform_3, window_bounds = array<i64: 8, 512>}, {transform_indices = @transform_4, window_bounds = array<i64: 8, 512>}]} {
    %c0 = arith.constant 0 : index
    %c0_0 = arith.constant 0 : index
    %0 = vector.load %arg1[%c0, %c0_0] : memref<8x72xbf16, #tpu.memory_space<vmem>>, vector<8x72xbf16>
    %c0_1 = arith.constant 0 : index
    %c0_2 = arith.constant 0 : index
    %1 = vector.load %arg2[%c0_1, %c0_2] : memref<72x512xbf16, #tpu.memory_space<vmem>>, vector<72x512xbf16>
    %cst = arith.constant dense<0.000000e+00> : vector<8x512xf32>
    %2 = tpu.matmul %0, %1, %cst {dimension_numbers = #tpu.dot_dimension_numbers<[1], [0], [0], [1], [0, 0, 1, 1], [], []>} : vector<8x72xbf16>, vector<72x512xbf16>, vector<8x512xf32> -> vector<8x512xf32>
    %c0_3 = arith.constant 0 : index
    %c0_4 = arith.constant 0 : index
    %3 = vector.load %arg3[%c0_3, %c0_4] : memref<8x1xf32, #tpu.memory_space<vmem>>, vector<8x1xf32>
    %4 = vector.broadcast %3 : vector<8x1xf32> to vector<8x512xf32>
    %5 = arith.addf %2, %4 : vector<8x512xf32>
    %c0_5 = arith.constant 0 : index
    %c0_6 = arith.constant 0 : index
    %6 = vector.load %arg4[%c0_5, %c0_6] : memref<8x512xbf16, #tpu.memory_space<vmem>>, vector<8x512xbf16>
    %7 = arith.extf %6 : vector<8x512xbf16> to vector<8x512xf32>
    %8 = arith.addf %5, %7 : vector<8x512xf32>
    %cst_7 = arith.constant 0.000000e+00 : f32
    %9 = vector.broadcast %cst_7 : f32 to vector<8x512xf32>
    %10 = arith.maximumf %8, %9 : vector<8x512xf32>
    %11 = arith.truncf %10 : vector<8x512xf32> to vector<8x512xbf16>
    %c0_8 = arith.constant 0 : index
    %c0_9 = arith.constant 0 : index
    %12 = vector.load %arg5[%c0_8, %c0_9] : memref<8x512xbf16, #tpu.memory_space<vmem>>, vector<8x512xbf16>
    tpu.vector_store %arg5[%c0_8, %c0_9], %11 {strides = array<i32>} : memref<8x512xbf16, #tpu.memory_space<vmem>>, vector<8x512xbf16>,
    return
  }
  func.func @transform_0(%arg0: i32) -> (i32, i32) {
    %c0_i32 = arith.constant 0 : i32
    %c0_i32_0 = arith.constant 0 : i32
    %c0_i32_1 = arith.constant 0 : i32
    return %c0_i32, %c0_i32_0 : i32, i32
  }
  func.func @transform_1(%arg0: i32) -> (i32, i32) {
    %c0_i32 = arith.constant 0 : i32
    %c0_i32_0 = arith.constant 0 : i32
    return %c0_i32, %arg0 : i32, i32
  }
  func.func @transform_2(%arg0: i32) -> (i32, i32) {
    %c0_i32 = arith.constant 0 : i32
    %c0_i32_0 = arith.constant 0 : i32
    %c0_i32_1 = arith.constant 0 : i32
    return %c0_i32, %c0_i32_0 : i32, i32
  }
  func.func @transform_3(%arg0: i32) -> (i32, i32) {
    %c0_i32 = arith.constant 0 : i32
    %c0_i32_0 = arith.constant 0 : i32
    return %c0_i32, %arg0 : i32, i32
  }
  func.func @transform_4(%arg0: i32) -> (i32, i32) {
    %c0_i32 = arith.constant 0 : i32
    %c0_i32_0 = arith.constant 0 : i32
    return %c0_i32, %arg0 : i32, i32
  }
}

module attributes {stable_mosaic.version = 11 : i64} {
  func.func @_conv_dual_kernel(%arg0: i32, %arg1: memref<32x72xbf16, #tpu.memory_space<vmem>>, %arg2: memref<72x256xbf16, #tpu.memory_space<vmem>>, %arg3: memref<16x1xf32, #tpu.memory_space<vmem>>, %arg4: memref<16x1xf32, #tpu.memory_space<vmem>>, %arg5: memref<16x256xbf16, #tpu.memory_space<vmem>>, %arg6: memref<16x256xbf16, #tpu.memory_space<vmem>>) attributes {dimension_semantics = [#tpu.dimension_semantics<parallel>], iteration_bounds = array<i64: 2>, scalar_prefetch = 0 : i64, scratch_operands = 0 : i64, tpu.core_type = #tpu.core_type<tc>, window_params = [{pipeline_mode = #tpu.pipeline_mode<synchronous>, transform_indices = @transform_0, window_bounds = array<i64: 32, 72>}, {transform_indices = @transform_1, window_bounds = array<i64: 72, 256>}, {pipeline_mode = #tpu.pipeline_mode<synchronous>, transform_indices = @transform_2, window_bounds = array<i64: 16, 1>}, {pipeline_mode = #tpu.pipeline_mode<synchronous>, transform_indices = @transform_3, window_bounds = array<i64: 16, 1>}, {transform_indices = @transform_4, window_bounds = array<i64: 16, 256>}, {transform_indices = @transform_5, window_bounds = array<i64: 16, 256>}]} {
    %c0 = arith.constant 0 : index
    %c0_0 = arith.constant 0 : index
    %0 = vector.load %arg1[%c0, %c0_0] : memref<32x72xbf16, #tpu.memory_space<vmem>>, vector<32x72xbf16>
    %c0_1 = arith.constant 0 : index
    %c0_2 = arith.constant 0 : index
    %1 = vector.load %arg2[%c0_1, %c0_2] : memref<72x256xbf16, #tpu.memory_space<vmem>>, vector<72x256xbf16>
    %cst = arith.constant dense<0.000000e+00> : vector<32x256xf32>
    %2 = tpu.matmul %0, %1, %cst {dimension_numbers = #tpu.dot_dimension_numbers<[1], [0], [0], [1], [0, 0, 1, 1], [], []>} : vector<32x72xbf16>, vector<72x256xbf16>, vector<32x256xf32> -> vector<32x256xf32>
    %3 = vector.extract_strided_slice %2 {offsets = [0, 0], sizes = [16, 256], strides = [1, 1]} : vector<32x256xf32> to vector<16x256xf32>
    %c0_3 = arith.constant 0 : index
    %c0_4 = arith.constant 0 : index
    %4 = vector.load %arg3[%c0_3, %c0_4] : memref<16x1xf32, #tpu.memory_space<vmem>>, vector<16x1xf32>
    %5 = vector.broadcast %4 : vector<16x1xf32> to vector<16x256xf32>
    %6 = arith.addf %3, %5 : vector<16x256xf32>
    %cst_5 = arith.constant 0.000000e+00 : f32
    %7 = vector.broadcast %cst_5 : f32 to vector<16x256xf32>
    %8 = arith.maximumf %6, %7 : vector<16x256xf32>
    %9 = vector.extract_strided_slice %2 {offsets = [16, 0], sizes = [16, 256], strides = [1, 1]} : vector<32x256xf32> to vector<16x256xf32>
    %c0_6 = arith.constant 0 : index
    %c0_7 = arith.constant 0 : index
    %10 = vector.load %arg4[%c0_6, %c0_7] : memref<16x1xf32, #tpu.memory_space<vmem>>, vector<16x1xf32>
    %11 = vector.broadcast %10 : vector<16x1xf32> to vector<16x256xf32>
    %12 = arith.addf %9, %11 : vector<16x256xf32>
    %13 = arith.truncf %8 : vector<16x256xf32> to vector<16x256xbf16>
    %c0_8 = arith.constant 0 : index
    %c0_9 = arith.constant 0 : index
    %14 = vector.load %arg5[%c0_8, %c0_9] : memref<16x256xbf16, #tpu.memory_space<vmem>>, vector<16x256xbf16>
    tpu.vector_store %arg5[%c0_8, %c0_9], %13 {strides = array<i32>} : memref<16x256xbf16, #tpu.memory_space<vmem>>, vector<16x256xbf16>,
    %15 = arith.truncf %12 : vector<16x256xf32> to vector<16x256xbf16>
    %c0_10 = arith.constant 0 : index
    %c0_11 = arith.constant 0 : index
    %16 = vector.load %arg6[%c0_10, %c0_11] : memref<16x256xbf16, #tpu.memory_space<vmem>>, vector<16x256xbf16>
    tpu.vector_store %arg6[%c0_10, %c0_11], %15 {strides = array<i32>} : memref<16x256xbf16, #tpu.memory_space<vmem>>, vector<16x256xbf16>,
    return
  }
  func.func @transform_0(%arg0: i32) -> (i32, i32) {
    %c0_i32 = arith.constant 0 : i32
    %c0_i32_0 = arith.constant 0 : i32
    %c0_i32_1 = arith.constant 0 : i32
    return %c0_i32, %c0_i32_0 : i32, i32
  }
  func.func @transform_1(%arg0: i32) -> (i32, i32) {
    %c0_i32 = arith.constant 0 : i32
    %c0_i32_0 = arith.constant 0 : i32
    return %c0_i32, %arg0 : i32, i32
  }
  func.func @transform_2(%arg0: i32) -> (i32, i32) {
    %c0_i32 = arith.constant 0 : i32
    %c0_i32_0 = arith.constant 0 : i32
    %c0_i32_1 = arith.constant 0 : i32
    return %c0_i32, %c0_i32_0 : i32, i32
  }
  func.func @transform_3(%arg0: i32) -> (i32, i32) {
    %c0_i32 = arith.constant 0 : i32
    %c0_i32_0 = arith.constant 0 : i32
    %c0_i32_1 = arith.constant 0 : i32
    return %c0_i32, %c0_i32_0 : i32, i32
  }
  func.func @transform_4(%arg0: i32) -> (i32, i32) {
    %c0_i32 = arith.constant 0 : i32
    %c0_i32_0 = arith.constant 0 : i32
    return %c0_i32, %arg0 : i32, i32
  }
  func.func @transform_5(%arg0: i32) -> (i32, i32) {
    %c0_i32 = arith.constant 0 : i32
    %c0_i32_0 = arith.constant 0 : i32
    return %c0_i32, %arg0 : i32, i32
  }
}

module attributes {stable_mosaic.version = 11 : i64} {
  func.func @_conv_res_kernel(%arg0: i32, %arg1: memref<16x144xbf16, #tpu.memory_space<vmem>>, %arg2: memref<144x256xbf16, #tpu.memory_space<vmem>>, %arg3: memref<16x1xf32, #tpu.memory_space<vmem>>, %arg4: memref<16x256xbf16, #tpu.memory_space<vmem>>, %arg5: memref<16x256xbf16, #tpu.memory_space<vmem>>) attributes {dimension_semantics = [#tpu.dimension_semantics<parallel>], iteration_bounds = array<i64: 2>, scalar_prefetch = 0 : i64, scratch_operands = 0 : i64, tpu.core_type = #tpu.core_type<tc>, window_params = [{pipeline_mode = #tpu.pipeline_mode<synchronous>, transform_indices = @transform_0, window_bounds = array<i64: 16, 144>}, {transform_indices = @transform_1, window_bounds = array<i64: 144, 256>}, {pipeline_mode = #tpu.pipeline_mode<synchronous>, transform_indices = @transform_2, window_bounds = array<i64: 16, 1>}, {transform_indices = @transform_3, window_bounds = array<i64: 16, 256>}, {transform_indices = @transform_4, window_bounds = array<i64: 16, 256>}]} {
    %c0 = arith.constant 0 : index
    %c0_0 = arith.constant 0 : index
    %0 = vector.load %arg1[%c0, %c0_0] : memref<16x144xbf16, #tpu.memory_space<vmem>>, vector<16x144xbf16>
    %c0_1 = arith.constant 0 : index
    %c0_2 = arith.constant 0 : index
    %1 = vector.load %arg2[%c0_1, %c0_2] : memref<144x256xbf16, #tpu.memory_space<vmem>>, vector<144x256xbf16>
    %cst = arith.constant dense<0.000000e+00> : vector<16x256xf32>
    %2 = tpu.matmul %0, %1, %cst {dimension_numbers = #tpu.dot_dimension_numbers<[1], [0], [0], [1], [0, 0, 1, 1], [], []>} : vector<16x144xbf16>, vector<144x256xbf16>, vector<16x256xf32> -> vector<16x256xf32>
    %c0_3 = arith.constant 0 : index
    %c0_4 = arith.constant 0 : index
    %3 = vector.load %arg3[%c0_3, %c0_4] : memref<16x1xf32, #tpu.memory_space<vmem>>, vector<16x1xf32>
    %4 = vector.broadcast %3 : vector<16x1xf32> to vector<16x256xf32>
    %5 = arith.addf %2, %4 : vector<16x256xf32>
    %c0_5 = arith.constant 0 : index
    %c0_6 = arith.constant 0 : index
    %6 = vector.load %arg4[%c0_5, %c0_6] : memref<16x256xbf16, #tpu.memory_space<vmem>>, vector<16x256xbf16>
    %7 = arith.extf %6 : vector<16x256xbf16> to vector<16x256xf32>
    %8 = arith.addf %5, %7 : vector<16x256xf32>
    %cst_7 = arith.constant 0.000000e+00 : f32
    %9 = vector.broadcast %cst_7 : f32 to vector<16x256xf32>
    %10 = arith.maximumf %8, %9 : vector<16x256xf32>
    %11 = arith.truncf %10 : vector<16x256xf32> to vector<16x256xbf16>
    %c0_8 = arith.constant 0 : index
    %c0_9 = arith.constant 0 : index
    %12 = vector.load %arg5[%c0_8, %c0_9] : memref<16x256xbf16, #tpu.memory_space<vmem>>, vector<16x256xbf16>
    tpu.vector_store %arg5[%c0_8, %c0_9], %11 {strides = array<i32>} : memref<16x256xbf16, #tpu.memory_space<vmem>>, vector<16x256xbf16>,
    return
  }
  func.func @transform_0(%arg0: i32) -> (i32, i32) {
    %c0_i32 = arith.constant 0 : i32
    %c0_i32_0 = arith.constant 0 : i32
    %c0_i32_1 = arith.constant 0 : i32
    return %c0_i32, %c0_i32_0 : i32, i32
  }
  func.func @transform_1(%arg0: i32) -> (i32, i32) {
    %c0_i32 = arith.constant 0 : i32
    %c0_i32_0 = arith.constant 0 : i32
    return %c0_i32, %arg0 : i32, i32
  }
  func.func @transform_2(%arg0: i32) -> (i32, i32) {
    %c0_i32 = arith.constant 0 : i32
    %c0_i32_0 = arith.constant 0 : i32
    %c0_i32_1 = arith.constant 0 : i32
    return %c0_i32, %c0_i32_0 : i32, i32
  }
  func.func @transform_3(%arg0: i32) -> (i32, i32) {
    %c0_i32 = arith.constant 0 : i32
    %c0_i32_0 = arith.constant 0 : i32
    return %c0_i32, %arg0 : i32, i32
  }
  func.func @transform_4(%arg0: i32) -> (i32, i32) {
    %c0_i32 = arith.constant 0 : i32
    %c0_i32_0 = arith.constant 0 : i32
    return %c0_i32, %arg0 : i32, i32
  }
}

module attributes {stable_mosaic.version = 11 : i64} {
  func.func @_conv_kernel(%arg0: i32, %arg1: memref<16x144xbf16, #tpu.memory_space<vmem>>, %arg2: memref<144x256xbf16, #tpu.memory_space<vmem>>, %arg3: memref<16x1xf32, #tpu.memory_space<vmem>>, %arg4: memref<16x256xbf16, #tpu.memory_space<vmem>>) attributes {dimension_semantics = [#tpu.dimension_semantics<parallel>], iteration_bounds = array<i64: 2>, scalar_prefetch = 0 : i64, scratch_operands = 0 : i64, tpu.core_type = #tpu.core_type<tc>, window_params = [{pipeline_mode = #tpu.pipeline_mode<synchronous>, transform_indices = @transform_0, window_bounds = array<i64: 16, 144>}, {transform_indices = @transform_1, window_bounds = array<i64: 144, 256>}, {pipeline_mode = #tpu.pipeline_mode<synchronous>, transform_indices = @transform_2, window_bounds = array<i64: 16, 1>}, {transform_indices = @transform_3, window_bounds = array<i64: 16, 256>}]} {
    %c0 = arith.constant 0 : index
    %c0_0 = arith.constant 0 : index
    %0 = vector.load %arg1[%c0, %c0_0] : memref<16x144xbf16, #tpu.memory_space<vmem>>, vector<16x144xbf16>
    %c0_1 = arith.constant 0 : index
    %c0_2 = arith.constant 0 : index
    %1 = vector.load %arg2[%c0_1, %c0_2] : memref<144x256xbf16, #tpu.memory_space<vmem>>, vector<144x256xbf16>
    %cst = arith.constant dense<0.000000e+00> : vector<16x256xf32>
    %2 = tpu.matmul %0, %1, %cst {dimension_numbers = #tpu.dot_dimension_numbers<[1], [0], [0], [1], [0, 0, 1, 1], [], []>} : vector<16x144xbf16>, vector<144x256xbf16>, vector<16x256xf32> -> vector<16x256xf32>
    %c0_3 = arith.constant 0 : index
    %c0_4 = arith.constant 0 : index
    %3 = vector.load %arg3[%c0_3, %c0_4] : memref<16x1xf32, #tpu.memory_space<vmem>>, vector<16x1xf32>
    %4 = vector.broadcast %3 : vector<16x1xf32> to vector<16x256xf32>
    %5 = arith.addf %2, %4 : vector<16x256xf32>
    %cst_5 = arith.constant 0.000000e+00 : f32
    %6 = vector.broadcast %cst_5 : f32 to vector<16x256xf32>
    %7 = arith.maximumf %5, %6 : vector<16x256xf32>
    %8 = arith.truncf %7 : vector<16x256xf32> to vector<16x256xbf16>
    %c0_6 = arith.constant 0 : index
    %c0_7 = arith.constant 0 : index
    %9 = vector.load %arg4[%c0_6, %c0_7] : memref<16x256xbf16, #tpu.memory_space<vmem>>, vector<16x256xbf16>
    tpu.vector_store %arg4[%c0_6, %c0_7], %8 {strides = array<i32>} : memref<16x256xbf16, #tpu.memory_space<vmem>>, vector<16x256xbf16>,
    return
  }
  func.func @transform_0(%arg0: i32) -> (i32, i32) {
    %c0_i32 = arith.constant 0 : i32
    %c0_i32_0 = arith.constant 0 : i32
    %c0_i32_1 = arith.constant 0 : i32
    return %c0_i32, %c0_i32_0 : i32, i32
  }
  func.func @transform_1(%arg0: i32) -> (i32, i32) {
    %c0_i32 = arith.constant 0 : i32
    %c0_i32_0 = arith.constant 0 : i32
    return %c0_i32, %arg0 : i32, i32
  }
  func.func @transform_2(%arg0: i32) -> (i32, i32) {
    %c0_i32 = arith.constant 0 : i32
    %c0_i32_0 = arith.constant 0 : i32
    %c0_i32_1 = arith.constant 0 : i32
    return %c0_i32, %c0_i32_0 : i32, i32
  }
  func.func @transform_3(%arg0: i32) -> (i32, i32) {
    %c0_i32 = arith.constant 0 : i32
    %c0_i32_0 = arith.constant 0 : i32
    return %c0_i32, %arg0 : i32, i32
  }
}

module attributes {stable_mosaic.version = 11 : i64} {
  func.func @_conv_kernel(%arg0: i32, %arg1: memref<32x144xbf16, #tpu.memory_space<vmem>>, %arg2: memref<144x128xbf16, #tpu.memory_space<vmem>>, %arg3: memref<32x1xf32, #tpu.memory_space<vmem>>, %arg4: memref<32x128xbf16, #tpu.memory_space<vmem>>) attributes {dimension_semantics = [#tpu.dimension_semantics<parallel>], iteration_bounds = array<i64: 1>, scalar_prefetch = 0 : i64, scratch_operands = 0 : i64, tpu.core_type = #tpu.core_type<tc>, window_params = [{pipeline_mode = #tpu.pipeline_mode<synchronous>, transform_indices = @transform_0, window_bounds = array<i64: 32, 144>}, {transform_indices = @transform_1, window_bounds = array<i64: 144, 128>}, {pipeline_mode = #tpu.pipeline_mode<synchronous>, transform_indices = @transform_2, window_bounds = array<i64: 32, 1>}, {transform_indices = @transform_3, window_bounds = array<i64: 32, 128>}]} {
    %c0 = arith.constant 0 : index
    %c0_0 = arith.constant 0 : index
    %0 = vector.load %arg1[%c0, %c0_0] : memref<32x144xbf16, #tpu.memory_space<vmem>>, vector<32x144xbf16>
    %c0_1 = arith.constant 0 : index
    %c0_2 = arith.constant 0 : index
    %1 = vector.load %arg2[%c0_1, %c0_2] : memref<144x128xbf16, #tpu.memory_space<vmem>>, vector<144x128xbf16>
    %cst = arith.constant dense<0.000000e+00> : vector<32x128xf32>
    %2 = tpu.matmul %0, %1, %cst {dimension_numbers = #tpu.dot_dimension_numbers<[1], [0], [0], [1], [0, 0, 1, 1], [], []>} : vector<32x144xbf16>, vector<144x128xbf16>, vector<32x128xf32> -> vector<32x128xf32>
    %c0_3 = arith.constant 0 : index
    %c0_4 = arith.constant 0 : index
    %3 = vector.load %arg3[%c0_3, %c0_4] : memref<32x1xf32, #tpu.memory_space<vmem>>, vector<32x1xf32>
    %4 = vector.broadcast %3 : vector<32x1xf32> to vector<32x128xf32>
    %5 = arith.addf %2, %4 : vector<32x128xf32>
    %cst_5 = arith.constant 0.000000e+00 : f32
    %6 = vector.broadcast %cst_5 : f32 to vector<32x128xf32>
    %7 = arith.maximumf %5, %6 : vector<32x128xf32>
    %8 = arith.truncf %7 : vector<32x128xf32> to vector<32x128xbf16>
    %c0_6 = arith.constant 0 : index
    %c0_7 = arith.constant 0 : index
    %9 = vector.load %arg4[%c0_6, %c0_7] : memref<32x128xbf16, #tpu.memory_space<vmem>>, vector<32x128xbf16>
    tpu.vector_store %arg4[%c0_6, %c0_7], %8 {strides = array<i32>} : memref<32x128xbf16, #tpu.memory_space<vmem>>, vector<32x128xbf16>,
    return
  }
  func.func @transform_0(%arg0: i32) -> (i32, i32) {
    %c0_i32 = arith.constant 0 : i32
    %c0_i32_0 = arith.constant 0 : i32
    %c0_i32_1 = arith.constant 0 : i32
    return %c0_i32, %c0_i32_0 : i32, i32
  }
  func.func @transform_1(%arg0: i32) -> (i32, i32) {
    %c0_i32 = arith.constant 0 : i32
    %c0_i32_0 = arith.constant 0 : i32
    return %c0_i32, %arg0 : i32, i32
  }
  func.func @transform_2(%arg0: i32) -> (i32, i32) {
    %c0_i32 = arith.constant 0 : i32
    %c0_i32_0 = arith.constant 0 : i32
    %c0_i32_1 = arith.constant 0 : i32
    return %c0_i32, %c0_i32_0 : i32, i32
  }
  func.func @transform_3(%arg0: i32) -> (i32, i32) {
    %c0_i32 = arith.constant 0 : i32
    %c0_i32_0 = arith.constant 0 : i32
    return %c0_i32, %arg0 : i32, i32
  }
}

module attributes {stable_mosaic.version = 11 : i64} {
  func.func @_conv_kernel(%arg0: i32, %arg1: memref<32x288xbf16, #tpu.memory_space<vmem>>, %arg2: memref<288x128xbf16, #tpu.memory_space<vmem>>, %arg3: memref<32x1xf32, #tpu.memory_space<vmem>>, %arg4: memref<32x128xbf16, #tpu.memory_space<vmem>>) attributes {dimension_semantics = [#tpu.dimension_semantics<parallel>], iteration_bounds = array<i64: 1>, scalar_prefetch = 0 : i64, scratch_operands = 0 : i64, tpu.core_type = #tpu.core_type<tc>, window_params = [{pipeline_mode = #tpu.pipeline_mode<synchronous>, transform_indices = @transform_0, window_bounds = array<i64: 32, 288>}, {transform_indices = @transform_1, window_bounds = array<i64: 288, 128>}, {pipeline_mode = #tpu.pipeline_mode<synchronous>, transform_indices = @transform_2, window_bounds = array<i64: 32, 1>}, {transform_indices = @transform_3, window_bounds = array<i64: 32, 128>}]} {
    %c0 = arith.constant 0 : index
    %c0_0 = arith.constant 0 : index
    %0 = vector.load %arg1[%c0, %c0_0] : memref<32x288xbf16, #tpu.memory_space<vmem>>, vector<32x288xbf16>
    %c0_1 = arith.constant 0 : index
    %c0_2 = arith.constant 0 : index
    %1 = vector.load %arg2[%c0_1, %c0_2] : memref<288x128xbf16, #tpu.memory_space<vmem>>, vector<288x128xbf16>
    %cst = arith.constant dense<0.000000e+00> : vector<32x128xf32>
    %2 = tpu.matmul %0, %1, %cst {dimension_numbers = #tpu.dot_dimension_numbers<[1], [0], [0], [1], [0, 0, 1, 1], [], []>} : vector<32x288xbf16>, vector<288x128xbf16>, vector<32x128xf32> -> vector<32x128xf32>
    %c0_3 = arith.constant 0 : index
    %c0_4 = arith.constant 0 : index
    %3 = vector.load %arg3[%c0_3, %c0_4] : memref<32x1xf32, #tpu.memory_space<vmem>>, vector<32x1xf32>
    %4 = vector.broadcast %3 : vector<32x1xf32> to vector<32x128xf32>
    %5 = arith.addf %2, %4 : vector<32x128xf32>
    %6 = arith.truncf %5 : vector<32x128xf32> to vector<32x128xbf16>
    %c0_5 = arith.constant 0 : index
    %c0_6 = arith.constant 0 : index
    %7 = vector.load %arg4[%c0_5, %c0_6] : memref<32x128xbf16, #tpu.memory_space<vmem>>, vector<32x128xbf16>
    tpu.vector_store %arg4[%c0_5, %c0_6], %6 {strides = array<i32>} : memref<32x128xbf16, #tpu.memory_space<vmem>>, vector<32x128xbf16>,
    return
  }
  func.func @transform_0(%arg0: i32) -> (i32, i32) {
    %c0_i32 = arith.constant 0 : i32
    %c0_i32_0 = arith.constant 0 : i32
    %c0_i32_1 = arith.constant 0 : i32
    return %c0_i32, %c0_i32_0 : i32, i32
  }
  func.func @transform_1(%arg0: i32) -> (i32, i32) {
    %c0_i32 = arith.constant 0 : i32
    %c0_i32_0 = arith.constant 0 : i32
    return %c0_i32, %arg0 : i32, i32
  }
  func.func @transform_2(%arg0: i32) -> (i32, i32) {
    %c0_i32 = arith.constant 0 : i32
    %c0_i32_0 = arith.constant 0 : i32
    %c0_i32_1 = arith.constant 0 : i32
    return %c0_i32, %c0_i32_0 : i32, i32
  }
  func.func @transform_3(%arg0: i32) -> (i32, i32) {
    %c0_i32 = arith.constant 0 : i32
    %c0_i32_0 = arith.constant 0 : i32
    return %c0_i32, %arg0 : i32, i32
  }
}

</mosaic_0001>

<llo_original>
// kernel: net_head17_forward.17
$region0: #{net_head17_forward.17}
  #allocation0 [shape = 'u32[]', space=smem, size = 0x4, offset = 0x4, fixed_abs, tag = 'smem constant byte address 0x4 - core index']
  #allocation1 [shape = 'u32[144,128]{1,0:T(1,128)}', space=vmem, size = 0x12000, scoped, tag = 'internal scratch']
  %s0 = inlined_call_operand.vmem [shape: bf16[8,72], index: 0, kind: input, shape index: {}]
  %s1 = inlined_call_operand.vmem [shape: bf16[72,2048], index: 1, kind: input, shape index: {}]
  %s2 = inlined_call_operand.vmem [shape: f32[8,1], index: 2, kind: input, shape index: {}]
  %s3 = inlined_call_operand.vmem [shape: bf16[8,2048], index: 3, kind: output, shape index: {}]
  %s4 = sld [smem:[#allocation0]]
  $region68: #{net_head17_forward.17} parent=0
    _
  %s6 = ssub.s32 1, %s4
  %s7 = scalar_select 0, %s6, %s4
  $region1: #{net_head17_forward.17} parent=0
    #allocation2 [shape = 'u8[147456]{0}', space=vmem, size = 0x24000, scoped, tag = 'input window, operand 1']
    loop: start=0, step=1, limit=6
    $region2: #{net_head17_forward.17} parent=1 // loop_pre_header
      _
    $region3: #{net_head17_forward.17} parent=1 // loop_header
      %s9 = sphi 0, %s13
      %p10 = scmp.ge.s32.totalorder %s9, 6
      %s17 = sphi 0, %s17
      %s19 = sphi 0, %s17
      %s20 = sphi 0, %s19
      %s34 = sphi 0, %s20
      %s40 = sphi 0, %s42
      %s43 = sphi 0, %s40
      %s44 = sphi 0, %s43
      %s60 = sphi 0, %s44
      %s64 = sphi 0, %s64
      %s66 = sphi 0, %s64
      %s67 = sphi 0, %s66
      %s81 = sphi 0, %s67
      %s87 = sphi 0, %s89
      %s90 = sphi 0, %s87
      %s91 = sphi 0, %s90
      %s107 = sphi 0, %s91
    $region4: #{net_head17_forward.17} parent=1 // loop_header_branch
      %12 = sbr.rel (%p10) target = $region8
    $region5: #{net_head17_forward.17} parent=1 // loop_body
      %s14 = ssub.s32 %s9, 1
      %s15 = ssub.s32 %s9, 2
      %s16 = sadd.s32 %s9, 1
      %s18 = sadd.s32 %s17, 1
      %p21 = scmp.eq.s32.totalorder %s9, 3
      %p22 = scmp.ne.s32.totalorder %s17, %s19
      %p23 = scmp.eq.s32.totalorder %s9, 0
      %p24 = por %p22, %p23
      %p25 = scmp.ne.s32.totalorder %s17, %s19
      %p26 = scmp.eq.s32.totalorder %s14, 3
      %p27 = por %p25, %p26
      %p28 = scmp.ne.s32.totalorder %s19, %s20
      %p29 = scmp.eq.s32.totalorder %s14, 0
      %p30 = por %p28, %p29
      %p31 = scmp.ne.s32.totalorder %s19, %s20
      %p32 = scmp.eq.s32.totalorder %s15, 3
      %p33 = por %p31, %p32
      %p35 = scmp.ne.s32.totalorder %s20, %s34
      %p36 = scmp.eq.s32.totalorder %s15, 0
      %p37 = por %p35, %p36
      %s38 = ssub.s32 %s9, %s16
      %p39 = scmp.eq.s32.totalorder %s38, 0
      %s41 = sadd.s32 %s40, 1
      %s42 = scalar_select %p39, %s40, %s41
      %p45 = pneg %p39
      %p46 = scmp.eq.s32.totalorder %s9, 3
      %p47 = por %p45, %p46
      %p48 = scmp.ne.s32.totalorder %s40, %s43
      %p49 = scmp.eq.s32.totalorder %s9, 0
      %p50 = por %p48, %p49
      %p51 = scmp.ne.s32.totalorder %s40, %s43
      %p52 = scmp.eq.s32.totalorder %s14, 3
      %p53 = por %p51, %p52
      %p54 = scmp.ne.s32.totalorder %s43, %s44
      %p55 = scmp.eq.s32.totalorder %s14, 0
      %p56 = por %p54, %p55
      %p57 = scmp.ne.s32.totalorder %s43, %s44
      %p58 = scmp.eq.s32.totalorder %s15, 3
      %p59 = por %p57, %p58
      %p61 = scmp.ne.s32.totalorder %s44, %s60
      %p62 = scmp.eq.s32.totalorder %s15, 0
      %p63 = por %p61, %p62
      %s65 = sadd.s32 %s64, 1
      %p68 = scmp.eq.s32.totalorder %s9, 3
      %p69 = scmp.ne.s32.totalorder %s64, %s66
      %p70 = scmp.eq.s32.totalorder %s9, 0
      %p71 = por %p69, %p70
      %p72 = scmp.ne.s32.totalorder %s64, %s66
      %p73 = scmp.eq.s32.totalorder %s14, 3
      %p74 = por %p72, %p73
      %p75 = scmp.ne.s32.totalorder %s66, %s67
      %p76 = scmp.eq.s32.totalorder %s14, 0
      %p77 = por %p75, %p76
      %p78 = scmp.ne.s32.totalorder %s66, %s67
      %p79 = scmp.eq.s32.totalorder %s15, 3
      %p80 = por %p78, %p79
      %p82 = scmp.ne.s32.totalorder %s67, %s81
      %p83 = scmp.eq.s32.totalorder %s15, 0
      %p84 = por %p82, %p83
      %s85 = ssub.s32 %s9, %s16
      %p86 = scmp.eq.s32.totalorder %s85, 0
      %s88 = sadd.s32 %s87, 1
      %s89 = scalar_select %p86, %s87, %s88
      %p92 = pneg %p86
      %p93 = scmp.eq.s32.totalorder %s9, 3
      %p94 = por %p92, %p93
      %p95 = scmp.ne.s32.totalorder %s87, %s90
      %p96 = scmp.eq.s32.totalorder %s9, 0
      %p97 = por %p95, %p96
      %p98 = scmp.ne.s32.totalorder %s87, %s90
      %p99 = scmp.eq.s32.totalorder %s14, 3
      %p100 = por %p98, %p99
      %p101 = scmp.ne.s32.totalorder %s90, %s91
      %p102 = scmp.eq.s32.totalorder %s14, 0
      %p103 = por %p101, %p102
      %p104 = scmp.ne.s32.totalorder %s90, %s91
      %p105 = scmp.eq.s32.totalorder %s15, 3
      %p106 = por %p104, %p105
      %p108 = scmp.ne.s32.totalorder %s91, %s107
      %p109 = scmp.eq.s32.totalorder %s15, 0
      %p110 = por %p108, %p109
      %p111 = scmp.le.s32.totalorder 1, %s9
      %p112 = scmp.lt.s32.totalorder %s9, 5
      %p113 = pnand %p111, %p112
      %p114 = pneg %p113
      // Predicated region
      $region9: #{net_head17_forward.17} parent=5 // pred_check
        _
      $region10: #{net_head17_forward.17} parent=5 // pred_check_branch
        %116 = sbr.rel (%p113) target = $region12
      $region11: #{net_head17_forward.17} parent=5 // pred_region
        %s117 = ssub.s32 %s9, 1
        // Predicated region
        $region13: #{net_head17_forward.17} parent=11 // pred_check
          %p118 = pneg %p30
        $region14: #{net_head17_forward.17} parent=11 // pred_check_branch
          %120 = sbr.rel (%p118) target = $region16
        $region15: #{net_head17_forward.17} parent=11 // pred_region
          _
        $region16: #{net_head17_forward.17} parent=11 // pred_fallthru
          _
        // Predicated region
        $region17: #{net_head17_forward.17} parent=11 // pred_check
          %p121 = pneg %p77
        $region18: #{net_head17_forward.17} parent=11 // pred_check_branch
          %123 = sbr.rel (%p121) target = $region20
        $region19: #{net_head17_forward.17} parent=11 // pred_region
          _
        $region20: #{net_head17_forward.17} parent=11 // pred_fallthru
          _
      $region12: #{net_head17_forward.17} parent=5 // pred_fallthru
        _
      %p124 = scmp.lt.s32.totalorder %s9, 4
      // Predicated region
      $region21: #{net_head17_forward.17} parent=5 // pred_check
        %p125 = pneg %p124
      $region22: #{net_head17_forward.17} parent=5 // pred_check_branch
        %127 = sbr.rel (%p125) target = $region24
      $region23: #{net_head17_forward.17} parent=5 // pred_region
        // Predicated region
        $region25: #{net_head17_forward.17} parent=23 // pred_check
          %p128 = pneg %p50
        $region26: #{net_head17_forward.17} parent=23 // pred_check_branch
          %130 = sbr.rel (%p128) target = $region28
        $region27: #{net_head17_forward.17} parent=23 // pred_region
          %s131 = sand.u32 %s40, 1
          %s132 = sand.u32 %s40, 1
          %s133 = smul.addr %s132, 144
          %s134 = scalar_lea.vmem [#allocation2], %s133
          %s135 = smul.u32 4, %s9
          %s136 = smul.addr %s135, 4
          %s137 = scalar_lea.vmem %s1, %s136
          // Predicated region
          $region29: #{net_head17_forward.17} parent=27 // pred_check
            _
          $region30: #{net_head17_forward.17} parent=27 // pred_check_branch
            %139 = sbr.rel (0) target = $region32
          $region31: #{net_head17_forward.17} parent=27 // pred_region
            // Predicated region
            $region33: #{net_head17_forward.17} parent=31 // pred_check
              _
            $region34: #{net_head17_forward.17} parent=31 // pred_check_branch
              %141 = sbr.rel (0) target = $region36
            $region35: #{net_head17_forward.17} parent=31 // pred_region
              loop: start=0, step=1, limit=1
              $region37: #{net_head17_forward.17} parent=35 // loop_pre_header
                _
              $region38: #{net_head17_forward.17} parent=35 // loop_header
                %s143 = sphi 0, %s147
                %p144 = scmp.ge.s32.totalorder %s143, 1
                %s148 = sphi %s137, %s137
                %s149 = sphi %s134, %s134
              $region39: #{net_head17_forward.17} parent=35 // loop_header_branch
                %146 = sbr.rel (%p144) target = $region43
              $region40: #{net_head17_forward.17} parent=35 // loop_body
                %v150 = vld [vmem:[%s148] sm:$0xff]
                %151 = vst [vmem:[%s149] sm:$0xff] %v150
                %v152 = vld [vmem:[%s148 + $0x8] sm:$0xff]
                %153 = vst [vmem:[%s149 + $0x8] sm:$0xff] %v152
                %v154 = vld [vmem:[%s148 + $0x40] sm:$0xff]
                %155 = vst [vmem:[%s149 + $0x10] sm:$0xff] %v154
                %v156 = vld [vmem:[%s148 + $0x48] sm:$0xff]
                %157 = vst [vmem:[%s149 + $0x18] sm:$0xff] %v156
                %v158 = vld [vmem:[%s148 + $0x80] sm:$0xff]
                %159 = vst [vmem:[%s149 + $0x20] sm:$0xff] %v158
                %v160 = vld [vmem:[%s148 + $0x88] sm:$0xff]
                %161 = vst [vmem:[%s149 + $0x28] sm:$0xff] %v160
                %v162 = vld [vmem:[%s148 + $0xc0] sm:$0xff]
                %163 = vst [vmem:[%s149 + $0x30] sm:$0xff] %v162
                %v164 = vld [vmem:[%s148 + $0xc8] sm:$0xff]
                %165 = vst [vmem:[%s149 + $0x38] sm:$0xff] %v164
                %v166 = vld [vmem:[%s148 + $0x100] sm:$0xff]
                %167 = vst [vmem:[%s149 + $0x40] sm:$0xff] %v166
                %v168 = vld [vmem:[%s148 + $0x108] sm:$0xff]
                %169 = vst [vmem:[%s149 + $0x48] sm:$0xff] %v168
                %v170 = vld [vmem:[%s148 + $0x140] sm:$0xff]
                %171 = vst [vmem:[%s149 + $0x50] sm:$0xff] %v170
                %v172 = vld [vmem:[%s148 + $0x148] sm:$0xff]
                %173 = vst [vmem:[%s149 + $0x58] sm:$0xff] %v172
                %v174 = vld [vmem:[%s148 + $0x180] sm:$0xff]
                %175 = vst [vmem:[%s149 + $0x60] sm:$0xff] %v174
                %v176 = vld [vmem:[%s148 + $0x188] sm:$0xff]
                %177 = vst [vmem:[%s149 + $0x68] sm:$0xff] %v176
                %v178 = vld [vmem:[%s148 + $0x1c0] sm:$0xff]
                %179 = vst [vmem:[%s149 + $0x70] sm:$0xff] %v178
                %v180 = vld [vmem:[%s148 + $0x1c8] sm:$0xff]
                %181 = vst [vmem:[%s149 + $0x78] sm:$0xff] %v180
                %v182 = vld [vmem:[%s148 + $0x200] sm:$0xff]
                %183 = vst [vmem:[%s149 + $0x80] sm:$0xff] %v182
                %v184 = vld [vmem:[%s148 + $0x208] sm:$0xff]
                %185 = vst [vmem:[%s149 + $0x88] sm:$0xff] %v184
              $region41: #{net_head17_forward.17} parent=35 // loop_footer
                %s147 = sadd.s32 1, %s143
              $region42: #{net_head17_forward.17} parent=35 // loop_footer_branch
                %142 = sbr.rel target = $region38
              $region43: #{net_head17_forward.17} parent=35 // loop_exit
                _
            $region36: #{net_head17_forward.17} parent=31 // pred_fallthru
              _
            // Predicated region
            $region44: #{net_head17_forward.17} parent=31 // pred_check
              _
            $region45: #{net_head17_forward.17} parent=31 // pred_check_branch
              %187 = sbr.rel target = $region47
            $region46: #{net_head17_forward.17} parent=31 // pred_region
              _
            $region47: #{net_head17_forward.17} parent=31 // pred_fallthru
              _
          $region32: #{net_head17_forward.17} parent=27 // pred_fallthru
            _
          %188 = vnop
        $region28: #{net_head17_forward.17} parent=23 // pred_fallthru
          _
      $region24: #{net_head17_forward.17} parent=5 // pred_fallthru
        _
      %p189 = scmp.le.s32.totalorder 1, %s9
      %p190 = scmp.lt.s32.totalorder %s9, 5
      %p191 = pnand %p189, %p190
      %p192 = pneg %p191
      // Predicated region
      $region48: #{net_head17_forward.17} parent=5 // pred_check
        _
      $region49: #{net_head17_forward.17} parent=5 // pred_check_branch
        %194 = sbr.rel (%p191) target = $region51
      $region50: #{net_head17_forward.17} parent=5 // pred_region
        %s195 = ssub.s32 %s9, 1
        %s196 = sand.u32 %s43, 1
        %s197 = sand.u32 %s43, 1
        %s198 = smul.addr %s197, 144
        %s199 = scalar_lea.vmem [#allocation2], %s198
        // Predicated region
        $region52: #{net_head17_forward.17} parent=50 // pred_check
          %p200 = pneg %p56
        $region53: #{net_head17_forward.17} parent=50 // pred_check_branch
          %202 = sbr.rel (%p200) target = $region55
        $region54: #{net_head17_forward.17} parent=50 // pred_region
          _
        $region55: #{net_head17_forward.17} parent=50 // pred_fallthru
          _
        %p203 = pneg %p30
        %p204 = pneg %p27
        %s205 = sand.u32 %s43, 1
        %s206 = sand.u32 %s43, 1
        %s207 = smul.addr %s206, 144
        %s208 = scalar_lea.vmem [#allocation2], %s207
        %p209 = pneg %p56
        %p210 = pneg %p53
        %p211 = pneg %p77
        %p212 = pneg %p74
        %p213 = pneg %p103
        %p214 = pneg %p100
        %s215 = smul.u32 4, %s14
        %p216 = scmp.lt.s32.totalorder %s215, 15
        %s217 = scalar_select %p216, %s215, 15
        %s218 = smul.addr %s217, 4
        %s219 = scalar_lea.vmem %s3, %s218
        %s220 = smul.u32 4, %s14
        %s221 = smul.u32 4, %s14
        %p222 = scmp.lt.s32.totalorder %s221, 15
        %s223 = scalar_select %p222, %s221, 15
        %s224 = smul.addr %s223, 4
        %s225 = scalar_lea.vmem %s3, %s224
        %s226 = smul.u32 4, %s14
        %v228 = vld [vmem:[%s0] sm:$0xf]
        %v229 = vld [vmem:[%s199] sm:$0xff]
        %v230 = vld [vmem:[%s199 + $0x8] sm:$0xff]
        %v231 = vld [vmem:[%s199 + $0x10] sm:$0xff]
        %v232 = vld [vmem:[%s199 + $0x18] sm:$0xff]
        %v233 = vld [vmem:[%s199 + $0x20] sm:$0xff]
        %v234 = vld [vmem:[%s199 + $0x28] sm:$0xff]
        %v235 = vld [vmem:[%s199 + $0x30] sm:$0xff]
        %v236 = vld [vmem:[%s199 + $0x38] sm:$0xff]
        %v237 = vld [vmem:[%s199 + $0x40] sm:$0xff]
        %v238 = vld [vmem:[%s199 + $0x48] sm:$0xff]
        %v239 = vld [vmem:[%s199 + $0x50] sm:$0xff]
        %v240 = vld [vmem:[%s199 + $0x58] sm:$0xff]
        %v241 = vld [vmem:[%s199 + $0x60] sm:$0xff]
        %v242 = vld [vmem:[%s199 + $0x68] sm:$0xff]
        %v243 = vld [vmem:[%s199 + $0x70] sm:$0xff]
        %v244 = vld [vmem:[%s199 + $0x78] sm:$0xff]
        %v245 = vld [vmem:[%s199 + $0x80] sm:$0xff]
        %v246 = vld [vmem:[%s199 + $0x88] sm:$0xff]
        %v247 = vld [vmem:[%s2] sm:$0xff]
        %249 = vset.pattern.permute.xlu0 0
        %250 = vperm.xlu0 %249, %v247
        %v251 = vpop.permute.xlu0 %250
        %v271 = vunpack.c.l.b16 %v229
        %v272 = vunpack.c.h.b16 %v229
        %v273 = vunpack.c.l.b16 %v230
        %v274 = vunpack.c.h.b16 %v230
        %v275 = vunpack.c.l.b16 %v231
        %v276 = vunpack.c.h.b16 %v231
        %v277 = vunpack.c.l.b16 %v232
        %v278 = vunpack.c.h.b16 %v232
        %v279 = vunpack.c.l.b16 %v233
        %v280 = vunpack.c.h.b16 %v233
        %v281 = vunpack.c.l.b16 %v234
        %v282 = vunpack.c.h.b16 %v234
        %v283 = vunpack.c.l.b16 %v235
        %v284 = vunpack.c.h.b16 %v235
        %v285 = vunpack.c.l.b16 %v236
        %v286 = vunpack.c.h.b16 %v236
        %v287 = vunpack.c.l.b16 %v237
        %v288 = vunpack.c.h.b16 %v237
        %v289 = vunpack.c.l.b16 %v238
        %v290 = vunpack.c.h.b16 %v238
        %v291 = vunpack.c.l.b16 %v239
        %v292 = vunpack.c.h.b16 %v239
        %v293 = vunpack.c.l.b16 %v240
        %v294 = vunpack.c.h.b16 %v240
        %v295 = vunpack.c.l.b16 %v241
        %v296 = vunpack.c.h.b16 %v241
        %v297 = vunpack.c.l.b16 %v242
        %v298 = vunpack.c.h.b16 %v242
        %v299 = vunpack.c.l.b16 %v243
        %v300 = vunpack.c.h.b16 %v243
        %v301 = vunpack.c.l.b16 %v244
        %v302 = vunpack.c.h.b16 %v244
        %v303 = vunpack.c.l.b16 %v245
        %v304 = vunpack.c.h.b16 %v245
        %v305 = vunpack.c.l.b16 %v246
        %v306 = vunpack.c.h.b16 %v246
        %v307 = vpack.c.b16 %v275, %v271
        %v308 = vpack.c.b16 %v276, %v272
        %v309 = vpack.c.b16 %v277, %v273
        %v310 = vpack.c.b16 %v278, %v274
        %v311 = vpack.c.b16 %v283, %v279
        %v312 = vpack.c.b16 %v284, %v280
        %v313 = vpack.c.b16 %v285, %v281
        %v314 = vpack.c.b16 %v286, %v282
        %v315 = vpack.c.b16 %v291, %v287
        %v316 = vpack.c.b16 %v292, %v288
        %v317 = vpack.c.b16 %v293, %v289
        %v318 = vpack.c.b16 %v294, %v290
        %v319 = vpack.c.b16 %v299, %v295
        %v320 = vpack.c.b16 %v300, %v296
        %v321 = vpack.c.b16 %v301, %v297
        %v322 = vpack.c.b16 %v302, %v298
        %v323 = vpack.c.b16 %v303, %v303
        %v324 = vpack.c.b16 %v304, %v304
        %v325 = vpack.c.b16 %v305, %v305
        %v326 = vpack.c.b16 %v306, %v306
        %vm343 = vcmask 588800
        %v345 = vsel %vm343, %v228, 0
        %vm347 = vcmask 1043456
        %v349 = vsel %vm347, %v323, 0
        %v352 = vsel %vm347, %v324, 0
        %v355 = vsel %vm347, %v325, 0
        %v358 = vsel %vm347, %v326, 0
        %360 = vmatprep.subr.bf16.mxu0 0
        %361 = vmatpush1.bf16.msra.mxu0 0
        %362 = vmatprep.subr.bf16.mxu0 0
        %363 = vmatpush1.bf16.msra.mxu0 0
        %364 = vmatprep.subr.bf16.mxu0 0
        %365 = vmatpush1.bf16.msra.mxu0 0
        %366 = vmatprep.subr.bf16.mxu0 %v352
        %367 = vmatpush1.bf16.msra.mxu0 %v349
        %368 = vmatprep.subr.bf16.mxu0 %v320
        %369 = vmatpush1.bf16.msra.mxu0 %v319
        %370 = vmatprep.subr.bf16.mxu0 %v316
        %371 = vmatpush1.bf16.msra.mxu0 %v315
        %372 = vmatprep.subr.bf16.mxu0 %v312
        %373 = vmatpush1.bf16.msra.mxu0 %v311
        %374 = vmatprep.subr.bf16.mxu0 %v308
        %375 = vmatpush1.bf16.msra.mxu0 %v307
        %376 = vmatprep.subr.bf16.mxu0 0
        %377 = vmatpush2.bf16.msra.mxu0 0
        %378 = vmatprep.subr.bf16.mxu0 0
        %379 = vmatpush2.bf16.msra.mxu0 0
        %380 = vmatprep.subr.bf16.mxu0 0
        %381 = vmatpush2.bf16.msra.mxu0 0
        %382 = vmatprep.subr.bf16.mxu0 0
        %383 = vmatpush2.bf16.msra.mxu0 0
        %384 = vmatprep.subr.bf16.mxu0 0
        %385 = vmatpush2.bf16.msra.mxu0 0
        %386 = vmatprep.subr.bf16.mxu0 0
        %387 = vmatpush2.bf16.msra.mxu0 0
        %388 = vmatprep.subr.bf16.mxu0 0
        %389 = vmatpush2.bf16.msra.mxu0 0
        %390 = vmatprep.subr.bf16.mxu0 0
        %391 = vmatpush2.bf16.msra.mxu0 0
        %392 = vmatprep.mubr.bf16.mxu0 0
        %393 = vmatmul.mubr.bf16.gmra.mxu0 %v345
        %v394 = vpop.f32.mrf.mxu0
        %v395 = vadd.f32 %v251, %v394
        %v396 = vpop.f32.mrf.mxu0
        %v397 = vadd.f32 %v251, %v396
        %v398 = vpop.f32.mrf.mxu0
        %v399 = vpop.f32.mrf.mxu0
        %400 = vdwg.mxu0
        %401 = vmatprep.subr.bf16.mxu0 0
        %402 = vmatpush1.bf16.msra.mxu0 0
        %403 = vmatprep.subr.bf16.mxu0 0
        %404 = vmatpush1.bf16.msra.mxu0 0
        %405 = vmatprep.subr.bf16.mxu0 0
        %406 = vmatpush1.bf16.msra.mxu0 0
        %407 = vmatprep.subr.bf16.mxu0 %v358
        %408 = vmatpush1.bf16.msra.mxu0 %v355
        %409 = vmatprep.subr.bf16.mxu0 %v322
        %410 = vmatpush1.bf16.msra.mxu0 %v321
        %411 = vmatprep.subr.bf16.mxu0 %v318
        %412 = vmatpush1.bf16.msra.mxu0 %v317
        %413 = vmatprep.subr.bf16.mxu0 %v314
        %414 = vmatpush1.bf16.msra.mxu0 %v313
        %415 = vmatprep.subr.bf16.mxu0 %v310
        %416 = vmatpush1.bf16.msra.mxu0 %v309
        %417 = vmatprep.subr.bf16.mxu0 0
        %418 = vmatpush2.bf16.msra.mxu0 0
        %419 = vmatprep.subr.bf16.mxu0 0
        %420 = vmatpush2.bf16.msra.mxu0 0
        %421 = vmatprep.subr.bf16.mxu0 0
        %422 = vmatpush2.bf16.msra.mxu0 0
        %423 = vmatprep.subr.bf16.mxu0 0
        %424 = vmatpush2.bf16.msra.mxu0 0
        %425 = vmatprep.subr.bf16.mxu0 0
        %426 = vmatpush2.bf16.msra.mxu0 0
        %427 = vmatprep.subr.bf16.mxu0 0
        %428 = vmatpush2.bf16.msra.mxu0 0
        %429 = vmatprep.subr.bf16.mxu0 0
        %430 = vmatpush2.bf16.msra.mxu0 0
        %431 = vmatprep.subr.bf16.mxu0 0
        %432 = vmatpush2.bf16.msra.mxu0 0
        %433 = vmatprep.mubr.bf16.mxu0 0
        %434 = vmatmul.mubr.bf16.gmra.mxu0 %v345
        %v435 = vpop.f32.mrf.mxu0
        %v436 = vadd.f32 %v251, %v435
        %v437 = vpop.f32.mrf.mxu0
        %v438 = vadd.f32 %v251, %v437
        %v439 = vpop.f32.mrf.mxu0
        %v440 = vpop.f32.mrf.mxu0
        %441 = vdwg.mxu0
        %v442 = vmax.f32 %v395, 0.0
        %v443 = vmax.f32 %v397, 0.0
        %v444 = vmax.f32 %v436, 0.0
        %v445 = vmax.f32 %v438, 0.0
        %v446 = vpack.c.bf16 %v442, %v442
        %v447 = vpack.c.bf16 %v443, %v443
        %v448 = vpack.c.bf16 %v444, %v444
        %v449 = vpack.c.bf16 %v445, %v445
        %v454 = vunpack.c.l.b16 %v446
        %v455 = vunpack.c.l.b16 %v447
        %v456 = vunpack.c.l.b16 %v448
        %v457 = vunpack.c.l.b16 %v449
        %v458 = vpack.c.b16 %v455, %v454
        %v459 = vpack.c.b16 %v457, %v456
        %462 = vst [vmem:[%s225] sm:$0xff] %v458
        %463 = vst [vmem:[%s225 + $0x8] sm:$0xff] %v459
        %s464 = smul.u32 4, %s14
        %p465 = scmp.lt.s32.totalorder %s464, 15
        %s466 = scalar_select %p465, %s464, 15
        %s467 = smul.addr %s466, 4
        %s468 = scalar_lea.vmem %s3, %s467
        // Predicated region
        $region56: #{net_head17_forward.17} parent=50 // pred_check
          %p469 = pneg %p100
        $region57: #{net_head17_forward.17} parent=50 // pred_check_branch
          %471 = sbr.rel (%p469) target = $region59
        $region58: #{net_head17_forward.17} parent=50 // pred_region
          %s472 = smul.u32 4, %s14
        $region59: #{net_head17_forward.17} parent=50 // pred_fallthru
          _
      $region51: #{net_head17_forward.17} parent=5 // pred_fallthru
        _
      %p473 = scmp.le.s32.totalorder 2, %s9
      // Predicated region
      $region60: #{net_head17_forward.17} parent=5 // pred_check
        %p474 = pneg %p473
      $region61: #{net_head17_forward.17} parent=5 // pred_check_branch
        %476 = sbr.rel (%p474) target = $region63
      $region62: #{net_head17_forward.17} parent=5 // pred_region
        %s477 = ssub.s32 %s9, 2
        // Predicated region
        $region64: #{net_head17_forward.17} parent=62 // pred_check
          %p478 = pneg %p106
        $region65: #{net_head17_forward.17} parent=62 // pred_check_branch
          %480 = sbr.rel (%p478) target = $region67
        $region66: #{net_head17_forward.17} parent=62 // pred_region
          %s481 = smul.u32 4, %s15
          %p482 = scmp.lt.s32.totalorder %s481, 15
          %s483 = scalar_select %p482, %s481, 15
          %s484 = smul.addr %s483, 4
          %s485 = scalar_lea.vmem %s3, %s484
        $region67: #{net_head17_forward.17} parent=62 // pred_fallthru
          _
      $region63: #{net_head17_forward.17} parent=5 // pred_fallthru
        _
    $region6: #{net_head17_forward.17} parent=1 // loop_footer
      %s13 = sadd.s32 1, %s9
    $region7: #{net_head17_forward.17} parent=1 // loop_footer_branch
      %8 = sbr.rel target = $region3
    $region8: #{net_head17_forward.17} parent=1 // loop_exit
      _

// kernel: net_head17_forward.19
$region0: #{net_head17_forward.19}
  #allocation0 [shape = 'u32[]', space=smem, size = 0x4, offset = 0x4, fixed_abs, tag = 'smem constant byte address 0x4 - core index']
  #allocation1 [shape = 'u32[144,128]{1,0:T(1,128)}', space=vmem, size = 0x12000, scoped, tag = 'internal scratch']
  %s0 = inlined_call_operand.vmem [shape: bf16[8,72], index: 0, kind: input, shape index: {}]
  %s1 = inlined_call_operand.vmem [shape: bf16[72,2048], index: 1, kind: input, shape index: {}]
  %s2 = inlined_call_operand.vmem [shape: f32[8,1], index: 2, kind: input, shape index: {}]
  %s3 = inlined_call_operand.vmem [shape: bf16[8,2048], index: 3, kind: input, shape index: {}]
  %s4 = inlined_call_operand.vmem [shape: bf16[8,2048], index: 4, kind: output, shape index: {}]
  %s5 = sld [smem:[#allocation0]]
  $region72: #{net_head17_forward.19} parent=0
    _
  %s7 = ssub.s32 1, %s5
  %s8 = scalar_select 0, %s7, %s5
  $region1: #{net_head17_forward.19} parent=0
    #allocation2 [shape = 'u8[147456]{0}', space=vmem, size = 0x24000, scoped, tag = 'input window, operand 1']
    loop: start=0, step=1, limit=6
    $region2: #{net_head17_forward.19} parent=1 // loop_pre_header
      _
    $region3: #{net_head17_forward.19} parent=1 // loop_header
      %s10 = sphi 0, %s14
      %p11 = scmp.ge.s32.totalorder %s10, 6
      %s18 = sphi 0, %s18
      %s20 = sphi 0, %s18
      %s21 = sphi 0, %s20
      %s35 = sphi 0, %s21
      %s41 = sphi 0, %s43
      %s44 = sphi 0, %s41
      %s45 = sphi 0, %s44
      %s61 = sphi 0, %s45
      %s65 = sphi 0, %s65
      %s67 = sphi 0, %s65
      %s68 = sphi 0, %s67
      %s82 = sphi 0, %s68
      %s88 = sphi 0, %s90
      %s91 = sphi 0, %s88
      %s92 = sphi 0, %s91
      %s108 = sphi 0, %s92
      %s114 = sphi 0, %s116
      %s117 = sphi 0, %s114
      %s118 = sphi 0, %s117
      %s134 = sphi 0, %s118
    $region4: #{net_head17_forward.19} parent=1 // loop_header_branch
      %13 = sbr.rel (%p11) target = $region8
    $region5: #{net_head17_forward.19} parent=1 // loop_body
      %s15 = ssub.s32 %s10, 1
      %s16 = ssub.s32 %s10, 2
      %s17 = sadd.s32 %s10, 1
      %s19 = sadd.s32 %s18, 1
      %p22 = scmp.eq.s32.totalorder %s10, 3
      %p23 = scmp.ne.s32.totalorder %s18, %s20
      %p24 = scmp.eq.s32.totalorder %s10, 0
      %p25 = por %p23, %p24
      %p26 = scmp.ne.s32.totalorder %s18, %s20
      %p27 = scmp.eq.s32.totalorder %s15, 3
      %p28 = por %p26, %p27
      %p29 = scmp.ne.s32.totalorder %s20, %s21
      %p30 = scmp.eq.s32.totalorder %s15, 0
      %p31 = por %p29, %p30
      %p32 = scmp.ne.s32.totalorder %s20, %s21
      %p33 = scmp.eq.s32.totalorder %s16, 3
      %p34 = por %p32, %p33
      %p36 = scmp.ne.s32.totalorder %s21, %s35
      %p37 = scmp.eq.s32.totalorder %s16, 0
      %p38 = por %p36, %p37
      %s39 = ssub.s32 %s10, %s17
      %p40 = scmp.eq.s32.totalorder %s39, 0
      %s42 = sadd.s32 %s41, 1
      %s43 = scalar_select %p40, %s41, %s42
      %p46 = pneg %p40
      %p47 = scmp.eq.s32.totalorder %s10, 3
      %p48 = por %p46, %p47
      %p49 = scmp.ne.s32.totalorder %s41, %s44
      %p50 = scmp.eq.s32.totalorder %s10, 0
      %p51 = por %p49, %p50
      %p52 = scmp.ne.s32.totalorder %s41, %s44
      %p53 = scmp.eq.s32.totalorder %s15, 3
      %p54 = por %p52, %p53
      %p55 = scmp.ne.s32.totalorder %s44, %s45
      %p56 = scmp.eq.s32.totalorder %s15, 0
      %p57 = por %p55, %p56
      %p58 = scmp.ne.s32.totalorder %s44, %s45
      %p59 = scmp.eq.s32.totalorder %s16, 3
      %p60 = por %p58, %p59
      %p62 = scmp.ne.s32.totalorder %s45, %s61
      %p63 = scmp.eq.s32.totalorder %s16, 0
      %p64 = por %p62, %p63
      %s66 = sadd.s32 %s65, 1
      %p69 = scmp.eq.s32.totalorder %s10, 3
      %p70 = scmp.ne.s32.totalorder %s65, %s67
      %p71 = scmp.eq.s32.totalorder %s10, 0
      %p72 = por %p70, %p71
      %p73 = scmp.ne.s32.totalorder %s65, %s67
      %p74 = scmp.eq.s32.totalorder %s15, 3
      %p75 = por %p73, %p74
      %p76 = scmp.ne.s32.totalorder %s67, %s68
      %p77 = scmp.eq.s32.totalorder %s15, 0
      %p78 = por %p76, %p77
      %p79 = scmp.ne.s32.totalorder %s67, %s68
      %p80 = scmp.eq.s32.totalorder %s16, 3
      %p81 = por %p79, %p80
      %p83 = scmp.ne.s32.totalorder %s68, %s82
      %p84 = scmp.eq.s32.totalorder %s16, 0
      %p85 = por %p83, %p84
      %s86 = ssub.s32 %s10, %s17
      %p87 = scmp.eq.s32.totalorder %s86, 0
      %s89 = sadd.s32 %s88, 1
      %s90 = scalar_select %p87, %s88, %s89
      %p93 = pneg %p87
      %p94 = scmp.eq.s32.totalorder %s10, 3
      %p95 = por %p93, %p94
      %p96 = scmp.ne.s32.totalorder %s88, %s91
      %p97 = scmp.eq.s32.totalorder %s10, 0
      %p98 = por %p96, %p97
      %p99 = scmp.ne.s32.totalorder %s88, %s91
      %p100 = scmp.eq.s32.totalorder %s15, 3
      %p101 = por %p99, %p100
      %p102 = scmp.ne.s32.totalorder %s91, %s92
      %p103 = scmp.eq.s32.totalorder %s15, 0
      %p104 = por %p102, %p103
      %p105 = scmp.ne.s32.totalorder %s91, %s92
      %p106 = scmp.eq.s32.totalorder %s16, 3
      %p107 = por %p105, %p106
      %p109 = scmp.ne.s32.totalorder %s92, %s108
      %p110 = scmp.eq.s32.totalorder %s16, 0
      %p111 = por %p109, %p110
      %s112 = ssub.s32 %s10, %s17
      %p113 = scmp.eq.s32.totalorder %s112, 0
      %s115 = sadd.s32 %s114, 1
      %s116 = scalar_select %p113, %s114, %s115
      %p119 = pneg %p113
      %p120 = scmp.eq.s32.totalorder %s10, 3
      %p121 = por %p119, %p120
      %p122 = scmp.ne.s32.totalorder %s114, %s117
      %p123 = scmp.eq.s32.totalorder %s10, 0
      %p124 = por %p122, %p123
      %p125 = scmp.ne.s32.totalorder %s114, %s117
      %p126 = scmp.eq.s32.totalorder %s15, 3
      %p127 = por %p125, %p126
      %p128 = scmp.ne.s32.totalorder %s117, %s118
      %p129 = scmp.eq.s32.totalorder %s15, 0
      %p130 = por %p128, %p129
      %p131 = scmp.ne.s32.totalorder %s117, %s118
      %p132 = scmp.eq.s32.totalorder %s16, 3
      %p133 = por %p131, %p132
      %p135 = scmp.ne.s32.totalorder %s118, %s134
      %p136 = scmp.eq.s32.totalorder %s16, 0
      %p137 = por %p135, %p136
      %p138 = scmp.le.s32.totalorder 1, %s10
      %p139 = scmp.lt.s32.totalorder %s10, 5
      %p140 = pnand %p138, %p139
      %p141 = pneg %p140
      // Predicated region
      $region9: #{net_head17_forward.19} parent=5 // pred_check
        _
      $region10: #{net_head17_forward.19} parent=5 // pred_check_branch
        %143 = sbr.rel (%p140) target = $region12
      $region11: #{net_head17_forward.19} parent=5 // pred_region
        %s144 = ssub.s32 %s10, 1
        // Predicated region
        $region13: #{net_head17_forward.19} parent=11 // pred_check
          %p145 = pneg %p31
        $region14: #{net_head17_forward.19} parent=11 // pred_check_branch
          %147 = sbr.rel (%p145) target = $region16
        $region15: #{net_head17_forward.19} parent=11 // pred_region
          _
        $region16: #{net_head17_forward.19} parent=11 // pred_fallthru
          _
        // Predicated region
        $region17: #{net_head17_forward.19} parent=11 // pred_check
          %p148 = pneg %p78
        $region18: #{net_head17_forward.19} parent=11 // pred_check_branch
          %150 = sbr.rel (%p148) target = $region20
        $region19: #{net_head17_forward.19} parent=11 // pred_region
          _
        $region20: #{net_head17_forward.19} parent=11 // pred_fallthru
          _
      $region12: #{net_head17_forward.19} parent=5 // pred_fallthru
        _
      %p151 = scmp.lt.s32.totalorder %s10, 4
      // Predicated region
      $region21: #{net_head17_forward.19} parent=5 // pred_check
        %p152 = pneg %p151
      $region22: #{net_head17_forward.19} parent=5 // pred_check_branch
        %154 = sbr.rel (%p152) target = $region24
      $region23: #{net_head17_forward.19} parent=5 // pred_region
        // Predicated region
        $region25: #{net_head17_forward.19} parent=23 // pred_check
          %p155 = pneg %p51
        $region26: #{net_head17_forward.19} parent=23 // pred_check_branch
          %157 = sbr.rel (%p155) target = $region28
        $region27: #{net_head17_forward.19} parent=23 // pred_region
          %s158 = sand.u32 %s41, 1
          %s159 = sand.u32 %s41, 1
          %s160 = smul.addr %s159, 144
          %s161 = scalar_lea.vmem [#allocation2], %s160
          %s162 = smul.u32 4, %s10
          %s163 = smul.addr %s162, 4
          %s164 = scalar_lea.vmem %s1, %s163
          // Predicated region
          $region29: #{net_head17_forward.19} parent=27 // pred_check
            _
          $region30: #{net_head17_forward.19} parent=27 // pred_check_branch
            %166 = sbr.rel (0) target = $region32
          $region31: #{net_head17_forward.19} parent=27 // pred_region
            // Predicated region
            $region33: #{net_head17_forward.19} parent=31 // pred_check
              _
            $region34: #{net_head17_forward.19} parent=31 // pred_check_branch
              %168 = sbr.rel (0) target = $region36
            $region35: #{net_head17_forward.19} parent=31 // pred_region
              loop: start=0, step=1, limit=1
              $region37: #{net_head17_forward.19} parent=35 // loop_pre_header
                _
              $region38: #{net_head17_forward.19} parent=35 // loop_header
                %s170 = sphi 0, %s174
                %p171 = scmp.ge.s32.totalorder %s170, 1
                %s175 = sphi %s164, %s164
                %s176 = sphi %s161, %s161
              $region39: #{net_head17_forward.19} parent=35 // loop_header_branch
                %173 = sbr.rel (%p171) target = $region43
              $region40: #{net_head17_forward.19} parent=35 // loop_body
                %v177 = vld [vmem:[%s175] sm:$0xff]
                %178 = vst [vmem:[%s176] sm:$0xff] %v177
                %v179 = vld [vmem:[%s175 + $0x8] sm:$0xff]
                %180 = vst [vmem:[%s176 + $0x8] sm:$0xff] %v179
                %v181 = vld [vmem:[%s175 + $0x40] sm:$0xff]
                %182 = vst [vmem:[%s176 + $0x10] sm:$0xff] %v181
                %v183 = vld [vmem:[%s175 + $0x48] sm:$0xff]
                %184 = vst [vmem:[%s176 + $0x18] sm:$0xff] %v183
                %v185 = vld [vmem:[%s175 + $0x80] sm:$0xff]
                %186 = vst [vmem:[%s176 + $0x20] sm:$0xff] %v185
                %v187 = vld [vmem:[%s175 + $0x88] sm:$0xff]
                %188 = vst [vmem:[%s176 + $0x28] sm:$0xff] %v187
                %v189 = vld [vmem:[%s175 + $0xc0] sm:$0xff]
                %190 = vst [vmem:[%s176 + $0x30] sm:$0xff] %v189
                %v191 = vld [vmem:[%s175 + $0xc8] sm:$0xff]
                %192 = vst [vmem:[%s176 + $0x38] sm:$0xff] %v191
                %v193 = vld [vmem:[%s175 + $0x100] sm:$0xff]
                %194 = vst [vmem:[%s176 + $0x40] sm:$0xff] %v193
                %v195 = vld [vmem:[%s175 + $0x108] sm:$0xff]
                %196 = vst [vmem:[%s176 + $0x48] sm:$0xff] %v195
                %v197 = vld [vmem:[%s175 + $0x140] sm:$0xff]
                %198 = vst [vmem:[%s176 + $0x50] sm:$0xff] %v197
                %v199 = vld [vmem:[%s175 + $0x148] sm:$0xff]
                %200 = vst [vmem:[%s176 + $0x58] sm:$0xff] %v199
                %v201 = vld [vmem:[%s175 + $0x180] sm:$0xff]
                %202 = vst [vmem:[%s176 + $0x60] sm:$0xff] %v201
                %v203 = vld [vmem:[%s175 + $0x188] sm:$0xff]
                %204 = vst [vmem:[%s176 + $0x68] sm:$0xff] %v203
                %v205 = vld [vmem:[%s175 + $0x1c0] sm:$0xff]
                %206 = vst [vmem:[%s176 + $0x70] sm:$0xff] %v205
                %v207 = vld [vmem:[%s175 + $0x1c8] sm:$0xff]
                %208 = vst [vmem:[%s176 + $0x78] sm:$0xff] %v207
                %v209 = vld [vmem:[%s175 + $0x200] sm:$0xff]
                %210 = vst [vmem:[%s176 + $0x80] sm:$0xff] %v209
                %v211 = vld [vmem:[%s175 + $0x208] sm:$0xff]
                %212 = vst [vmem:[%s176 + $0x88] sm:$0xff] %v211
              $region41: #{net_head17_forward.19} parent=35 // loop_footer
                %s174 = sadd.s32 1, %s170
              $region42: #{net_head17_forward.19} parent=35 // loop_footer_branch
                %169 = sbr.rel target = $region38
              $region43: #{net_head17_forward.19} parent=35 // loop_exit
                _
            $region36: #{net_head17_forward.19} parent=31 // pred_fallthru
              _
            // Predicated region
            $region44: #{net_head17_forward.19} parent=31 // pred_check
              _
            $region45: #{net_head17_forward.19} parent=31 // pred_check_branch
              %214 = sbr.rel target = $region47
            $region46: #{net_head17_forward.19} parent=31 // pred_region
              _
            $region47: #{net_head17_forward.19} parent=31 // pred_fallthru
              _
          $region32: #{net_head17_forward.19} parent=27 // pred_fallthru
            _
          %215 = vnop
        $region28: #{net_head17_forward.19} parent=23 // pred_fallthru
          _
        // Predicated region
        $region48: #{net_head17_forward.19} parent=23 // pred_check
          %p216 = pneg %p98
        $region49: #{net_head17_forward.19} parent=23 // pred_check_branch
          %218 = sbr.rel (%p216) target = $region51
        $region50: #{net_head17_forward.19} parent=23 // pred_region
          %s219 = smul.u32 4, %s10
          %p220 = scmp.lt.s32.totalorder %s219, 15
          %s221 = scalar_select %p220, %s219, 15
          %s222 = smul.addr %s221, 4
          %s223 = scalar_lea.vmem %s3, %s222
          %s224 = smul.u32 4, %s10
        $region51: #{net_head17_forward.19} parent=23 // pred_fallthru
          _
      $region24: #{net_head17_forward.19} parent=5 // pred_fallthru
        _
      %p225 = scmp.le.s32.totalorder 1, %s10
      %p226 = scmp.lt.s32.totalorder %s10, 5
      %p227 = pnand %p225, %p226
      %p228 = pneg %p227
      // Predicated region
      $region52: #{net_head17_forward.19} parent=5 // pred_check
        _
      $region53: #{net_head17_forward.19} parent=5 // pred_check_branch
        %230 = sbr.rel (%p227) target = $region55
      $region54: #{net_head17_forward.19} parent=5 // pred_region
        %s231 = ssub.s32 %s10, 1
        %s232 = sand.u32 %s44, 1
        %s233 = sand.u32 %s44, 1
        %s234 = smul.addr %s233, 144
        %s235 = scalar_lea.vmem [#allocation2], %s234
        // Predicated region
        $region56: #{net_head17_forward.19} parent=54 // pred_check
          %p236 = pneg %p57
        $region57: #{net_head17_forward.19} parent=54 // pred_check_branch
          %238 = sbr.rel (%p236) target = $region59
        $region58: #{net_head17_forward.19} parent=54 // pred_region
          _
        $region59: #{net_head17_forward.19} parent=54 // pred_fallthru
          _
        %p239 = pneg %p31
        %p240 = pneg %p28
        %s241 = sand.u32 %s44, 1
        %s242 = sand.u32 %s44, 1
        %s243 = smul.addr %s242, 144
        %s244 = scalar_lea.vmem [#allocation2], %s243
        %p245 = pneg %p57
        %p246 = pneg %p54
        %p247 = pneg %p78
        %p248 = pneg %p75
        %s249 = smul.u32 4, %s15
        %p250 = scmp.lt.s32.totalorder %s249, 15
        %s251 = scalar_select %p250, %s249, 15
        %s252 = smul.addr %s251, 4
        %s253 = scalar_lea.vmem %s3, %s252
        %p254 = pneg %p104
        %p255 = pneg %p101
        %p256 = pneg %p130
        %p257 = pneg %p127
        %s258 = smul.u32 4, %s15
        %p259 = scmp.lt.s32.totalorder %s258, 15
        %s260 = scalar_select %p259, %s258, 15
        %s261 = smul.addr %s260, 4
        %s262 = scalar_lea.vmem %s4, %s261
        %s263 = smul.u32 4, %s15
        %s264 = smul.u32 4, %s15
        %p265 = scmp.lt.s32.totalorder %s264, 15
        %s266 = scalar_select %p265, %s264, 15
        %s267 = smul.addr %s266, 4
        %s268 = scalar_lea.vmem %s3, %s267
        %s269 = smul.u32 4, %s15
        %s270 = smul.u32 4, %s15
        %p271 = scmp.lt.s32.totalorder %s270, 15
        %s272 = scalar_select %p271, %s270, 15
        %s273 = smul.addr %s272, 4
        %s274 = scalar_lea.vmem %s4, %s273
        %s275 = smul.u32 4, %s15
        %v277 = vld [vmem:[%s0] sm:$0xf]
        %v278 = vld [vmem:[%s235] sm:$0xff]
        %v279 = vld [vmem:[%s235 + $0x8] sm:$0xff]
        %v280 = vld [vmem:[%s235 + $0x10] sm:$0xff]
        %v281 = vld [vmem:[%s235 + $0x18] sm:$0xff]
        %v282 = vld [vmem:[%s235 + $0x20] sm:$0xff]
        %v283 = vld [vmem:[%s235 + $0x28] sm:$0xff]
        %v284 = vld [vmem:[%s235 + $0x30] sm:$0xff]
        %v285 = vld [vmem:[%s235 + $0x38] sm:$0xff]
        %v286 = vld [vmem:[%s235 + $0x40] sm:$0xff]
        %v287 = vld [vmem:[%s235 + $0x48] sm:$0xff]
        %v288 = vld [vmem:[%s235 + $0x50] sm:$0xff]
        %v289 = vld [vmem:[%s235 + $0x58] sm:$0xff]
        %v290 = vld [vmem:[%s235 + $0x60] sm:$0xff]
        %v291 = vld [vmem:[%s235 + $0x68] sm:$0xff]
        %v292 = vld [vmem:[%s235 + $0x70] sm:$0xff]
        %v293 = vld [vmem:[%s235 + $0x78] sm:$0xff]
        %v294 = vld [vmem:[%s235 + $0x80] sm:$0xff]
        %v295 = vld [vmem:[%s235 + $0x88] sm:$0xff]
        %v296 = vld [vmem:[%s2] sm:$0xff]
        %298 = vset.pattern.permute.xlu0 0
        %299 = vperm.xlu0 %298, %v296
        %v300 = vpop.permute.xlu0 %299
        %v320 = vunpack.c.l.b16 %v278
        %v321 = vunpack.c.h.b16 %v278
        %v322 = vunpack.c.l.b16 %v279
        %v323 = vunpack.c.h.b16 %v279
        %v324 = vunpack.c.l.b16 %v280
        %v325 = vunpack.c.h.b16 %v280
        %v326 = vunpack.c.l.b16 %v281
        %v327 = vunpack.c.h.b16 %v281
        %v328 = vunpack.c.l.b16 %v282
        %v329 = vunpack.c.h.b16 %v282
        %v330 = vunpack.c.l.b16 %v283
        %v331 = vunpack.c.h.b16 %v283
        %v332 = vunpack.c.l.b16 %v284
        %v333 = vunpack.c.h.b16 %v284
        %v334 = vunpack.c.l.b16 %v285
        %v335 = vunpack.c.h.b16 %v285
        %v336 = vunpack.c.l.b16 %v286
        %v337 = vunpack.c.h.b16 %v286
        %v338 = vunpack.c.l.b16 %v287
        %v339 = vunpack.c.h.b16 %v287
        %v340 = vunpack.c.l.b16 %v288
        %v341 = vunpack.c.h.b16 %v288
        %v342 = vunpack.c.l.b16 %v289
        %v343 = vunpack.c.h.b16 %v289
        %v344 = vunpack.c.l.b16 %v290
        %v345 = vunpack.c.h.b16 %v290
        %v346 = vunpack.c.l.b16 %v291
        %v347 = vunpack.c.h.b16 %v291
        %v348 = vunpack.c.l.b16 %v292
        %v349 = vunpack.c.h.b16 %v292
        %v350 = vunpack.c.l.b16 %v293
        %v351 = vunpack.c.h.b16 %v293
        %v352 = vunpack.c.l.b16 %v294
        %v353 = vunpack.c.h.b16 %v294
        %v354 = vunpack.c.l.b16 %v295
        %v355 = vunpack.c.h.b16 %v295
        %v356 = vpack.c.b16 %v324, %v320
        %v357 = vpack.c.b16 %v325, %v321
        %v358 = vpack.c.b16 %v326, %v322
        %v359 = vpack.c.b16 %v327, %v323
        %v360 = vpack.c.b16 %v332, %v328
        %v361 = vpack.c.b16 %v333, %v329
        %v362 = vpack.c.b16 %v334, %v330
        %v363 = vpack.c.b16 %v335, %v331
        %v364 = vpack.c.b16 %v340, %v336
        %v365 = vpack.c.b16 %v341, %v337
        %v366 = vpack.c.b16 %v342, %v338
        %v367 = vpack.c.b16 %v343, %v339
        %v368 = vpack.c.b16 %v348, %v344
        %v369 = vpack.c.b16 %v349, %v345
        %v370 = vpack.c.b16 %v350, %v346
        %v371 = vpack.c.b16 %v351, %v347
        %v372 = vpack.c.b16 %v352, %v352
        %v373 = vpack.c.b16 %v353, %v353
        %v374 = vpack.c.b16 %v354, %v354
        %v375 = vpack.c.b16 %v355, %v355
        %vm392 = vcmask 588800
        %v394 = vsel %vm392, %v277, 0
        %vm396 = vcmask 1043456
        %v398 = vsel %vm396, %v372, 0
        %v401 = vsel %vm396, %v373, 0
        %v404 = vsel %vm396, %v374, 0
        %v407 = vsel %vm396, %v375, 0
        %409 = vmatprep.subr.bf16.mxu0 0
        %410 = vmatpush1.bf16.msra.mxu0 0
        %411 = vmatprep.subr.bf16.mxu0 0
        %412 = vmatpush1.bf16.msra.mxu0 0
        %413 = vmatprep.subr.bf16.mxu0 0
        %414 = vmatpush1.bf16.msra.mxu0 0
        %415 = vmatprep.subr.bf16.mxu0 %v401
        %416 = vmatpush1.bf16.msra.mxu0 %v398
        %417 = vmatprep.subr.bf16.mxu0 %v369
        %418 = vmatpush1.bf16.msra.mxu0 %v368
        %419 = vmatprep.subr.bf16.mxu0 %v365
        %420 = vmatpush1.bf16.msra.mxu0 %v364
        %421 = vmatprep.subr.bf16.mxu0 %v361
        %422 = vmatpush1.bf16.msra.mxu0 %v360
        %423 = vmatprep.subr.bf16.mxu0 %v357
        %424 = vmatpush1.bf16.msra.mxu0 %v356
        %425 = vmatprep.subr.bf16.mxu0 0
        %426 = vmatpush2.bf16.msra.mxu0 0
        %427 = vmatprep.subr.bf16.mxu0 0
        %428 = vmatpush2.bf16.msra.mxu0 0
        %429 = vmatprep.subr.bf16.mxu0 0
        %430 = vmatpush2.bf16.msra.mxu0 0
        %431 = vmatprep.subr.bf16.mxu0 0
        %432 = vmatpush2.bf16.msra.mxu0 0
        %433 = vmatprep.subr.bf16.mxu0 0
        %434 = vmatpush2.bf16.msra.mxu0 0
        %435 = vmatprep.subr.bf16.mxu0 0
        %436 = vmatpush2.bf16.msra.mxu0 0
        %437 = vmatprep.subr.bf16.mxu0 0
        %438 = vmatpush2.bf16.msra.mxu0 0
        %439 = vmatprep.subr.bf16.mxu0 0
        %440 = vmatpush2.bf16.msra.mxu0 0
        %441 = vmatprep.mubr.bf16.mxu0 0
        %442 = vmatmul.mubr.bf16.gmra.mxu0 %v394
        %v443 = vpop.f32.mrf.mxu0
        %v444 = vadd.f32 %v300, %v443
        %v445 = vpop.f32.mrf.mxu0
        %v446 = vadd.f32 %v300, %v445
        %v447 = vpop.f32.mrf.mxu0
        %v448 = vpop.f32.mrf.mxu0
        %449 = vdwg.mxu0
        %450 = vmatprep.subr.bf16.mxu0 0
        %451 = vmatpush1.bf16.msra.mxu0 0
        %452 = vmatprep.subr.bf16.mxu0 0
        %453 = vmatpush1.bf16.msra.mxu0 0
        %454 = vmatprep.subr.bf16.mxu0 0
        %455 = vmatpush1.bf16.msra.mxu0 0
        %456 = vmatprep.subr.bf16.mxu0 %v407
        %457 = vmatpush1.bf16.msra.mxu0 %v404
        %458 = vmatprep.subr.bf16.mxu0 %v371
        %459 = vmatpush1.bf16.msra.mxu0 %v370
        %460 = vmatprep.subr.bf16.mxu0 %v367
        %461 = vmatpush1.bf16.msra.mxu0 %v366
        %462 = vmatprep.subr.bf16.mxu0 %v363
        %463 = vmatpush1.bf16.msra.mxu0 %v362
        %464 = vmatprep.subr.bf16.mxu0 %v359
        %465 = vmatpush1.bf16.msra.mxu0 %v358
        %466 = vmatprep.subr.bf16.mxu0 0
        %467 = vmatpush2.bf16.msra.mxu0 0
        %468 = vmatprep.subr.bf16.mxu0 0
        %469 = vmatpush2.bf16.msra.mxu0 0
        %470 = vmatprep.subr.bf16.mxu0 0
        %471 = vmatpush2.bf16.msra.mxu0 0
        %472 = vmatprep.subr.bf16.mxu0 0
        %473 = vmatpush2.bf16.msra.mxu0 0
        %474 = vmatprep.subr.bf16.mxu0 0
        %475 = vmatpush2.bf16.msra.mxu0 0
        %476 = vmatprep.subr.bf16.mxu0 0
        %477 = vmatpush2.bf16.msra.mxu0 0
        %478 = vmatprep.subr.bf16.mxu0 0
        %479 = vmatpush2.bf16.msra.mxu0 0
        %480 = vmatprep.subr.bf16.mxu0 0
        %481 = vmatpush2.bf16.msra.mxu0 0
        %482 = vmatprep.mubr.bf16.mxu0 0
        %483 = vmatmul.mubr.bf16.gmra.mxu0 %v394
        %v484 = vpop.f32.mrf.mxu0
        %v485 = vadd.f32 %v300, %v484
        %v486 = vpop.f32.mrf.mxu0
        %v487 = vadd.f32 %v300, %v486
        %v488 = vpop.f32.mrf.mxu0
        %v489 = vpop.f32.mrf.mxu0
        %490 = vdwg.mxu0
        %v491 = vld [vmem:[%s268] sm:$0xff]
        %v492 = vld [vmem:[%s268 + $0x8] sm:$0xff]
        %v493 = vunpack.c.l.bf16 %v491
        %v494 = vunpack.c.h.bf16 %v491
        %v495 = vunpack.c.l.bf16 %v492
        %v496 = vunpack.c.h.bf16 %v492
        %v497 = vadd.f32 %v444, %v493
        %v498 = vadd.f32 %v446, %v494
        %v499 = vadd.f32 %v485, %v495
        %v500 = vadd.f32 %v487, %v496
        %v501 = vmax.f32 %v497, 0.0
        %v502 = vmax.f32 %v498, 0.0
        %v503 = vmax.f32 %v499, 0.0
        %v504 = vmax.f32 %v500, 0.0
        %v505 = vpack.c.bf16 %v501, %v501
        %v506 = vpack.c.bf16 %v502, %v502
        %v507 = vpack.c.bf16 %v503, %v503
        %v508 = vpack.c.bf16 %v504, %v504
        %v513 = vunpack.c.l.b16 %v505
        %v514 = vunpack.c.l.b16 %v506
        %v515 = vunpack.c.l.b16 %v507
        %v516 = vunpack.c.l.b16 %v508
        %v517 = vpack.c.b16 %v514, %v513
        %v518 = vpack.c.b16 %v516, %v515
        %521 = vst [vmem:[%s274] sm:$0xff] %v517
        %522 = vst [vmem:[%s274 + $0x8] sm:$0xff] %v518
        %s523 = smul.u32 4, %s15
        %p524 = scmp.lt.s32.totalorder %s523, 15
        %s525 = scalar_select %p524, %s523, 15
        %s526 = smul.addr %s525, 4
        %s527 = scalar_lea.vmem %s4, %s526
        // Predicated region
        $region60: #{net_head17_forward.19} parent=54 // pred_check
          %p528 = pneg %p127
        $region61: #{net_head17_forward.19} parent=54 // pred_check_branch
          %530 = sbr.rel (%p528) target = $region63
        $region62: #{net_head17_forward.19} parent=54 // pred_region
          %s531 = smul.u32 4, %s15
        $region63: #{net_head17_forward.19} parent=54 // pred_fallthru
          _
      $region55: #{net_head17_forward.19} parent=5 // pred_fallthru
        _
      %p532 = scmp.le.s32.totalorder 2, %s10
      // Predicated region
      $region64: #{net_head17_forward.19} parent=5 // pred_check
        %p533 = pneg %p532
      $region65: #{net_head17_forward.19} parent=5 // pred_check_branch
        %535 = sbr.rel (%p533) target = $region67
      $region66: #{net_head17_forward.19} parent=5 // pred_region
        %s536 = ssub.s32 %s10, 2
        // Predicated region
        $region68: #{net_head17_forward.19} parent=66 // pred_check
          %p537 = pneg %p133
        $region69: #{net_head17_forward.19} parent=66 // pred_check_branch
          %539 = sbr.rel (%p537) target = $region71
        $region70: #{net_head17_forward.19} parent=66 // pred_region
          %s540 = smul.u32 4, %s16
          %p541 = scmp.lt.s32.totalorder %s540, 15
          %s542 = scalar_select %p541, %s540, 15
          %s543 = smul.addr %s542, 4
          %s544 = scalar_lea.vmem %s4, %s543
        $region71: #{net_head17_forward.19} parent=66 // pred_fallthru
          _
      $region67: #{net_head17_forward.19} parent=5 // pred_fallthru
        _
    $region6: #{net_head17_forward.19} parent=1 // loop_footer
      %s14 = sadd.s32 1, %s10
    $region7: #{net_head17_forward.19} parent=1 // loop_footer_branch
      %9 = sbr.rel target = $region3
    $region8: #{net_head17_forward.19} parent=1 // loop_exit
      _

// kernel: net_head17_forward.24
$region0: #{net_head17_forward.24}
  #allocation0 [shape = 'u32[]', space=smem, size = 0x4, offset = 0x4, fixed_abs, tag = 'smem constant byte address 0x4 - core index']
  #allocation1 [shape = 'u32[144,128]{1,0:T(1,128)}', space=vmem, size = 0x12000, scoped, tag = 'internal scratch']
  %s0 = inlined_call_operand.vmem [shape: bf16[32,72], index: 0, kind: input, shape index: {}]
  %s1 = inlined_call_operand.vmem [shape: bf16[72,512], index: 1, kind: input, shape index: {}]
  %s2 = inlined_call_operand.vmem [shape: f32[16,1], index: 2, kind: input, shape index: {}]
  %s3 = inlined_call_operand.vmem [shape: f32[16,1], index: 3, kind: input, shape index: {}]
  %s4 = inlined_call_operand.vmem [shape: bf16[16,512], index: 4, kind: output, shape index: {0}]
  %s5 = inlined_call_operand.vmem [shape: bf16[16,512], index: 5, kind: output, shape index: {1}]
  %6 = xla_tuple %s4, %s5
  %s7 = sld [smem:[#allocation0]]
  $region163: #{net_head17_forward.24} parent=0
    _
  %s9 = ssub.s32 1, %s7
  %s10 = scalar_select 0, %s9, %s7
  $region1: #{net_head17_forward.24} parent=0
    #allocation2 [shape = 'u8[73728]{0}', space=vmem, size = 0x12000, scoped, tag = 'input window, operand 1']
    #allocation3 [shape = 'u8[16384]{0}', space=vmem, size = 0x4000, scoped, tag = 'output window, operand 0']
    #allocation4 [shape = 'u8[16384]{0}', space=vmem, size = 0x4000, scoped, tag = 'output window, operand 1']
    loop: start=0, step=1, limit=4
    $region2: #{net_head17_forward.24} parent=1 // loop_pre_header
      _
    $region3: #{net_head17_forward.24} parent=1 // loop_header
      %s12 = sphi 0, %s16
      %p13 = scmp.ge.s32.totalorder %s12, 4
      %s20 = sphi 0, %s20
      %s22 = sphi 0, %s20
      %s23 = sphi 0, %s22
      %s37 = sphi 0, %s23
      %s43 = sphi 0, %s45
      %s46 = sphi 0, %s43
      %s47 = sphi 0, %s46
      %s63 = sphi 0, %s47
      %s67 = sphi 0, %s67
      %s69 = sphi 0, %s67
      %s70 = sphi 0, %s69
      %s84 = sphi 0, %s70
      %s88 = sphi 0, %s88
      %s90 = sphi 0, %s88
      %s91 = sphi 0, %s90
      %s105 = sphi 0, %s91
      %s111 = sphi 0, %s113
      %s114 = sphi 0, %s111
      %s115 = sphi 0, %s114
      %s131 = sphi 0, %s115
      %s137 = sphi 0, %s139
      %s140 = sphi 0, %s137
      %s141 = sphi 0, %s140
      %s157 = sphi 0, %s141
    $region4: #{net_head17_forward.24} parent=1 // loop_header_branch
      %15 = sbr.rel (%p13) target = $region8
    $region5: #{net_head17_forward.24} parent=1 // loop_body
      %s17 = ssub.s32 %s12, 1
      %s18 = ssub.s32 %s12, 2
      %s19 = sadd.s32 %s12, 1
      %s21 = sadd.s32 %s20, 1
      %p24 = scmp.eq.s32.totalorder %s12, 1
      %p25 = scmp.ne.s32.totalorder %s20, %s22
      %p26 = scmp.eq.s32.totalorder %s12, 0
      %p27 = por %p25, %p26
      %p28 = scmp.ne.s32.totalorder %s20, %s22
      %p29 = scmp.eq.s32.totalorder %s17, 1
      %p30 = por %p28, %p29
      %p31 = scmp.ne.s32.totalorder %s22, %s23
      %p32 = scmp.eq.s32.totalorder %s17, 0
      %p33 = por %p31, %p32
      %p34 = scmp.ne.s32.totalorder %s22, %s23
      %p35 = scmp.eq.s32.totalorder %s18, 1
      %p36 = por %p34, %p35
      %p38 = scmp.ne.s32.totalorder %s23, %s37
      %p39 = scmp.eq.s32.totalorder %s18, 0
      %p40 = por %p38, %p39
      %s41 = ssub.s32 %s12, %s19
      %p42 = scmp.eq.s32.totalorder %s41, 0
      %s44 = sadd.s32 %s43, 1
      %s45 = scalar_select %p42, %s43, %s44
      %p48 = pneg %p42
      %p49 = scmp.eq.s32.totalorder %s12, 1
      %p50 = por %p48, %p49
      %p51 = scmp.ne.s32.totalorder %s43, %s46
      %p52 = scmp.eq.s32.totalorder %s12, 0
      %p53 = por %p51, %p52
      %p54 = scmp.ne.s32.totalorder %s43, %s46
      %p55 = scmp.eq.s32.totalorder %s17, 1
      %p56 = por %p54, %p55
      %p57 = scmp.ne.s32.totalorder %s46, %s47
      %p58 = scmp.eq.s32.totalorder %s17, 0
      %p59 = por %p57, %p58
      %p60 = scmp.ne.s32.totalorder %s46, %s47
      %p61 = scmp.eq.s32.totalorder %s18, 1
      %p62 = por %p60, %p61
      %p64 = scmp.ne.s32.totalorder %s47, %s63
      %p65 = scmp.eq.s32.totalorder %s18, 0
      %p66 = por %p64, %p65
      %s68 = sadd.s32 %s67, 1
      %p71 = scmp.eq.s32.totalorder %s12, 1
      %p72 = scmp.ne.s32.totalorder %s67, %s69
      %p73 = scmp.eq.s32.totalorder %s12, 0
      %p74 = por %p72, %p73
      %p75 = scmp.ne.s32.totalorder %s67, %s69
      %p76 = scmp.eq.s32.totalorder %s17, 1
      %p77 = por %p75, %p76
      %p78 = scmp.ne.s32.totalorder %s69, %s70
      %p79 = scmp.eq.s32.totalorder %s17, 0
      %p80 = por %p78, %p79
      %p81 = scmp.ne.s32.totalorder %s69, %s70
      %p82 = scmp.eq.s32.totalorder %s18, 1
      %p83 = por %p81, %p82
      %p85 = scmp.ne.s32.totalorder %s70, %s84
      %p86 = scmp.eq.s32.totalorder %s18, 0
      %p87 = por %p85, %p86
      %s89 = sadd.s32 %s88, 1
      %p92 = scmp.eq.s32.totalorder %s12, 1
      %p93 = scmp.ne.s32.totalorder %s88, %s90
      %p94 = scmp.eq.s32.totalorder %s12, 0
      %p95 = por %p93, %p94
      %p96 = scmp.ne.s32.totalorder %s88, %s90
      %p97 = scmp.eq.s32.totalorder %s17, 1
      %p98 = por %p96, %p97
      %p99 = scmp.ne.s32.totalorder %s90, %s91
      %p100 = scmp.eq.s32.totalorder %s17, 0
      %p101 = por %p99, %p100
      %p102 = scmp.ne.s32.totalorder %s90, %s91
      %p103 = scmp.eq.s32.totalorder %s18, 1
      %p104 = por %p102, %p103
      %p106 = scmp.ne.s32.totalorder %s91, %s105
      %p107 = scmp.eq.s32.totalorder %s18, 0
      %p108 = por %p106, %p107
      %s109 = ssub.s32 %s12, %s19
      %p110 = scmp.eq.s32.totalorder %s109, 0
      %s112 = sadd.s32 %s111, 1
      %s113 = scalar_select %p110, %s111, %s112
      %p116 = pneg %p110
      %p117 = scmp.eq.s32.totalorder %s12, 1
      %p118 = por %p116, %p117
      %p119 = scmp.ne.s32.totalorder %s111, %s114
      %p120 = scmp.eq.s32.totalorder %s12, 0
      %p121 = por %p119, %p120
      %p122 = scmp.ne.s32.totalorder %s111, %s114
      %p123 = scmp.eq.s32.totalorder %s17, 1
      %p124 = por %p122, %p123
      %p125 = scmp.ne.s32.totalorder %s114, %s115
      %p126 = scmp.eq.s32.totalorder %s17, 0
      %p127 = por %p125, %p126
      %p128 = scmp.ne.s32.totalorder %s114, %s115
      %p129 = scmp.eq.s32.totalorder %s18, 1
      %p130 = por %p128, %p129
      %p132 = scmp.ne.s32.totalorder %s115, %s131
      %p133 = scmp.eq.s32.totalorder %s18, 0
      %p134 = por %p132, %p133
      %s135 = ssub.s32 %s12, %s19
      %p136 = scmp.eq.s32.totalorder %s135, 0
      %s138 = sadd.s32 %s137, 1
      %s139 = scalar_select %p136, %s137, %s138
      %p142 = pneg %p136
      %p143 = scmp.eq.s32.totalorder %s12, 1
      %p144 = por %p142, %p143
      %p145 = scmp.ne.s32.totalorder %s137, %s140
      %p146 = scmp.eq.s32.totalorder %s12, 0
      %p147 = por %p145, %p146
      %p148 = scmp.ne.s32.totalorder %s137, %s140
      %p149 = scmp.eq.s32.totalorder %s17, 1
      %p150 = por %p148, %p149
      %p151 = scmp.ne.s32.totalorder %s140, %s141
      %p152 = scmp.eq.s32.totalorder %s17, 0
      %p153 = por %p151, %p152
      %p154 = scmp.ne.s32.totalorder %s140, %s141
      %p155 = scmp.eq.s32.totalorder %s18, 1
      %p156 = por %p154, %p155
      %p158 = scmp.ne.s32.totalorder %s141, %s157
      %p159 = scmp.eq.s32.totalorder %s18, 0
      %p160 = por %p158, %p159
      %p161 = scmp.le.s32.totalorder 1, %s12
      %p162 = scmp.lt.s32.totalorder %s12, 3
      %p163 = pnand %p161, %p162
      %p164 = pneg %p163
      // Predicated region
      $region9: #{net_head17_forward.24} parent=5 // pred_check
        _
      $region10: #{net_head17_forward.24} parent=5 // pred_check_branch
        %166 = sbr.rel (%p163) target = $region12
      $region11: #{net_head17_forward.24} parent=5 // pred_region
        %s167 = ssub.s32 %s12, 1
        // Predicated region
        $region13: #{net_head17_forward.24} parent=11 // pred_check
          %p168 = pneg %p33
        $region14: #{net_head17_forward.24} parent=11 // pred_check_branch
          %170 = sbr.rel (%p168) target = $region16
        $region15: #{net_head17_forward.24} parent=11 // pred_region
          _
        $region16: #{net_head17_forward.24} parent=11 // pred_fallthru
          _
        // Predicated region
        $region17: #{net_head17_forward.24} parent=11 // pred_check
          %p171 = pneg %p80
        $region18: #{net_head17_forward.24} parent=11 // pred_check_branch
          %173 = sbr.rel (%p171) target = $region20
        $region19: #{net_head17_forward.24} parent=11 // pred_region
          _
        $region20: #{net_head17_forward.24} parent=11 // pred_fallthru
          _
        // Predicated region
        $region21: #{net_head17_forward.24} parent=11 // pred_check
          %p174 = pneg %p101
        $region22: #{net_head17_forward.24} parent=11 // pred_check_branch
          %176 = sbr.rel (%p174) target = $region24
        $region23: #{net_head17_forward.24} parent=11 // pred_region
          _
        $region24: #{net_head17_forward.24} parent=11 // pred_fallthru
          _
      $region12: #{net_head17_forward.24} parent=5 // pred_fallthru
        _
      %p177 = scmp.lt.s32.totalorder %s12, 2
      // Predicated region
      $region25: #{net_head17_forward.24} parent=5 // pred_check
        %p178 = pneg %p177
      $region26: #{net_head17_forward.24} parent=5 // pred_check_branch
        %180 = sbr.rel (%p178) target = $region28
      $region27: #{net_head17_forward.24} parent=5 // pred_region
        // Predicated region
        $region29: #{net_head17_forward.24} parent=27 // pred_check
          %p181 = pneg %p53
        $region30: #{net_head17_forward.24} parent=27 // pred_check_branch
          %183 = sbr.rel (%p181) target = $region32
        $region31: #{net_head17_forward.24} parent=27 // pred_region
          %s184 = sand.u32 %s43, 1
          %s185 = sand.u32 %s43, 1
          %s186 = smul.addr %s185, 72
          %s187 = scalar_lea.vmem [#allocation2], %s186
          %s188 = smul.u32 2, %s12
          %s189 = smul.addr %s188, 4
          %s190 = scalar_lea.vmem %s1, %s189
          // Predicated region
          $region33: #{net_head17_forward.24} parent=31 // pred_check
            _
          $region34: #{net_head17_forward.24} parent=31 // pred_check_branch
            %192 = sbr.rel (0) target = $region36
          $region35: #{net_head17_forward.24} parent=31 // pred_region
            // Predicated region
            $region37: #{net_head17_forward.24} parent=35 // pred_check
              _
            $region38: #{net_head17_forward.24} parent=35 // pred_check_branch
              %194 = sbr.rel (0) target = $region40
            $region39: #{net_head17_forward.24} parent=35 // pred_region
              // Predicated region
              $region52: #{net_head17_forward.24} parent=39 // pred_check
                _
              $region53: #{net_head17_forward.24} parent=39 // pred_check_branch
                %226 = sbr.rel (0) target = $region55
              $region54: #{net_head17_forward.24} parent=39 // pred_region
                loop: start=0, step=1, limit=1
                $region56: #{net_head17_forward.24} parent=54 // loop_pre_header
                  _
                $region57: #{net_head17_forward.24} parent=54 // loop_header
                  %s228 = sphi 0, %s232
                  %p229 = scmp.ge.s32.totalorder %s228, 1
                  %s233 = sphi %s190, %s190
                  %s234 = sphi %s187, %s187
                $region58: #{net_head17_forward.24} parent=54 // loop_header_branch
                  %231 = sbr.rel (%p229) target = $region62
                $region59: #{net_head17_forward.24} parent=54 // loop_body
                  %v235 = vld [vmem:[%s233] sm:$0xff]
                  %236 = vst [vmem:[%s234] sm:$0xff] %v235
                  %v237 = vld [vmem:[%s233 + $0x10] sm:$0xff]
                  %238 = vst [vmem:[%s234 + $0x8] sm:$0xff] %v237
                  %v239 = vld [vmem:[%s233 + $0x20] sm:$0xff]
                  %240 = vst [vmem:[%s234 + $0x10] sm:$0xff] %v239
                  %v241 = vld [vmem:[%s233 + $0x30] sm:$0xff]
                  %242 = vst [vmem:[%s234 + $0x18] sm:$0xff] %v241
                  %v243 = vld [vmem:[%s233 + $0x40] sm:$0xff]
                  %244 = vst [vmem:[%s234 + $0x20] sm:$0xff] %v243
                  %v245 = vld [vmem:[%s233 + $0x50] sm:$0xff]
                  %246 = vst [vmem:[%s234 + $0x28] sm:$0xff] %v245
                  %v247 = vld [vmem:[%s233 + $0x60] sm:$0xff]
                  %248 = vst [vmem:[%s234 + $0x30] sm:$0xff] %v247
                  %v249 = vld [vmem:[%s233 + $0x70] sm:$0xff]
                  %250 = vst [vmem:[%s234 + $0x38] sm:$0xff] %v249
                  %v251 = vld [vmem:[%s233 + $0x80] sm:$0xff]
                  %252 = vst [vmem:[%s234 + $0x40] sm:$0xff] %v251
                $region60: #{net_head17_forward.24} parent=54 // loop_footer
                  %s232 = sadd.s32 1, %s228
                $region61: #{net_head17_forward.24} parent=54 // loop_footer_branch
                  %227 = sbr.rel target = $region57
                $region62: #{net_head17_forward.24} parent=54 // loop_exit
                  _
              $region55: #{net_head17_forward.24} parent=39 // pred_fallthru
                _
              // Predicated region
              $region63: #{net_head17_forward.24} parent=39 // pred_check
                _
              $region64: #{net_head17_forward.24} parent=39 // pred_check_branch
                %254 = sbr.rel target = $region66
              $region65: #{net_head17_forward.24} parent=39 // pred_region
                _
              $region66: #{net_head17_forward.24} parent=39 // pred_fallthru
                _
            $region40: #{net_head17_forward.24} parent=35 // pred_fallthru
              _
            // Predicated region
            $region41: #{net_head17_forward.24} parent=35 // pred_check
              _
            $region42: #{net_head17_forward.24} parent=35 // pred_check_branch
              %196 = sbr.rel target = $region44
            $region43: #{net_head17_forward.24} parent=35 // pred_region
              %s198 = ssub.s32 256, 1
              loop: start=0, step=1, limit=1
              $region45: #{net_head17_forward.24} parent=43 // loop_pre_header
                _
              $region46: #{net_head17_forward.24} parent=43 // loop_header
                %s200 = sphi 0, %s204
                %p201 = scmp.ge.s32.totalorder %s200, 1
                %s205 = sphi %s190, %s190
                %s206 = sphi %s187, %s187
              $region47: #{net_head17_forward.24} parent=43 // loop_header_branch
                %203 = sbr.rel (%p201) target = $region51
              $region48: #{net_head17_forward.24} parent=43 // loop_body
                %v207 = vld [vmem:[%s205] sm:%s198]
                %208 = vst [vmem:[%s206] sm:%s198] %v207
                %v209 = vld [vmem:[%s205 + $0x10] sm:%s198]
                %210 = vst [vmem:[%s206 + $0x8] sm:%s198] %v209
                %v211 = vld [vmem:[%s205 + $0x20] sm:%s198]
                %212 = vst [vmem:[%s206 + $0x10] sm:%s198] %v211
                %v213 = vld [vmem:[%s205 + $0x30] sm:%s198]
                %214 = vst [vmem:[%s206 + $0x18] sm:%s198] %v213
                %v215 = vld [vmem:[%s205 + $0x40] sm:%s198]
                %216 = vst [vmem:[%s206 + $0x20] sm:%s198] %v215
                %v217 = vld [vmem:[%s205 + $0x50] sm:%s198]
                %218 = vst [vmem:[%s206 + $0x28] sm:%s198] %v217
                %v219 = vld [vmem:[%s205 + $0x60] sm:%s198]
                %220 = vst [vmem:[%s206 + $0x30] sm:%s198] %v219
                %v221 = vld [vmem:[%s205 + $0x70] sm:%s198]
                %222 = vst [vmem:[%s206 + $0x38] sm:%s198] %v221
                %v223 = vld [vmem:[%s205 + $0x80] sm:%s198]
                %224 = vst [vmem:[%s206 + $0x40] sm:%s198] %v223
              $region49: #{net_head17_forward.24} parent=43 // loop_footer
                %s204 = sadd.s32 1, %s200
              $region50: #{net_head17_forward.24} parent=43 // loop_footer_branch
                %199 = sbr.rel target = $region46
              $region51: #{net_head17_forward.24} parent=43 // loop_exit
                _
            $region44: #{net_head17_forward.24} parent=35 // pred_fallthru
              _
          $region36: #{net_head17_forward.24} parent=31 // pred_fallthru
            _
          %255 = vnop
        $region32: #{net_head17_forward.24} parent=27 // pred_fallthru
          _
      $region28: #{net_head17_forward.24} parent=5 // pred_fallthru
        _
      %p256 = scmp.le.s32.totalorder 1, %s12
      %p257 = scmp.lt.s32.totalorder %s12, 3
      %p258 = pnand %p256, %p257
      %p259 = pneg %p258
      // Predicated region
      $region67: #{net_head17_forward.24} parent=5 // pred_check
        _
      $region68: #{net_head17_forward.24} parent=5 // pred_check_branch
        %261 = sbr.rel (%p258) target = $region70
      $region69: #{net_head17_forward.24} parent=5 // pred_region
        %s262 = ssub.s32 %s12, 1
        %s263 = sand.u32 %s46, 1
        %s264 = sand.u32 %s46, 1
        %s265 = smul.addr %s264, 72
        %s266 = scalar_lea.vmem [#allocation2], %s265
        // Predicated region
        $region71: #{net_head17_forward.24} parent=69 // pred_check
          %p267 = pneg %p59
        $region72: #{net_head17_forward.24} parent=69 // pred_check_branch
          %269 = sbr.rel (%p267) target = $region74
        $region73: #{net_head17_forward.24} parent=69 // pred_region
          _
        $region74: #{net_head17_forward.24} parent=69 // pred_fallthru
          _
        %p270 = pneg %p33
        %p271 = pneg %p30
        %s272 = sand.u32 %s46, 1
        %s273 = sand.u32 %s46, 1
        %s274 = smul.addr %s273, 72
        %s275 = scalar_lea.vmem [#allocation2], %s274
        %p276 = pneg %p59
        %p277 = pneg %p56
        %p278 = pneg %p80
        %p279 = pneg %p77
        %p280 = pneg %p101
        %p281 = pneg %p98
        %p282 = pneg %p127
        %p283 = pneg %p124
        %s284 = sand.u32 %s114, 1
        %s285 = sand.u32 %s114, 1
        %s286 = smul.addr %s285, 16
        %s287 = scalar_lea.vmem [#allocation3], %s286
        %p288 = pneg %p153
        %p289 = pneg %p150
        %s290 = sand.u32 %s140, 1
        %s291 = sand.u32 %s140, 1
        %s292 = smul.addr %s291, 16
        %s293 = scalar_lea.vmem [#allocation4], %s292
        %s294 = smul.u32 2, %s17
        %s295 = smul.u32 2, %s17
        %s296 = smul.u32 2, %s17
        %v298 = vld [vmem:[%s0] sm:$0xf]
        %v299 = vld [vmem:[%s0 + $0x4] sm:$0xf]
        %v300 = vld [vmem:[%s0 + $0x8] sm:$0xf]
        %v301 = vld [vmem:[%s0 + $0xc] sm:$0xf]
        %v302 = vld [vmem:[%s266] sm:$0xff]
        %v303 = vld [vmem:[%s266 + $0x8] sm:$0xff]
        %v304 = vld [vmem:[%s266 + $0x10] sm:$0xff]
        %v305 = vld [vmem:[%s266 + $0x18] sm:$0xff]
        %v306 = vld [vmem:[%s266 + $0x20] sm:$0xff]
        %v307 = vld [vmem:[%s266 + $0x28] sm:$0xff]
        %v308 = vld [vmem:[%s266 + $0x30] sm:$0xff]
        %v309 = vld [vmem:[%s266 + $0x38] sm:$0xff]
        %v310 = vld [vmem:[%s266 + $0x40] sm:$0xff]
        %v315 = vunpack.c.l.b16 %v298
        %v316 = vunpack.c.l.b16 %v299
        %v317 = vunpack.c.l.b16 %v300
        %v318 = vunpack.c.l.b16 %v301
        %v319 = vpack.c.b16 %v316, %v315
        %v320 = vpack.c.b16 %v318, %v317
        %v330 = vunpack.c.l.b16 %v302
        %v331 = vunpack.c.h.b16 %v302
        %v332 = vunpack.c.l.b16 %v303
        %v333 = vunpack.c.h.b16 %v303
        %v334 = vunpack.c.l.b16 %v304
        %v335 = vunpack.c.h.b16 %v304
        %v336 = vunpack.c.l.b16 %v305
        %v337 = vunpack.c.h.b16 %v305
        %v338 = vunpack.c.l.b16 %v306
        %v339 = vunpack.c.h.b16 %v306
        %v340 = vunpack.c.l.b16 %v307
        %v341 = vunpack.c.h.b16 %v307
        %v342 = vunpack.c.l.b16 %v308
        %v343 = vunpack.c.h.b16 %v308
        %v344 = vunpack.c.l.b16 %v309
        %v345 = vunpack.c.h.b16 %v309
        %v346 = vunpack.c.l.b16 %v310
        %v347 = vunpack.c.h.b16 %v310
        %v348 = vpack.c.b16 %v332, %v330
        %v349 = vpack.c.b16 %v333, %v331
        %v350 = vpack.c.b16 %v336, %v334
        %v351 = vpack.c.b16 %v337, %v335
        %v352 = vpack.c.b16 %v340, %v338
        %v353 = vpack.c.b16 %v341, %v339
        %v354 = vpack.c.b16 %v344, %v342
        %v355 = vpack.c.b16 %v345, %v343
        %v356 = vpack.c.b16 %v346, %v346
        %v357 = vpack.c.b16 %v347, %v347
        %vm366 = vcmask 588800
        %v368 = vsel %vm366, %v319, 0
        %v371 = vsel %vm366, %v320, 0
        %vm373 = vcmask 1043456
        %v375 = vsel %vm373, %v356, 0
        %v378 = vsel %vm373, %v357, 0
        %380 = vmatprep.subr.bf16.mxu0 0
        %381 = vmatpush1.bf16.msra.mxu0 0
        %382 = vmatprep.subr.bf16.mxu0 0
        %383 = vmatpush1.bf16.msra.mxu0 0
        %384 = vmatprep.subr.bf16.mxu0 0
        %385 = vmatpush1.bf16.msra.mxu0 0
        %386 = vmatprep.subr.bf16.mxu0 %v378
        %387 = vmatpush1.bf16.msra.mxu0 %v375
        %388 = vmatprep.subr.bf16.mxu0 %v355
        %389 = vmatpush1.bf16.msra.mxu0 %v354
        %390 = vmatprep.subr.bf16.mxu0 %v353
        %391 = vmatpush1.bf16.msra.mxu0 %v352
        %392 = vmatprep.subr.bf16.mxu0 %v351
        %393 = vmatpush1.bf16.msra.mxu0 %v350
        %394 = vmatprep.subr.bf16.mxu0 %v349
        %395 = vmatpush1.bf16.msra.mxu0 %v348
        %396 = vmatprep.subr.bf16.mxu0 0
        %397 = vmatpush2.bf16.msra.mxu0 0
        %398 = vmatprep.subr.bf16.mxu0 0
        %399 = vmatpush2.bf16.msra.mxu0 0
        %400 = vmatprep.subr.bf16.mxu0 0
        %401 = vmatpush2.bf16.msra.mxu0 0
        %402 = vmatprep.subr.bf16.mxu0 0
        %403 = vmatpush2.bf16.msra.mxu0 0
        %404 = vmatprep.subr.bf16.mxu0 0
        %405 = vmatpush2.bf16.msra.mxu0 0
        %406 = vmatprep.subr.bf16.mxu0 0
        %407 = vmatpush2.bf16.msra.mxu0 0
        %408 = vmatprep.subr.bf16.mxu0 0
        %409 = vmatpush2.bf16.msra.mxu0 0
        %410 = vmatprep.subr.bf16.mxu0 0
        %411 = vmatpush2.bf16.msra.mxu0 0
        %412 = vmatprep.mubr.bf16.mxu0 0
        %413 = vmatmul.mubr.bf16.gmra.mxu0 %v368
        %v414 = vpop.f32.mrf.mxu0
        %v415 = vadd.f32 0.0, %v414
        %v416 = vpop.f32.mrf.mxu0
        %v417 = vadd.f32 0.0, %v416
        %v418 = vpop.f32.mrf.mxu0
        %v419 = vadd.f32 0.0, %v418
        %v420 = vpop.f32.mrf.mxu0
        %v421 = vadd.f32 0.0, %v420
        %422 = vmatprep.mubr.bf16.mxu0 0
        %423 = vmatmul.mubr.bf16.gmra.mxu0 %v371
        %v424 = vpop.f32.mrf.mxu0
        %v425 = vadd.f32 0.0, %v424
        %v426 = vpop.f32.mrf.mxu0
        %v427 = vadd.f32 0.0, %v426
        %v428 = vpop.f32.mrf.mxu0
        %v429 = vadd.f32 0.0, %v428
        %v430 = vpop.f32.mrf.mxu0
        %v431 = vadd.f32 0.0, %v430
        %432 = vdwg.mxu0
        %v433 = vld [vmem:[%s2] sm:$0xff]
        %v434 = vld [vmem:[%s2 + $0x8] sm:$0xff]
        %436 = vset.pattern.permute.xlu0 0
        %437 = vperm.xlu0 %436, %v433
        %v438 = vpop.permute.xlu0 %437
        %441 = vset.pattern.permute.xlu0 0
        %442 = vperm.xlu0 %441, %v434
        %v443 = vpop.permute.xlu0 %442
        %v445 = vadd.f32 %v415, %v438
        %v446 = vadd.f32 %v417, %v438
        %v447 = vadd.f32 %v419, %v443
        %v448 = vadd.f32 %v421, %v443
        %v449 = vmax.f32 %v445, 0.0
        %v450 = vmax.f32 %v446, 0.0
        %v451 = vmax.f32 %v447, 0.0
        %v452 = vmax.f32 %v448, 0.0
        %v453 = vld [vmem:[%s3] sm:$0xff]
        %v454 = vld [vmem:[%s3 + $0x8] sm:$0xff]
        %456 = vset.pattern.permute.xlu0 0
        %457 = vperm.xlu0 %456, %v453
        %v458 = vpop.permute.xlu0 %457
        %461 = vset.pattern.permute.xlu0 0
        %462 = vperm.xlu0 %461, %v454
        %v463 = vpop.permute.xlu0 %462
        %v465 = vadd.f32 %v425, %v458
        %v466 = vadd.f32 %v427, %v458
        %v467 = vadd.f32 %v429, %v463
        %v468 = vadd.f32 %v431, %v463
        %v469 = vpack.c.bf16 %v451, %v449
        %v470 = vpack.c.bf16 %v452, %v450
        %v473 = vunpack.c.l.b16 %v469
        %v474 = vunpack.c.l.b16 %v470
        %v475 = vunpack.c.h.b16 %v469
        %v476 = vunpack.c.h.b16 %v470
        %v477 = vpack.c.b16 %v474, %v473
        %v478 = vpack.c.b16 %v476, %v475
        %481 = vst [vmem:[%s287] sm:$0xff] %v477
        %482 = vst [vmem:[%s287 + $0x8] sm:$0xff] %v478
        %v483 = vpack.c.bf16 %v467, %v465
        %v484 = vpack.c.bf16 %v468, %v466
        %v487 = vunpack.c.l.b16 %v483
        %v488 = vunpack.c.l.b16 %v484
        %v489 = vunpack.c.h.b16 %v483
        %v490 = vunpack.c.h.b16 %v484
        %v491 = vpack.c.b16 %v488, %v487
        %v492 = vpack.c.b16 %v490, %v489
        %495 = vst [vmem:[%s293] sm:$0xff] %v491
        %496 = vst [vmem:[%s293 + $0x8] sm:$0xff] %v492
        %s497 = sand.u32 %s114, 1
        %s498 = sand.u32 %s114, 1
        %s499 = smul.addr %s498, 16
        %s500 = scalar_lea.vmem [#allocation3], %s499
        %s501 = sand.u32 %s140, 1
        %s502 = sand.u32 %s140, 1
        %s503 = smul.addr %s502, 16
        %s504 = scalar_lea.vmem [#allocation4], %s503
        // Predicated region
        $region75: #{net_head17_forward.24} parent=69 // pred_check
          %p505 = pneg %p124
        $region76: #{net_head17_forward.24} parent=69 // pred_check_branch
          %507 = sbr.rel (%p505) target = $region78
        $region77: #{net_head17_forward.24} parent=69 // pred_region
          %s508 = smul.u32 2, %s17
          %s509 = smul.addr %s508, 4
          %s510 = scalar_lea.vmem %s4, %s509
          // Predicated region
          $region79: #{net_head17_forward.24} parent=77 // pred_check
            _
          $region80: #{net_head17_forward.24} parent=77 // pred_check_branch
            %512 = sbr.rel (0) target = $region82
          $region81: #{net_head17_forward.24} parent=77 // pred_region
            // Predicated region
            $region83: #{net_head17_forward.24} parent=81 // pred_check
              _
            $region84: #{net_head17_forward.24} parent=81 // pred_check_branch
              %514 = sbr.rel (0) target = $region86
            $region85: #{net_head17_forward.24} parent=81 // pred_region
              // Predicated region
              $region98: #{net_head17_forward.24} parent=85 // pred_check
                _
              $region99: #{net_head17_forward.24} parent=85 // pred_check_branch
                %532 = sbr.rel (0) target = $region101
              $region100: #{net_head17_forward.24} parent=85 // pred_region
                loop: start=0, step=1, limit=1
                $region102: #{net_head17_forward.24} parent=100 // loop_pre_header
                  _
                $region103: #{net_head17_forward.24} parent=100 // loop_header
                  %s534 = sphi 0, %s538
                  %p535 = scmp.ge.s32.totalorder %s534, 1
                  %s539 = sphi %s500, %s500
                  %s540 = sphi %s510, %s510
                $region104: #{net_head17_forward.24} parent=100 // loop_header_branch
                  %537 = sbr.rel (%p535) target = $region108
                $region105: #{net_head17_forward.24} parent=100 // loop_body
                  %v541 = vld [vmem:[%s539] sm:$0xff]
                  %542 = vst [vmem:[%s540] sm:$0xff] %v541
                  %v543 = vld [vmem:[%s539 + $0x8] sm:$0xff]
                  %544 = vst [vmem:[%s540 + $0x10] sm:$0xff] %v543
                $region106: #{net_head17_forward.24} parent=100 // loop_footer
                  %s538 = sadd.s32 1, %s534
                $region107: #{net_head17_forward.24} parent=100 // loop_footer_branch
                  %533 = sbr.rel target = $region103
                $region108: #{net_head17_forward.24} parent=100 // loop_exit
                  _
              $region101: #{net_head17_forward.24} parent=85 // pred_fallthru
                _
              // Predicated region
              $region109: #{net_head17_forward.24} parent=85 // pred_check
                _
              $region110: #{net_head17_forward.24} parent=85 // pred_check_branch
                %546 = sbr.rel target = $region112
              $region111: #{net_head17_forward.24} parent=85 // pred_region
                _
              $region112: #{net_head17_forward.24} parent=85 // pred_fallthru
                _
            $region86: #{net_head17_forward.24} parent=81 // pred_fallthru
              _
            // Predicated region
            $region87: #{net_head17_forward.24} parent=81 // pred_check
              _
            $region88: #{net_head17_forward.24} parent=81 // pred_check_branch
              %516 = sbr.rel target = $region90
            $region89: #{net_head17_forward.24} parent=81 // pred_region
              %s518 = ssub.s32 256, 1
              loop: start=0, step=1, limit=1
              $region91: #{net_head17_forward.24} parent=89 // loop_pre_header
                _
              $region92: #{net_head17_forward.24} parent=89 // loop_header
                %s520 = sphi 0, %s524
                %p521 = scmp.ge.s32.totalorder %s520, 1
                %s525 = sphi %s500, %s500
                %s526 = sphi %s510, %s510
              $region93: #{net_head17_forward.24} parent=89 // loop_header_branch
                %523 = sbr.rel (%p521) target = $region97
              $region94: #{net_head17_forward.24} parent=89 // loop_body
                %v527 = vld [vmem:[%s525] sm:%s518]
                %528 = vst [vmem:[%s526] sm:%s518] %v527
                %v529 = vld [vmem:[%s525 + $0x8] sm:%s518]
                %530 = vst [vmem:[%s526 + $0x10] sm:%s518] %v529
              $region95: #{net_head17_forward.24} parent=89 // loop_footer
                %s524 = sadd.s32 1, %s520
              $region96: #{net_head17_forward.24} parent=89 // loop_footer_branch
                %519 = sbr.rel target = $region92
              $region97: #{net_head17_forward.24} parent=89 // loop_exit
                _
            $region90: #{net_head17_forward.24} parent=81 // pred_fallthru
              _
          $region82: #{net_head17_forward.24} parent=77 // pred_fallthru
            _
          %547 = vnop
        $region78: #{net_head17_forward.24} parent=69 // pred_fallthru
          _
        // Predicated region
        $region113: #{net_head17_forward.24} parent=69 // pred_check
          %p548 = pneg %p150
        $region114: #{net_head17_forward.24} parent=69 // pred_check_branch
          %550 = sbr.rel (%p548) target = $region116
        $region115: #{net_head17_forward.24} parent=69 // pred_region
          %s551 = smul.u32 2, %s17
          %s552 = smul.addr %s551, 4
          %s553 = scalar_lea.vmem %s5, %s552
          // Predicated region
          $region117: #{net_head17_forward.24} parent=115 // pred_check
            _
          $region118: #{net_head17_forward.24} parent=115 // pred_check_branch
            %555 = sbr.rel (0) target = $region120
          $region119: #{net_head17_forward.24} parent=115 // pred_region
            // Predicated region
            $region121: #{net_head17_forward.24} parent=119 // pred_check
              _
            $region122: #{net_head17_forward.24} parent=119 // pred_check_branch
              %557 = sbr.rel (0) target = $region124
            $region123: #{net_head17_forward.24} parent=119 // pred_region
              // Predicated region
              $region136: #{net_head17_forward.24} parent=123 // pred_check
                _
              $region137: #{net_head17_forward.24} parent=123 // pred_check_branch
                %575 = sbr.rel (0) target = $region139
              $region138: #{net_head17_forward.24} parent=123 // pred_region
                loop: start=0, step=1, limit=1
                $region140: #{net_head17_forward.24} parent=138 // loop_pre_header
                  _
                $region141: #{net_head17_forward.24} parent=138 // loop_header
                  %s577 = sphi 0, %s581
                  %p578 = scmp.ge.s32.totalorder %s577, 1
                  %s582 = sphi %s504, %s504
                  %s583 = sphi %s553, %s553
                $region142: #{net_head17_forward.24} parent=138 // loop_header_branch
                  %580 = sbr.rel (%p578) target = $region146
                $region143: #{net_head17_forward.24} parent=138 // loop_body
                  %v584 = vld [vmem:[%s582] sm:$0xff]
                  %585 = vst [vmem:[%s583] sm:$0xff] %v584
                  %v586 = vld [vmem:[%s582 + $0x8] sm:$0xff]
                  %587 = vst [vmem:[%s583 + $0x10] sm:$0xff] %v586
                $region144: #{net_head17_forward.24} parent=138 // loop_footer
                  %s581 = sadd.s32 1, %s577
                $region145: #{net_head17_forward.24} parent=138 // loop_footer_branch
                  %576 = sbr.rel target = $region141
                $region146: #{net_head17_forward.24} parent=138 // loop_exit
                  _
              $region139: #{net_head17_forward.24} parent=123 // pred_fallthru
                _
              // Predicated region
              $region147: #{net_head17_forward.24} parent=123 // pred_check
                _
              $region148: #{net_head17_forward.24} parent=123 // pred_check_branch
                %589 = sbr.rel target = $region150
              $region149: #{net_head17_forward.24} parent=123 // pred_region
                _
              $region150: #{net_head17_forward.24} parent=123 // pred_fallthru
                _
            $region124: #{net_head17_forward.24} parent=119 // pred_fallthru
              _
            // Predicated region
            $region125: #{net_head17_forward.24} parent=119 // pred_check
              _
            $region126: #{net_head17_forward.24} parent=119 // pred_check_branch
              %559 = sbr.rel target = $region128
            $region127: #{net_head17_forward.24} parent=119 // pred_region
              %s561 = ssub.s32 256, 1
              loop: start=0, step=1, limit=1
              $region129: #{net_head17_forward.24} parent=127 // loop_pre_header
                _
              $region130: #{net_head17_forward.24} parent=127 // loop_header
                %s563 = sphi 0, %s567
                %p564 = scmp.ge.s32.totalorder %s563, 1
                %s568 = sphi %s504, %s504
                %s569 = sphi %s553, %s553
              $region131: #{net_head17_forward.24} parent=127 // loop_header_branch
                %566 = sbr.rel (%p564) target = $region135
              $region132: #{net_head17_forward.24} parent=127 // loop_body
                %v570 = vld [vmem:[%s568] sm:%s561]
                %571 = vst [vmem:[%s569] sm:%s561] %v570
                %v572 = vld [vmem:[%s568 + $0x8] sm:%s561]
                %573 = vst [vmem:[%s569 + $0x10] sm:%s561] %v572
              $region133: #{net_head17_forward.24} parent=127 // loop_footer
                %s567 = sadd.s32 1, %s563
              $region134: #{net_head17_forward.24} parent=127 // loop_footer_branch
                %562 = sbr.rel target = $region130
              $region135: #{net_head17_forward.24} parent=127 // loop_exit
                _
            $region128: #{net_head17_forward.24} parent=119 // pred_fallthru
              _
          $region120: #{net_head17_forward.24} parent=115 // pred_fallthru
            _
          %590 = vnop
        $region116: #{net_head17_forward.24} parent=69 // pred_fallthru
          _
      $region70: #{net_head17_forward.24} parent=5 // pred_fallthru
        _
      %p591 = scmp.le.s32.totalorder 2, %s12
      // Predicated region
      $region151: #{net_head17_forward.24} parent=5 // pred_check
        %p592 = pneg %p591
      $region152: #{net_head17_forward.24} parent=5 // pred_check_branch
        %594 = sbr.rel (%p592) target = $region154
      $region153: #{net_head17_forward.24} parent=5 // pred_region
        %s595 = ssub.s32 %s12, 2
        // Predicated region
        $region155: #{net_head17_forward.24} parent=153 // pred_check
          %p596 = pneg %p130
        $region156: #{net_head17_forward.24} parent=153 // pred_check_branch
          %598 = sbr.rel (%p596) target = $region158
        $region157: #{net_head17_forward.24} parent=153 // pred_region
          %s599 = sand.u32 %s115, 1
          %s600 = sand.u32 %s115, 1
          %s601 = smul.addr %s600, 16
          %s602 = scalar_lea.vmem [#allocation3], %s601
        $region158: #{net_head17_forward.24} parent=153 // pred_fallthru
          _
        // Predicated region
        $region159: #{net_head17_forward.24} parent=153 // pred_check
          %p603 = pneg %p156
        $region160: #{net_head17_forward.24} parent=153 // pred_check_branch
          %605 = sbr.rel (%p603) target = $region162
        $region161: #{net_head17_forward.24} parent=153 // pred_region
          %s606 = sand.u32 %s141, 1
          %s607 = sand.u32 %s141, 1
          %s608 = smul.addr %s607, 16
          %s609 = scalar_lea.vmem [#allocation4], %s608
        $region162: #{net_head17_forward.24} parent=153 // pred_fallthru
          _
      $region154: #{net_head17_forward.24} parent=5 // pred_fallthru
        _
    $region6: #{net_head17_forward.24} parent=1 // loop_footer
      %s16 = sadd.s32 1, %s12
    $region7: #{net_head17_forward.24} parent=1 // loop_footer_branch
      %11 = sbr.rel target = $region3
    $region8: #{net_head17_forward.24} parent=1 // loop_exit
      _

// kernel: net_head17_forward.25
$region0: #{net_head17_forward.25}
  #allocation0 [shape = 'u32[]', space=smem, size = 0x4, offset = 0x4, fixed_abs, tag = 'smem constant byte address 0x4 - core index']
  #allocation1 [shape = 'u32[144,128]{1,0:T(1,128)}', space=vmem, size = 0x12000, scoped, tag = 'internal scratch']
  %s0 = inlined_call_operand.vmem [shape: bf16[16,144], index: 0, kind: input, shape index: {}]
  %s1 = inlined_call_operand.vmem [shape: bf16[144,512], index: 1, kind: input, shape index: {}]
  %s2 = inlined_call_operand.vmem [shape: f32[16,1], index: 2, kind: input, shape index: {}]
  %s3 = inlined_call_operand.vmem [shape: bf16[16,512], index: 3, kind: input, shape index: {}]
  %s4 = inlined_call_operand.vmem [shape: bf16[16,512], index: 4, kind: output, shape index: {}]
  %s5 = sld [smem:[#allocation0]]
  $region159: #{net_head17_forward.25} parent=0
    _
  %s7 = ssub.s32 1, %s5
  %s8 = scalar_select 0, %s7, %s5
  $region1: #{net_head17_forward.25} parent=0
    #allocation2 [shape = 'u8[147456]{0}', space=vmem, size = 0x24000, scoped, tag = 'input window, operand 1']
    #allocation3 [shape = 'u8[16384]{0}', space=vmem, size = 0x4000, scoped, tag = 'input window, operand 3']
    #allocation4 [shape = 'u8[16384]{0}', space=vmem, size = 0x4000, scoped, tag = 'output window, operand 0']
    loop: start=0, step=1, limit=4
    $region2: #{net_head17_forward.25} parent=1 // loop_pre_header
      _
    $region3: #{net_head17_forward.25} parent=1 // loop_header
      %s10 = sphi 0, %s14
      %p11 = scmp.ge.s32.totalorder %s10, 4
      %s18 = sphi 0, %s18
      %s20 = sphi 0, %s18
      %s21 = sphi 0, %s20
      %s35 = sphi 0, %s21
      %s41 = sphi 0, %s43
      %s44 = sphi 0, %s41
      %s45 = sphi 0, %s44
      %s61 = sphi 0, %s45
      %s65 = sphi 0, %s65
      %s67 = sphi 0, %s65
      %s68 = sphi 0, %s67
      %s82 = sphi 0, %s68
      %s88 = sphi 0, %s90
      %s91 = sphi 0, %s88
      %s92 = sphi 0, %s91
      %s108 = sphi 0, %s92
      %s114 = sphi 0, %s116
      %s117 = sphi 0, %s114
      %s118 = sphi 0, %s117
      %s134 = sphi 0, %s118
    $region4: #{net_head17_forward.25} parent=1 // loop_header_branch
      %13 = sbr.rel (%p11) target = $region8
    $region5: #{net_head17_forward.25} parent=1 // loop_body
      %s15 = ssub.s32 %s10, 1
      %s16 = ssub.s32 %s10, 2
      %s17 = sadd.s32 %s10, 1
      %s19 = sadd.s32 %s18, 1
      %p22 = scmp.eq.s32.totalorder %s10, 1
      %p23 = scmp.ne.s32.totalorder %s18, %s20
      %p24 = scmp.eq.s32.totalorder %s10, 0
      %p25 = por %p23, %p24
      %p26 = scmp.ne.s32.totalorder %s18, %s20
      %p27 = scmp.eq.s32.totalorder %s15, 1
      %p28 = por %p26, %p27
      %p29 = scmp.ne.s32.totalorder %s20, %s21
      %p30 = scmp.eq.s32.totalorder %s15, 0
      %p31 = por %p29, %p30
      %p32 = scmp.ne.s32.totalorder %s20, %s21
      %p33 = scmp.eq.s32.totalorder %s16, 1
      %p34 = por %p32, %p33
      %p36 = scmp.ne.s32.totalorder %s21, %s35
      %p37 = scmp.eq.s32.totalorder %s16, 0
      %p38 = por %p36, %p37
      %s39 = ssub.s32 %s10, %s17
      %p40 = scmp.eq.s32.totalorder %s39, 0
      %s42 = sadd.s32 %s41, 1
      %s43 = scalar_select %p40, %s41, %s42
      %p46 = pneg %p40
      %p47 = scmp.eq.s32.totalorder %s10, 1
      %p48 = por %p46, %p47
      %p49 = scmp.ne.s32.totalorder %s41, %s44
      %p50 = scmp.eq.s32.totalorder %s10, 0
      %p51 = por %p49, %p50
      %p52 = scmp.ne.s32.totalorder %s41, %s44
      %p53 = scmp.eq.s32.totalorder %s15, 1
      %p54 = por %p52, %p53
      %p55 = scmp.ne.s32.totalorder %s44, %s45
      %p56 = scmp.eq.s32.totalorder %s15, 0
      %p57 = por %p55, %p56
      %p58 = scmp.ne.s32.totalorder %s44, %s45
      %p59 = scmp.eq.s32.totalorder %s16, 1
      %p60 = por %p58, %p59
      %p62 = scmp.ne.s32.totalorder %s45, %s61
      %p63 = scmp.eq.s32.totalorder %s16, 0
      %p64 = por %p62, %p63
      %s66 = sadd.s32 %s65, 1
      %p69 = scmp.eq.s32.totalorder %s10, 1
      %p70 = scmp.ne.s32.totalorder %s65, %s67
      %p71 = scmp.eq.s32.totalorder %s10, 0
      %p72 = por %p70, %p71
      %p73 = scmp.ne.s32.totalorder %s65, %s67
      %p74 = scmp.eq.s32.totalorder %s15, 1
      %p75 = por %p73, %p74
      %p76 = scmp.ne.s32.totalorder %s67, %s68
      %p77 = scmp.eq.s32.totalorder %s15, 0
      %p78 = por %p76, %p77
      %p79 = scmp.ne.s32.totalorder %s67, %s68
      %p80 = scmp.eq.s32.totalorder %s16, 1
      %p81 = por %p79, %p80
      %p83 = scmp.ne.s32.totalorder %s68, %s82
      %p84 = scmp.eq.s32.totalorder %s16, 0
      %p85 = por %p83, %p84
      %s86 = ssub.s32 %s10, %s17
      %p87 = scmp.eq.s32.totalorder %s86, 0
      %s89 = sadd.s32 %s88, 1
      %s90 = scalar_select %p87, %s88, %s89
      %p93 = pneg %p87
      %p94 = scmp.eq.s32.totalorder %s10, 1
      %p95 = por %p93, %p94
      %p96 = scmp.ne.s32.totalorder %s88, %s91
      %p97 = scmp.eq.s32.totalorder %s10, 0
      %p98 = por %p96, %p97
      %p99 = scmp.ne.s32.totalorder %s88, %s91
      %p100 = scmp.eq.s32.totalorder %s15, 1
      %p101 = por %p99, %p100
      %p102 = scmp.ne.s32.totalorder %s91, %s92
      %p103 = scmp.eq.s32.totalorder %s15, 0
      %p104 = por %p102, %p103
      %p105 = scmp.ne.s32.totalorder %s91, %s92
      %p106 = scmp.eq.s32.totalorder %s16, 1
      %p107 = por %p105, %p106
      %p109 = scmp.ne.s32.totalorder %s92, %s108
      %p110 = scmp.eq.s32.totalorder %s16, 0
      %p111 = por %p109, %p110
      %s112 = ssub.s32 %s10, %s17
      %p113 = scmp.eq.s32.totalorder %s112, 0
      %s115 = sadd.s32 %s114, 1
      %s116 = scalar_select %p113, %s114, %s115
      %p119 = pneg %p113
      %p120 = scmp.eq.s32.totalorder %s10, 1
      %p121 = por %p119, %p120
      %p122 = scmp.ne.s32.totalorder %s114, %s117
      %p123 = scmp.eq.s32.totalorder %s10, 0
      %p124 = por %p122, %p123
      %p125 = scmp.ne.s32.totalorder %s114, %s117
      %p126 = scmp.eq.s32.totalorder %s15, 1
      %p127 = por %p125, %p126
      %p128 = scmp.ne.s32.totalorder %s117, %s118
      %p129 = scmp.eq.s32.totalorder %s15, 0
      %p130 = por %p128, %p129
      %p131 = scmp.ne.s32.totalorder %s117, %s118
      %p132 = scmp.eq.s32.totalorder %s16, 1
      %p133 = por %p131, %p132
      %p135 = scmp.ne.s32.totalorder %s118, %s134
      %p136 = scmp.eq.s32.totalorder %s16, 0
      %p137 = por %p135, %p136
      %p138 = scmp.le.s32.totalorder 1, %s10
      %p139 = scmp.lt.s32.totalorder %s10, 3
      %p140 = pnand %p138, %p139
      %p141 = pneg %p140
      // Predicated region
      $region9: #{net_head17_forward.25} parent=5 // pred_check
        _
      $region10: #{net_head17_forward.25} parent=5 // pred_check_branch
        %143 = sbr.rel (%p140) target = $region12
      $region11: #{net_head17_forward.25} parent=5 // pred_region
        %s144 = ssub.s32 %s10, 1
        // Predicated region
        $region13: #{net_head17_forward.25} parent=11 // pred_check
          %p145 = pneg %p31
        $region14: #{net_head17_forward.25} parent=11 // pred_check_branch
          %147 = sbr.rel (%p145) target = $region16
        $region15: #{net_head17_forward.25} parent=11 // pred_region
          _
        $region16: #{net_head17_forward.25} parent=11 // pred_fallthru
          _
        // Predicated region
        $region17: #{net_head17_forward.25} parent=11 // pred_check
          %p148 = pneg %p78
        $region18: #{net_head17_forward.25} parent=11 // pred_check_branch
          %150 = sbr.rel (%p148) target = $region20
        $region19: #{net_head17_forward.25} parent=11 // pred_region
          _
        $region20: #{net_head17_forward.25} parent=11 // pred_fallthru
          _
      $region12: #{net_head17_forward.25} parent=5 // pred_fallthru
        _
      %p151 = scmp.lt.s32.totalorder %s10, 2
      // Predicated region
      $region21: #{net_head17_forward.25} parent=5 // pred_check
        %p152 = pneg %p151
      $region22: #{net_head17_forward.25} parent=5 // pred_check_branch
        %154 = sbr.rel (%p152) target = $region24
      $region23: #{net_head17_forward.25} parent=5 // pred_region
        // Predicated region
        $region25: #{net_head17_forward.25} parent=23 // pred_check
          %p155 = pneg %p51
        $region26: #{net_head17_forward.25} parent=23 // pred_check_branch
          %157 = sbr.rel (%p155) target = $region28
        $region27: #{net_head17_forward.25} parent=23 // pred_region
          %s158 = sand.u32 %s41, 1
          %s159 = sand.u32 %s41, 1
          %s160 = smul.addr %s159, 144
          %s161 = scalar_lea.vmem [#allocation2], %s160
          %s162 = smul.u32 2, %s10
          %s163 = smul.addr %s162, 4
          %s164 = scalar_lea.vmem %s1, %s163
          // Predicated region
          $region29: #{net_head17_forward.25} parent=27 // pred_check
            _
          $region30: #{net_head17_forward.25} parent=27 // pred_check_branch
            %166 = sbr.rel (0) target = $region32
          $region31: #{net_head17_forward.25} parent=27 // pred_region
            // Predicated region
            $region33: #{net_head17_forward.25} parent=31 // pred_check
              _
            $region34: #{net_head17_forward.25} parent=31 // pred_check_branch
              %168 = sbr.rel (0) target = $region36
            $region35: #{net_head17_forward.25} parent=31 // pred_region
              // Predicated region
              $region48: #{net_head17_forward.25} parent=35 // pred_check
                _
              $region49: #{net_head17_forward.25} parent=35 // pred_check_branch
                %218 = sbr.rel (0) target = $region51
              $region50: #{net_head17_forward.25} parent=35 // pred_region
                loop: start=0, step=1, limit=1
                $region52: #{net_head17_forward.25} parent=50 // loop_pre_header
                  _
                $region53: #{net_head17_forward.25} parent=50 // loop_header
                  %s220 = sphi 0, %s224
                  %p221 = scmp.ge.s32.totalorder %s220, 1
                  %s225 = sphi %s164, %s164
                  %s226 = sphi %s161, %s161
                $region54: #{net_head17_forward.25} parent=50 // loop_header_branch
                  %223 = sbr.rel (%p221) target = $region58
                $region55: #{net_head17_forward.25} parent=50 // loop_body
                  %v227 = vld [vmem:[%s225] sm:$0xff]
                  %228 = vst [vmem:[%s226] sm:$0xff] %v227
                  %v229 = vld [vmem:[%s225 + $0x10] sm:$0xff]
                  %230 = vst [vmem:[%s226 + $0x8] sm:$0xff] %v229
                  %v231 = vld [vmem:[%s225 + $0x20] sm:$0xff]
                  %232 = vst [vmem:[%s226 + $0x10] sm:$0xff] %v231
                  %v233 = vld [vmem:[%s225 + $0x30] sm:$0xff]
                  %234 = vst [vmem:[%s226 + $0x18] sm:$0xff] %v233
                  %v235 = vld [vmem:[%s225 + $0x40] sm:$0xff]
                  %236 = vst [vmem:[%s226 + $0x20] sm:$0xff] %v235
                  %v237 = vld [vmem:[%s225 + $0x50] sm:$0xff]
                  %238 = vst [vmem:[%s226 + $0x28] sm:$0xff] %v237
                  %v239 = vld [vmem:[%s225 + $0x60] sm:$0xff]
                  %240 = vst [vmem:[%s226 + $0x30] sm:$0xff] %v239
                  %v241 = vld [vmem:[%s225 + $0x70] sm:$0xff]
                  %242 = vst [vmem:[%s226 + $0x38] sm:$0xff] %v241
                  %v243 = vld [vmem:[%s225 + $0x80] sm:$0xff]
                  %244 = vst [vmem:[%s226 + $0x40] sm:$0xff] %v243
                  %v245 = vld [vmem:[%s225 + $0x90] sm:$0xff]
                  %246 = vst [vmem:[%s226 + $0x48] sm:$0xff] %v245
                  %v247 = vld [vmem:[%s225 + $0xa0] sm:$0xff]
                  %248 = vst [vmem:[%s226 + $0x50] sm:$0xff] %v247
                  %v249 = vld [vmem:[%s225 + $0xb0] sm:$0xff]
                  %250 = vst [vmem:[%s226 + $0x58] sm:$0xff] %v249
                  %v251 = vld [vmem:[%s225 + $0xc0] sm:$0xff]
                  %252 = vst [vmem:[%s226 + $0x60] sm:$0xff] %v251
                  %v253 = vld [vmem:[%s225 + $0xd0] sm:$0xff]
                  %254 = vst [vmem:[%s226 + $0x68] sm:$0xff] %v253
                  %v255 = vld [vmem:[%s225 + $0xe0] sm:$0xff]
                  %256 = vst [vmem:[%s226 + $0x70] sm:$0xff] %v255
                  %v257 = vld [vmem:[%s225 + $0xf0] sm:$0xff]
                  %258 = vst [vmem:[%s226 + $0x78] sm:$0xff] %v257
                  %v259 = vld [vmem:[%s225 + $0x100] sm:$0xff]
                  %260 = vst [vmem:[%s226 + $0x80] sm:$0xff] %v259
                  %v261 = vld [vmem:[%s225 + $0x110] sm:$0xff]
                  %262 = vst [vmem:[%s226 + $0x88] sm:$0xff] %v261
                $region56: #{net_head17_forward.25} parent=50 // loop_footer
                  %s224 = sadd.s32 1, %s220
                $region57: #{net_head17_forward.25} parent=50 // loop_footer_branch
                  %219 = sbr.rel target = $region53
                $region58: #{net_head17_forward.25} parent=50 // loop_exit
                  _
              $region51: #{net_head17_forward.25} parent=35 // pred_fallthru
                _
              // Predicated region
              $region59: #{net_head17_forward.25} parent=35 // pred_check
                _
              $region60: #{net_head17_forward.25} parent=35 // pred_check_branch
                %264 = sbr.rel target = $region62
              $region61: #{net_head17_forward.25} parent=35 // pred_region
                _
              $region62: #{net_head17_forward.25} parent=35 // pred_fallthru
                _
            $region36: #{net_head17_forward.25} parent=31 // pred_fallthru
              _
            // Predicated region
            $region37: #{net_head17_forward.25} parent=31 // pred_check
              _
            $region38: #{net_head17_forward.25} parent=31 // pred_check_branch
              %170 = sbr.rel target = $region40
            $region39: #{net_head17_forward.25} parent=31 // pred_region
              %s172 = ssub.s32 256, 1
              loop: start=0, step=1, limit=1
              $region41: #{net_head17_forward.25} parent=39 // loop_pre_header
                _
              $region42: #{net_head17_forward.25} parent=39 // loop_header
                %s174 = sphi 0, %s178
                %p175 = scmp.ge.s32.totalorder %s174, 1
                %s179 = sphi %s164, %s164
                %s180 = sphi %s161, %s161
              $region43: #{net_head17_forward.25} parent=39 // loop_header_branch
                %177 = sbr.rel (%p175) target = $region47
              $region44: #{net_head17_forward.25} parent=39 // loop_body
                %v181 = vld [vmem:[%s179] sm:%s172]
                %182 = vst [vmem:[%s180] sm:%s172] %v181
                %v183 = vld [vmem:[%s179 + $0x10] sm:%s172]
                %184 = vst [vmem:[%s180 + $0x8] sm:%s172] %v183
                %v185 = vld [vmem:[%s179 + $0x20] sm:%s172]
                %186 = vst [vmem:[%s180 + $0x10] sm:%s172] %v185
                %v187 = vld [vmem:[%s179 + $0x30] sm:%s172]
                %188 = vst [vmem:[%s180 + $0x18] sm:%s172] %v187
                %v189 = vld [vmem:[%s179 + $0x40] sm:%s172]
                %190 = vst [vmem:[%s180 + $0x20] sm:%s172] %v189
                %v191 = vld [vmem:[%s179 + $0x50] sm:%s172]
                %192 = vst [vmem:[%s180 + $0x28] sm:%s172] %v191
                %v193 = vld [vmem:[%s179 + $0x60] sm:%s172]
                %194 = vst [vmem:[%s180 + $0x30] sm:%s172] %v193
                %v195 = vld [vmem:[%s179 + $0x70] sm:%s172]
                %196 = vst [vmem:[%s180 + $0x38] sm:%s172] %v195
                %v197 = vld [vmem:[%s179 + $0x80] sm:%s172]
                %198 = vst [vmem:[%s180 + $0x40] sm:%s172] %v197
                %v199 = vld [vmem:[%s179 + $0x90] sm:%s172]
                %200 = vst [vmem:[%s180 + $0x48] sm:%s172] %v199
                %v201 = vld [vmem:[%s179 + $0xa0] sm:%s172]
                %202 = vst [vmem:[%s180 + $0x50] sm:%s172] %v201
                %v203 = vld [vmem:[%s179 + $0xb0] sm:%s172]
                %204 = vst [vmem:[%s180 + $0x58] sm:%s172] %v203
                %v205 = vld [vmem:[%s179 + $0xc0] sm:%s172]
                %206 = vst [vmem:[%s180 + $0x60] sm:%s172] %v205
                %v207 = vld [vmem:[%s179 + $0xd0] sm:%s172]
                %208 = vst [vmem:[%s180 + $0x68] sm:%s172] %v207
                %v209 = vld [vmem:[%s179 + $0xe0] sm:%s172]
                %210 = vst [vmem:[%s180 + $0x70] sm:%s172] %v209
                %v211 = vld [vmem:[%s179 + $0xf0] sm:%s172]
                %212 = vst [vmem:[%s180 + $0x78] sm:%s172] %v211
                %v213 = vld [vmem:[%s179 + $0x100] sm:%s172]
                %214 = vst [vmem:[%s180 + $0x80] sm:%s172] %v213
                %v215 = vld [vmem:[%s179 + $0x110] sm:%s172]
                %216 = vst [vmem:[%s180 + $0x88] sm:%s172] %v215
              $region45: #{net_head17_forward.25} parent=39 // loop_footer
                %s178 = sadd.s32 1, %s174
              $region46: #{net_head17_forward.25} parent=39 // loop_footer_branch
                %173 = sbr.rel target = $region42
              $region47: #{net_head17_forward.25} parent=39 // loop_exit
                _
            $region40: #{net_head17_forward.25} parent=31 // pred_fallthru
              _
          $region32: #{net_head17_forward.25} parent=27 // pred_fallthru
            _
          %265 = vnop
        $region28: #{net_head17_forward.25} parent=23 // pred_fallthru
          _
        // Predicated region
        $region63: #{net_head17_forward.25} parent=23 // pred_check
          %p266 = pneg %p98
        $region64: #{net_head17_forward.25} parent=23 // pred_check_branch
          %268 = sbr.rel (%p266) target = $region66
        $region65: #{net_head17_forward.25} parent=23 // pred_region
          %s269 = sand.u32 %s88, 1
          %s270 = sand.u32 %s88, 1
          %s271 = smul.addr %s270, 16
          %s272 = scalar_lea.vmem [#allocation3], %s271
          %s273 = smul.u32 2, %s10
          %s274 = smul.addr %s273, 4
          %s275 = scalar_lea.vmem %s3, %s274
          // Predicated region
          $region67: #{net_head17_forward.25} parent=65 // pred_check
            _
          $region68: #{net_head17_forward.25} parent=65 // pred_check_branch
            %277 = sbr.rel (0) target = $region70
          $region69: #{net_head17_forward.25} parent=65 // pred_region
            // Predicated region
            $region71: #{net_head17_forward.25} parent=69 // pred_check
              _
            $region72: #{net_head17_forward.25} parent=69 // pred_check_branch
              %279 = sbr.rel (0) target = $region74
            $region73: #{net_head17_forward.25} parent=69 // pred_region
              // Predicated region
              $region86: #{net_head17_forward.25} parent=73 // pred_check
                _
              $region87: #{net_head17_forward.25} parent=73 // pred_check_branch
                %297 = sbr.rel (0) target = $region89
              $region88: #{net_head17_forward.25} parent=73 // pred_region
                loop: start=0, step=1, limit=1
                $region90: #{net_head17_forward.25} parent=88 // loop_pre_header
                  _
                $region91: #{net_head17_forward.25} parent=88 // loop_header
                  %s299 = sphi 0, %s303
                  %p300 = scmp.ge.s32.totalorder %s299, 1
                  %s304 = sphi %s275, %s275
                  %s305 = sphi %s272, %s272
                $region92: #{net_head17_forward.25} parent=88 // loop_header_branch
                  %302 = sbr.rel (%p300) target = $region96
                $region93: #{net_head17_forward.25} parent=88 // loop_body
                  %v306 = vld [vmem:[%s304] sm:$0xff]
                  %307 = vst [vmem:[%s305] sm:$0xff] %v306
                  %v308 = vld [vmem:[%s304 + $0x10] sm:$0xff]
                  %309 = vst [vmem:[%s305 + $0x8] sm:$0xff] %v308
                $region94: #{net_head17_forward.25} parent=88 // loop_footer
                  %s303 = sadd.s32 1, %s299
                $region95: #{net_head17_forward.25} parent=88 // loop_footer_branch
                  %298 = sbr.rel target = $region91
                $region96: #{net_head17_forward.25} parent=88 // loop_exit
                  _
              $region89: #{net_head17_forward.25} parent=73 // pred_fallthru
                _
              // Predicated region
              $region97: #{net_head17_forward.25} parent=73 // pred_check
                _
              $region98: #{net_head17_forward.25} parent=73 // pred_check_branch
                %311 = sbr.rel target = $region100
              $region99: #{net_head17_forward.25} parent=73 // pred_region
                _
              $region100: #{net_head17_forward.25} parent=73 // pred_fallthru
                _
            $region74: #{net_head17_forward.25} parent=69 // pred_fallthru
              _
            // Predicated region
            $region75: #{net_head17_forward.25} parent=69 // pred_check
              _
            $region76: #{net_head17_forward.25} parent=69 // pred_check_branch
              %281 = sbr.rel target = $region78
            $region77: #{net_head17_forward.25} parent=69 // pred_region
              %s283 = ssub.s32 256, 1
              loop: start=0, step=1, limit=1
              $region79: #{net_head17_forward.25} parent=77 // loop_pre_header
                _
              $region80: #{net_head17_forward.25} parent=77 // loop_header
                %s285 = sphi 0, %s289
                %p286 = scmp.ge.s32.totalorder %s285, 1
                %s290 = sphi %s275, %s275
                %s291 = sphi %s272, %s272
              $region81: #{net_head17_forward.25} parent=77 // loop_header_branch
                %288 = sbr.rel (%p286) target = $region85
              $region82: #{net_head17_forward.25} parent=77 // loop_body
                %v292 = vld [vmem:[%s290] sm:%s283]
                %293 = vst [vmem:[%s291] sm:%s283] %v292
                %v294 = vld [vmem:[%s290 + $0x10] sm:%s283]
                %295 = vst [vmem:[%s291 + $0x8] sm:%s283] %v294
              $region83: #{net_head17_forward.25} parent=77 // loop_footer
                %s289 = sadd.s32 1, %s285
              $region84: #{net_head17_forward.25} parent=77 // loop_footer_branch
                %284 = sbr.rel target = $region80
              $region85: #{net_head17_forward.25} parent=77 // loop_exit
                _
            $region78: #{net_head17_forward.25} parent=69 // pred_fallthru
              _
          $region70: #{net_head17_forward.25} parent=65 // pred_fallthru
            _
          %312 = vnop
        $region66: #{net_head17_forward.25} parent=23 // pred_fallthru
          _
      $region24: #{net_head17_forward.25} parent=5 // pred_fallthru
        _
      %p313 = scmp.le.s32.totalorder 1, %s10
      %p314 = scmp.lt.s32.totalorder %s10, 3
      %p315 = pnand %p313, %p314
      %p316 = pneg %p315
      // Predicated region
      $region101: #{net_head17_forward.25} parent=5 // pred_check
        _
      $region102: #{net_head17_forward.25} parent=5 // pred_check_branch
        %318 = sbr.rel (%p315) target = $region104
      $region103: #{net_head17_forward.25} parent=5 // pred_region
        %s319 = ssub.s32 %s10, 1
        %s320 = sand.u32 %s44, 1
        %s321 = sand.u32 %s44, 1
        %s322 = smul.addr %s321, 144
        %s323 = scalar_lea.vmem [#allocation2], %s322
        // Predicated region
        $region105: #{net_head17_forward.25} parent=103 // pred_check
          %p324 = pneg %p57
        $region106: #{net_head17_forward.25} parent=103 // pred_check_branch
          %326 = sbr.rel (%p324) target = $region108
        $region107: #{net_head17_forward.25} parent=103 // pred_region
          _
        $region108: #{net_head17_forward.25} parent=103 // pred_fallthru
          _
        %s327 = sand.u32 %s91, 1
        %s328 = sand.u32 %s91, 1
        %s329 = smul.addr %s328, 16
        %s330 = scalar_lea.vmem [#allocation3], %s329
        // Predicated region
        $region109: #{net_head17_forward.25} parent=103 // pred_check
          %p331 = pneg %p104
        $region110: #{net_head17_forward.25} parent=103 // pred_check_branch
          %333 = sbr.rel (%p331) target = $region112
        $region111: #{net_head17_forward.25} parent=103 // pred_region
          _
        $region112: #{net_head17_forward.25} parent=103 // pred_fallthru
          _
        %p334 = pneg %p31
        %p335 = pneg %p28
        %s336 = sand.u32 %s44, 1
        %s337 = sand.u32 %s44, 1
        %s338 = smul.addr %s337, 144
        %s339 = scalar_lea.vmem [#allocation2], %s338
        %p340 = pneg %p57
        %p341 = pneg %p54
        %p342 = pneg %p78
        %p343 = pneg %p75
        %s344 = sand.u32 %s91, 1
        %s345 = sand.u32 %s91, 1
        %s346 = smul.addr %s345, 16
        %s347 = scalar_lea.vmem [#allocation3], %s346
        %p348 = pneg %p104
        %p349 = pneg %p101
        %p350 = pneg %p130
        %p351 = pneg %p127
        %s352 = sand.u32 %s117, 1
        %s353 = sand.u32 %s117, 1
        %s354 = smul.addr %s353, 16
        %s355 = scalar_lea.vmem [#allocation4], %s354
        %s356 = smul.u32 2, %s15
        %s357 = smul.u32 2, %s15
        %s358 = smul.u32 2, %s15
        %v360 = vld [vmem:[%s0] sm:$0xff]
        %v361 = vld [vmem:[%s0 + $0x8] sm:$0xff]
        %v362 = vld [vmem:[%s323] sm:$0xff]
        %v363 = vld [vmem:[%s323 + $0x8] sm:$0xff]
        %v364 = vld [vmem:[%s323 + $0x10] sm:$0xff]
        %v365 = vld [vmem:[%s323 + $0x18] sm:$0xff]
        %v366 = vld [vmem:[%s323 + $0x20] sm:$0xff]
        %v367 = vld [vmem:[%s323 + $0x28] sm:$0xff]
        %v368 = vld [vmem:[%s323 + $0x30] sm:$0xff]
        %v369 = vld [vmem:[%s323 + $0x38] sm:$0xff]
        %v370 = vld [vmem:[%s323 + $0x40] sm:$0xff]
        %v371 = vld [vmem:[%s323 + $0x48] sm:$0xff]
        %v372 = vld [vmem:[%s323 + $0x50] sm:$0xff]
        %v373 = vld [vmem:[%s323 + $0x58] sm:$0xff]
        %v374 = vld [vmem:[%s323 + $0x60] sm:$0xff]
        %v375 = vld [vmem:[%s323 + $0x68] sm:$0xff]
        %v376 = vld [vmem:[%s323 + $0x70] sm:$0xff]
        %v377 = vld [vmem:[%s323 + $0x78] sm:$0xff]
        %v378 = vld [vmem:[%s323 + $0x80] sm:$0xff]
        %v379 = vld [vmem:[%s323 + $0x88] sm:$0xff]
        %v380 = vld [vmem:[%s2] sm:$0xff]
        %v381 = vld [vmem:[%s2 + $0x8] sm:$0xff]
        %383 = vset.pattern.permute.xlu0 0
        %384 = vperm.xlu0 %383, %v380
        %v385 = vpop.permute.xlu0 %384
        %388 = vset.pattern.permute.xlu0 0
        %389 = vperm.xlu0 %388, %v381
        %v390 = vpop.permute.xlu0 %389
        %v394 = vunpack.c.l.b16 %v360
        %v395 = vunpack.c.h.b16 %v360
        %v396 = vunpack.c.l.b16 %v361
        %v397 = vunpack.c.h.b16 %v361
        %v398 = vpack.c.b16 %v396, %v394
        %v399 = vpack.c.b16 %v397, %v395
        %v419 = vunpack.c.l.b16 %v362
        %v420 = vunpack.c.h.b16 %v362
        %v421 = vunpack.c.l.b16 %v363
        %v422 = vunpack.c.h.b16 %v363
        %v423 = vunpack.c.l.b16 %v364
        %v424 = vunpack.c.h.b16 %v364
        %v425 = vunpack.c.l.b16 %v365
        %v426 = vunpack.c.h.b16 %v365
        %v427 = vunpack.c.l.b16 %v366
        %v428 = vunpack.c.h.b16 %v366
        %v429 = vunpack.c.l.b16 %v367
        %v430 = vunpack.c.h.b16 %v367
        %v431 = vunpack.c.l.b16 %v368
        %v432 = vunpack.c.h.b16 %v368
        %v433 = vunpack.c.l.b16 %v369
        %v434 = vunpack.c.h.b16 %v369
        %v435 = vunpack.c.l.b16 %v370
        %v436 = vunpack.c.h.b16 %v370
        %v437 = vunpack.c.l.b16 %v371
        %v438 = vunpack.c.h.b16 %v371
        %v439 = vunpack.c.l.b16 %v372
        %v440 = vunpack.c.h.b16 %v372
        %v441 = vunpack.c.l.b16 %v373
        %v442 = vunpack.c.h.b16 %v373
        %v443 = vunpack.c.l.b16 %v374
        %v444 = vunpack.c.h.b16 %v374
        %v445 = vunpack.c.l.b16 %v375
        %v446 = vunpack.c.h.b16 %v375
        %v447 = vunpack.c.l.b16 %v376
        %v448 = vunpack.c.h.b16 %v376
        %v449 = vunpack.c.l.b16 %v377
        %v450 = vunpack.c.h.b16 %v377
        %v451 = vunpack.c.l.b16 %v378
        %v452 = vunpack.c.h.b16 %v378
        %v453 = vunpack.c.l.b16 %v379
        %v454 = vunpack.c.h.b16 %v379
        %v455 = vpack.c.b16 %v421, %v419
        %v456 = vpack.c.b16 %v422, %v420
        %v457 = vpack.c.b16 %v425, %v423
        %v458 = vpack.c.b16 %v426, %v424
        %v459 = vpack.c.b16 %v429, %v427
        %v460 = vpack.c.b16 %v430, %v428
        %v461 = vpack.c.b16 %v433, %v431
        %v462 = vpack.c.b16 %v434, %v432
        %v463 = vpack.c.b16 %v437, %v435
        %v464 = vpack.c.b16 %v438, %v436
        %v465 = vpack.c.b16 %v441, %v439
        %v466 = vpack.c.b16 %v442, %v440
        %v467 = vpack.c.b16 %v445, %v443
        %v468 = vpack.c.b16 %v446, %v444
        %v469 = vpack.c.b16 %v449, %v447
        %v470 = vpack.c.b16 %v450, %v448
        %v471 = vpack.c.b16 %v453, %v451
        %v472 = vpack.c.b16 %v454, %v452
        %vm491 = vcmask 130048
        %v493 = vsel %vm491, %v399, 0
        %495 = vmatprep.subr.bf16.mxu0 %v470
        %496 = vmatpush1.bf16.msra.mxu0 %v469
        %497 = vmatprep.subr.bf16.mxu0 %v468
        %498 = vmatpush1.bf16.msra.mxu0 %v467
        %499 = vmatprep.subr.bf16.mxu0 %v466
        %500 = vmatpush1.bf16.msra.mxu0 %v465
        %501 = vmatprep.subr.bf16.mxu0 %v464
        %502 = vmatpush1.bf16.msra.mxu0 %v463
        %503 = vmatprep.subr.bf16.mxu0 %v462
        %504 = vmatpush1.bf16.msra.mxu0 %v461
        %505 = vmatprep.subr.bf16.mxu0 %v460
        %506 = vmatpush1.bf16.msra.mxu0 %v459
        %507 = vmatprep.subr.bf16.mxu0 %v458
        %508 = vmatpush1.bf16.msra.mxu0 %v457
        %509 = vmatprep.subr.bf16.mxu0 %v456
        %510 = vmatpush1.bf16.msra.mxu0 %v455
        %511 = vmatprep.subr.bf16.mxu0 0
        %512 = vmatpush2.bf16.msra.mxu0 0
        %513 = vmatprep.subr.bf16.mxu0 0
        %514 = vmatpush2.bf16.msra.mxu0 0
        %515 = vmatprep.subr.bf16.mxu0 0
        %516 = vmatpush2.bf16.msra.mxu0 0
        %517 = vmatprep.subr.bf16.mxu0 0
        %518 = vmatpush2.bf16.msra.mxu0 0
        %519 = vmatprep.subr.bf16.mxu0 0
        %520 = vmatpush2.bf16.msra.mxu0 0
        %521 = vmatprep.subr.bf16.mxu0 0
        %522 = vmatpush2.bf16.msra.mxu0 0
        %523 = vmatprep.subr.bf16.mxu0 0
        %524 = vmatpush2.bf16.msra.mxu0 0
        %525 = vmatprep.subr.bf16.mxu0 %v472
        %526 = vmatpush2.bf16.msra.mxu0 %v471
        %527 = vmatprep.mubr.bf16.mxu0 %v493
        %528 = vmatmul.mubr.bf16.gmra.mxu0 %v398
        %v529 = vpop.f32.mrf.mxu0
        %v530 = vadd.f32 %v385, %v529
        %v531 = vpop.f32.mrf.mxu0
        %v532 = vadd.f32 %v385, %v531
        %v533 = vpop.f32.mrf.mxu0
        %v534 = vadd.f32 %v390, %v533
        %v535 = vpop.f32.mrf.mxu0
        %v536 = vadd.f32 %v390, %v535
        %537 = vdwg.mxu0
        %v538 = vld [vmem:[%s330] sm:$0xff]
        %v539 = vld [vmem:[%s330 + $0x8] sm:$0xff]
        %v540 = vunpack.c.l.bf16 %v538
        %v541 = vunpack.c.h.bf16 %v538
        %v542 = vunpack.c.l.bf16 %v539
        %v543 = vunpack.c.h.bf16 %v539
        %v544 = vadd.f32 %v530, %v540
        %v545 = vadd.f32 %v532, %v541
        %v546 = vadd.f32 %v534, %v542
        %v547 = vadd.f32 %v536, %v543
        %v548 = vmax.f32 %v544, 0.0
        %v549 = vmax.f32 %v545, 0.0
        %v550 = vmax.f32 %v546, 0.0
        %v551 = vmax.f32 %v547, 0.0
        %v552 = vpack.c.bf16 %v550, %v548
        %v553 = vpack.c.bf16 %v551, %v549
        %v556 = vunpack.c.l.b16 %v552
        %v557 = vunpack.c.l.b16 %v553
        %v558 = vunpack.c.h.b16 %v552
        %v559 = vunpack.c.h.b16 %v553
        %v560 = vpack.c.b16 %v557, %v556
        %v561 = vpack.c.b16 %v559, %v558
        %564 = vst [vmem:[%s355] sm:$0xff] %v560
        %565 = vst [vmem:[%s355 + $0x8] sm:$0xff] %v561
        %s566 = sand.u32 %s117, 1
        %s567 = sand.u32 %s117, 1
        %s568 = smul.addr %s567, 16
        %s569 = scalar_lea.vmem [#allocation4], %s568
        // Predicated region
        $region113: #{net_head17_forward.25} parent=103 // pred_check
          %p570 = pneg %p127
        $region114: #{net_head17_forward.25} parent=103 // pred_check_branch
          %572 = sbr.rel (%p570) target = $region116
        $region115: #{net_head17_forward.25} parent=103 // pred_region
          %s573 = smul.u32 2, %s15
          %s574 = smul.addr %s573, 4
          %s575 = scalar_lea.vmem %s4, %s574
          // Predicated region
          $region117: #{net_head17_forward.25} parent=115 // pred_check
            _
          $region118: #{net_head17_forward.25} parent=115 // pred_check_branch
            %577 = sbr.rel (0) target = $region120
          $region119: #{net_head17_forward.25} parent=115 // pred_region
            // Predicated region
            $region121: #{net_head17_forward.25} parent=119 // pred_check
              _
            $region122: #{net_head17_forward.25} parent=119 // pred_check_branch
              %579 = sbr.rel (0) target = $region124
            $region123: #{net_head17_forward.25} parent=119 // pred_region
              // Predicated region
              $region136: #{net_head17_forward.25} parent=123 // pred_check
                _
              $region137: #{net_head17_forward.25} parent=123 // pred_check_branch
                %597 = sbr.rel (0) target = $region139
              $region138: #{net_head17_forward.25} parent=123 // pred_region
                loop: start=0, step=1, limit=1
                $region140: #{net_head17_forward.25} parent=138 // loop_pre_header
                  _
                $region141: #{net_head17_forward.25} parent=138 // loop_header
                  %s599 = sphi 0, %s603
                  %p600 = scmp.ge.s32.totalorder %s599, 1
                  %s604 = sphi %s569, %s569
                  %s605 = sphi %s575, %s575
                $region142: #{net_head17_forward.25} parent=138 // loop_header_branch
                  %602 = sbr.rel (%p600) target = $region146
                $region143: #{net_head17_forward.25} parent=138 // loop_body
                  %v606 = vld [vmem:[%s604] sm:$0xff]
                  %607 = vst [vmem:[%s605] sm:$0xff] %v606
                  %v608 = vld [vmem:[%s604 + $0x8] sm:$0xff]
                  %609 = vst [vmem:[%s605 + $0x10] sm:$0xff] %v608
                $region144: #{net_head17_forward.25} parent=138 // loop_footer
                  %s603 = sadd.s32 1, %s599
                $region145: #{net_head17_forward.25} parent=138 // loop_footer_branch
                  %598 = sbr.rel target = $region141
                $region146: #{net_head17_forward.25} parent=138 // loop_exit
                  _
              $region139: #{net_head17_forward.25} parent=123 // pred_fallthru
                _
              // Predicated region
              $region147: #{net_head17_forward.25} parent=123 // pred_check
                _
              $region148: #{net_head17_forward.25} parent=123 // pred_check_branch
                %611 = sbr.rel target = $region150
              $region149: #{net_head17_forward.25} parent=123 // pred_region
                _
              $region150: #{net_head17_forward.25} parent=123 // pred_fallthru
                _
            $region124: #{net_head17_forward.25} parent=119 // pred_fallthru
              _
            // Predicated region
            $region125: #{net_head17_forward.25} parent=119 // pred_check
              _
            $region126: #{net_head17_forward.25} parent=119 // pred_check_branch
              %581 = sbr.rel target = $region128
            $region127: #{net_head17_forward.25} parent=119 // pred_region
              %s583 = ssub.s32 256, 1
              loop: start=0, step=1, limit=1
              $region129: #{net_head17_forward.25} parent=127 // loop_pre_header
                _
              $region130: #{net_head17_forward.25} parent=127 // loop_header
                %s585 = sphi 0, %s589
                %p586 = scmp.ge.s32.totalorder %s585, 1
                %s590 = sphi %s569, %s569
                %s591 = sphi %s575, %s575
              $region131: #{net_head17_forward.25} parent=127 // loop_header_branch
                %588 = sbr.rel (%p586) target = $region135
              $region132: #{net_head17_forward.25} parent=127 // loop_body
                %v592 = vld [vmem:[%s590] sm:%s583]
                %593 = vst [vmem:[%s591] sm:%s583] %v592
                %v594 = vld [vmem:[%s590 + $0x8] sm:%s583]
                %595 = vst [vmem:[%s591 + $0x10] sm:%s583] %v594
              $region133: #{net_head17_forward.25} parent=127 // loop_footer
                %s589 = sadd.s32 1, %s585
              $region134: #{net_head17_forward.25} parent=127 // loop_footer_branch
                %584 = sbr.rel target = $region130
              $region135: #{net_head17_forward.25} parent=127 // loop_exit
                _
            $region128: #{net_head17_forward.25} parent=119 // pred_fallthru
              _
          $region120: #{net_head17_forward.25} parent=115 // pred_fallthru
            _
          %612 = vnop
        $region116: #{net_head17_forward.25} parent=103 // pred_fallthru
          _
      $region104: #{net_head17_forward.25} parent=5 // pred_fallthru
        _
      %p613 = scmp.le.s32.totalorder 2, %s10
      // Predicated region
      $region151: #{net_head17_forward.25} parent=5 // pred_check
        %p614 = pneg %p613
      $region152: #{net_head17_forward.25} parent=5 // pred_check_branch
        %616 = sbr.rel (%p614) target = $region154
      $region153: #{net_head17_forward.25} parent=5 // pred_region
        %s617 = ssub.s32 %s10, 2
        // Predicated region
        $region155: #{net_head17_forward.25} parent=153 // pred_check
          %p618 = pneg %p133
        $region156: #{net_head17_forward.25} parent=153 // pred_check_branch
          %620 = sbr.rel (%p618) target = $region158
        $region157: #{net_head17_forward.25} parent=153 // pred_region
          %s621 = sand.u32 %s118, 1
          %s622 = sand.u32 %s118, 1
          %s623 = smul.addr %s622, 16
          %s624 = scalar_lea.vmem [#allocation4], %s623
        $region158: #{net_head17_forward.25} parent=153 // pred_fallthru
          _
      $region154: #{net_head17_forward.25} parent=5 // pred_fallthru
        _
    $region6: #{net_head17_forward.25} parent=1 // loop_footer
      %s14 = sadd.s32 1, %s10
    $region7: #{net_head17_forward.25} parent=1 // loop_footer_branch
      %9 = sbr.rel target = $region3
    $region8: #{net_head17_forward.25} parent=1 // loop_exit
      _

// kernel: net_head17_forward.26
$region0: #{net_head17_forward.26}
  #allocation0 [shape = 'u32[]', space=smem, size = 0x4, offset = 0x4, fixed_abs, tag = 'smem constant byte address 0x4 - core index']
  #allocation1 [shape = 'u32[144,128]{1,0:T(1,128)}', space=vmem, size = 0x12000, scoped, tag = 'internal scratch']
  %s0 = inlined_call_operand.vmem [shape: bf16[16,144], index: 0, kind: input, shape index: {}]
  %s1 = inlined_call_operand.vmem [shape: bf16[144,512], index: 1, kind: input, shape index: {}]
  %s2 = inlined_call_operand.vmem [shape: f32[16,1], index: 2, kind: input, shape index: {}]
  %s3 = inlined_call_operand.vmem [shape: bf16[16,512], index: 3, kind: output, shape index: {}]
  %s4 = sld [smem:[#allocation0]]
  $region117: #{net_head17_forward.26} parent=0
    _
  %s6 = ssub.s32 1, %s4
  %s7 = scalar_select 0, %s6, %s4
  $region1: #{net_head17_forward.26} parent=0
    #allocation2 [shape = 'u8[147456]{0}', space=vmem, size = 0x24000, scoped, tag = 'input window, operand 1']
    #allocation3 [shape = 'u8[16384]{0}', space=vmem, size = 0x4000, scoped, tag = 'output window, operand 0']
    loop: start=0, step=1, limit=4
    $region2: #{net_head17_forward.26} parent=1 // loop_pre_header
      _
    $region3: #{net_head17_forward.26} parent=1 // loop_header
      %s9 = sphi 0, %s13
      %p10 = scmp.ge.s32.totalorder %s9, 4
      %s17 = sphi 0, %s17
      %s19 = sphi 0, %s17
      %s20 = sphi 0, %s19
      %s34 = sphi 0, %s20
      %s40 = sphi 0, %s42
      %s43 = sphi 0, %s40
      %s44 = sphi 0, %s43
      %s60 = sphi 0, %s44
      %s64 = sphi 0, %s64
      %s66 = sphi 0, %s64
      %s67 = sphi 0, %s66
      %s81 = sphi 0, %s67
      %s87 = sphi 0, %s89
      %s90 = sphi 0, %s87
      %s91 = sphi 0, %s90
      %s107 = sphi 0, %s91
    $region4: #{net_head17_forward.26} parent=1 // loop_header_branch
      %12 = sbr.rel (%p10) target = $region8
    $region5: #{net_head17_forward.26} parent=1 // loop_body
      %s14 = ssub.s32 %s9, 1
      %s15 = ssub.s32 %s9, 2
      %s16 = sadd.s32 %s9, 1
      %s18 = sadd.s32 %s17, 1
      %p21 = scmp.eq.s32.totalorder %s9, 1
      %p22 = scmp.ne.s32.totalorder %s17, %s19
      %p23 = scmp.eq.s32.totalorder %s9, 0
      %p24 = por %p22, %p23
      %p25 = scmp.ne.s32.totalorder %s17, %s19
      %p26 = scmp.eq.s32.totalorder %s14, 1
      %p27 = por %p25, %p26
      %p28 = scmp.ne.s32.totalorder %s19, %s20
      %p29 = scmp.eq.s32.totalorder %s14, 0
      %p30 = por %p28, %p29
      %p31 = scmp.ne.s32.totalorder %s19, %s20
      %p32 = scmp.eq.s32.totalorder %s15, 1
      %p33 = por %p31, %p32
      %p35 = scmp.ne.s32.totalorder %s20, %s34
      %p36 = scmp.eq.s32.totalorder %s15, 0
      %p37 = por %p35, %p36
      %s38 = ssub.s32 %s9, %s16
      %p39 = scmp.eq.s32.totalorder %s38, 0
      %s41 = sadd.s32 %s40, 1
      %s42 = scalar_select %p39, %s40, %s41
      %p45 = pneg %p39
      %p46 = scmp.eq.s32.totalorder %s9, 1
      %p47 = por %p45, %p46
      %p48 = scmp.ne.s32.totalorder %s40, %s43
      %p49 = scmp.eq.s32.totalorder %s9, 0
      %p50 = por %p48, %p49
      %p51 = scmp.ne.s32.totalorder %s40, %s43
      %p52 = scmp.eq.s32.totalorder %s14, 1
      %p53 = por %p51, %p52
      %p54 = scmp.ne.s32.totalorder %s43, %s44
      %p55 = scmp.eq.s32.totalorder %s14, 0
      %p56 = por %p54, %p55
      %p57 = scmp.ne.s32.totalorder %s43, %s44
      %p58 = scmp.eq.s32.totalorder %s15, 1
      %p59 = por %p57, %p58
      %p61 = scmp.ne.s32.totalorder %s44, %s60
      %p62 = scmp.eq.s32.totalorder %s15, 0
      %p63 = por %p61, %p62
      %s65 = sadd.s32 %s64, 1
      %p68 = scmp.eq.s32.totalorder %s9, 1
      %p69 = scmp.ne.s32.totalorder %s64, %s66
      %p70 = scmp.eq.s32.totalorder %s9, 0
      %p71 = por %p69, %p70
      %p72 = scmp.ne.s32.totalorder %s64, %s66
      %p73 = scmp.eq.s32.totalorder %s14, 1
      %p74 = por %p72, %p73
      %p75 = scmp.ne.s32.totalorder %s66, %s67
      %p76 = scmp.eq.s32.totalorder %s14, 0
      %p77 = por %p75, %p76
      %p78 = scmp.ne.s32.totalorder %s66, %s67
      %p79 = scmp.eq.s32.totalorder %s15, 1
      %p80 = por %p78, %p79
      %p82 = scmp.ne.s32.totalorder %s67, %s81
      %p83 = scmp.eq.s32.totalorder %s15, 0
      %p84 = por %p82, %p83
      %s85 = ssub.s32 %s9, %s16
      %p86 = scmp.eq.s32.totalorder %s85, 0
      %s88 = sadd.s32 %s87, 1
      %s89 = scalar_select %p86, %s87, %s88
      %p92 = pneg %p86
      %p93 = scmp.eq.s32.totalorder %s9, 1
      %p94 = por %p92, %p93
      %p95 = scmp.ne.s32.totalorder %s87, %s90
      %p96 = scmp.eq.s32.totalorder %s9, 0
      %p97 = por %p95, %p96
      %p98 = scmp.ne.s32.totalorder %s87, %s90
      %p99 = scmp.eq.s32.totalorder %s14, 1
      %p100 = por %p98, %p99
      %p101 = scmp.ne.s32.totalorder %s90, %s91
      %p102 = scmp.eq.s32.totalorder %s14, 0
      %p103 = por %p101, %p102
      %p104 = scmp.ne.s32.totalorder %s90, %s91
      %p105 = scmp.eq.s32.totalorder %s15, 1
      %p106 = por %p104, %p105
      %p108 = scmp.ne.s32.totalorder %s91, %s107
      %p109 = scmp.eq.s32.totalorder %s15, 0
      %p110 = por %p108, %p109
      %p111 = scmp.le.s32.totalorder 1, %s9
      %p112 = scmp.lt.s32.totalorder %s9, 3
      %p113 = pnand %p111, %p112
      %p114 = pneg %p113
      // Predicated region
      $region9: #{net_head17_forward.26} parent=5 // pred_check
        _
      $region10: #{net_head17_forward.26} parent=5 // pred_check_branch
        %116 = sbr.rel (%p113) target = $region12
      $region11: #{net_head17_forward.26} parent=5 // pred_region
        %s117 = ssub.s32 %s9, 1
        // Predicated region
        $region13: #{net_head17_forward.26} parent=11 // pred_check
          %p118 = pneg %p30
        $region14: #{net_head17_forward.26} parent=11 // pred_check_branch
          %120 = sbr.rel (%p118) target = $region16
        $region15: #{net_head17_forward.26} parent=11 // pred_region
          _
        $region16: #{net_head17_forward.26} parent=11 // pred_fallthru
          _
        // Predicated region
        $region17: #{net_head17_forward.26} parent=11 // pred_check
          %p121 = pneg %p77
        $region18: #{net_head17_forward.26} parent=11 // pred_check_branch
          %123 = sbr.rel (%p121) target = $region20
        $region19: #{net_head17_forward.26} parent=11 // pred_region
          _
        $region20: #{net_head17_forward.26} parent=11 // pred_fallthru
          _
      $region12: #{net_head17_forward.26} parent=5 // pred_fallthru
        _
      %p124 = scmp.lt.s32.totalorder %s9, 2
      // Predicated region
      $region21: #{net_head17_forward.26} parent=5 // pred_check
        %p125 = pneg %p124
      $region22: #{net_head17_forward.26} parent=5 // pred_check_branch
        %127 = sbr.rel (%p125) target = $region24
      $region23: #{net_head17_forward.26} parent=5 // pred_region
        // Predicated region
        $region25: #{net_head17_forward.26} parent=23 // pred_check
          %p128 = pneg %p50
        $region26: #{net_head17_forward.26} parent=23 // pred_check_branch
          %130 = sbr.rel (%p128) target = $region28
        $region27: #{net_head17_forward.26} parent=23 // pred_region
          %s131 = sand.u32 %s40, 1
          %s132 = sand.u32 %s40, 1
          %s133 = smul.addr %s132, 144
          %s134 = scalar_lea.vmem [#allocation2], %s133
          %s135 = smul.u32 2, %s9
          %s136 = smul.addr %s135, 4
          %s137 = scalar_lea.vmem %s1, %s136
          // Predicated region
          $region29: #{net_head17_forward.26} parent=27 // pred_check
            _
          $region30: #{net_head17_forward.26} parent=27 // pred_check_branch
            %139 = sbr.rel (0) target = $region32
          $region31: #{net_head17_forward.26} parent=27 // pred_region
            // Predicated region
            $region33: #{net_head17_forward.26} parent=31 // pred_check
              _
            $region34: #{net_head17_forward.26} parent=31 // pred_check_branch
              %141 = sbr.rel (0) target = $region36
            $region35: #{net_head17_forward.26} parent=31 // pred_region
              // Predicated region
              $region48: #{net_head17_forward.26} parent=35 // pred_check
                _
              $region49: #{net_head17_forward.26} parent=35 // pred_check_branch
                %191 = sbr.rel (0) target = $region51
              $region50: #{net_head17_forward.26} parent=35 // pred_region
                loop: start=0, step=1, limit=1
                $region52: #{net_head17_forward.26} parent=50 // loop_pre_header
                  _
                $region53: #{net_head17_forward.26} parent=50 // loop_header
                  %s193 = sphi 0, %s197
                  %p194 = scmp.ge.s32.totalorder %s193, 1
                  %s198 = sphi %s137, %s137
                  %s199 = sphi %s134, %s134
                $region54: #{net_head17_forward.26} parent=50 // loop_header_branch
                  %196 = sbr.rel (%p194) target = $region58
                $region55: #{net_head17_forward.26} parent=50 // loop_body
                  %v200 = vld [vmem:[%s198] sm:$0xff]
                  %201 = vst [vmem:[%s199] sm:$0xff] %v200
                  %v202 = vld [vmem:[%s198 + $0x10] sm:$0xff]
                  %203 = vst [vmem:[%s199 + $0x8] sm:$0xff] %v202
                  %v204 = vld [vmem:[%s198 + $0x20] sm:$0xff]
                  %205 = vst [vmem:[%s199 + $0x10] sm:$0xff] %v204
                  %v206 = vld [vmem:[%s198 + $0x30] sm:$0xff]
                  %207 = vst [vmem:[%s199 + $0x18] sm:$0xff] %v206
                  %v208 = vld [vmem:[%s198 + $0x40] sm:$0xff]
                  %209 = vst [vmem:[%s199 + $0x20] sm:$0xff] %v208
                  %v210 = vld [vmem:[%s198 + $0x50] sm:$0xff]
                  %211 = vst [vmem:[%s199 + $0x28] sm:$0xff] %v210
                  %v212 = vld [vmem:[%s198 + $0x60] sm:$0xff]
                  %213 = vst [vmem:[%s199 + $0x30] sm:$0xff] %v212
                  %v214 = vld [vmem:[%s198 + $0x70] sm:$0xff]
                  %215 = vst [vmem:[%s199 + $0x38] sm:$0xff] %v214
                  %v216 = vld [vmem:[%s198 + $0x80] sm:$0xff]
                  %217 = vst [vmem:[%s199 + $0x40] sm:$0xff] %v216
                  %v218 = vld [vmem:[%s198 + $0x90] sm:$0xff]
                  %219 = vst [vmem:[%s199 + $0x48] sm:$0xff] %v218
                  %v220 = vld [vmem:[%s198 + $0xa0] sm:$0xff]
                  %221 = vst [vmem:[%s199 + $0x50] sm:$0xff] %v220
                  %v222 = vld [vmem:[%s198 + $0xb0] sm:$0xff]
                  %223 = vst [vmem:[%s199 + $0x58] sm:$0xff] %v222
                  %v224 = vld [vmem:[%s198 + $0xc0] sm:$0xff]
                  %225 = vst [vmem:[%s199 + $0x60] sm:$0xff] %v224
                  %v226 = vld [vmem:[%s198 + $0xd0] sm:$0xff]
                  %227 = vst [vmem:[%s199 + $0x68] sm:$0xff] %v226
                  %v228 = vld [vmem:[%s198 + $0xe0] sm:$0xff]
                  %229 = vst [vmem:[%s199 + $0x70] sm:$0xff] %v228
                  %v230 = vld [vmem:[%s198 + $0xf0] sm:$0xff]
                  %231 = vst [vmem:[%s199 + $0x78] sm:$0xff] %v230
                  %v232 = vld [vmem:[%s198 + $0x100] sm:$0xff]
                  %233 = vst [vmem:[%s199 + $0x80] sm:$0xff] %v232
                  %v234 = vld [vmem:[%s198 + $0x110] sm:$0xff]
                  %235 = vst [vmem:[%s199 + $0x88] sm:$0xff] %v234
                $region56: #{net_head17_forward.26} parent=50 // loop_footer
                  %s197 = sadd.s32 1, %s193
                $region57: #{net_head17_forward.26} parent=50 // loop_footer_branch
                  %192 = sbr.rel target = $region53
                $region58: #{net_head17_forward.26} parent=50 // loop_exit
                  _
              $region51: #{net_head17_forward.26} parent=35 // pred_fallthru
                _
              // Predicated region
              $region59: #{net_head17_forward.26} parent=35 // pred_check
                _
              $region60: #{net_head17_forward.26} parent=35 // pred_check_branch
                %237 = sbr.rel target = $region62
              $region61: #{net_head17_forward.26} parent=35 // pred_region
                _
              $region62: #{net_head17_forward.26} parent=35 // pred_fallthru
                _
            $region36: #{net_head17_forward.26} parent=31 // pred_fallthru
              _
            // Predicated region
            $region37: #{net_head17_forward.26} parent=31 // pred_check
              _
            $region38: #{net_head17_forward.26} parent=31 // pred_check_branch
              %143 = sbr.rel target = $region40
            $region39: #{net_head17_forward.26} parent=31 // pred_region
              %s145 = ssub.s32 256, 1
              loop: start=0, step=1, limit=1
              $region41: #{net_head17_forward.26} parent=39 // loop_pre_header
                _
              $region42: #{net_head17_forward.26} parent=39 // loop_header
                %s147 = sphi 0, %s151
                %p148 = scmp.ge.s32.totalorder %s147, 1
                %s152 = sphi %s137, %s137
                %s153 = sphi %s134, %s134
              $region43: #{net_head17_forward.26} parent=39 // loop_header_branch
                %150 = sbr.rel (%p148) target = $region47
              $region44: #{net_head17_forward.26} parent=39 // loop_body
                %v154 = vld [vmem:[%s152] sm:%s145]
                %155 = vst [vmem:[%s153] sm:%s145] %v154
                %v156 = vld [vmem:[%s152 + $0x10] sm:%s145]
                %157 = vst [vmem:[%s153 + $0x8] sm:%s145] %v156
                %v158 = vld [vmem:[%s152 + $0x20] sm:%s145]
                %159 = vst [vmem:[%s153 + $0x10] sm:%s145] %v158
                %v160 = vld [vmem:[%s152 + $0x30] sm:%s145]
                %161 = vst [vmem:[%s153 + $0x18] sm:%s145] %v160
                %v162 = vld [vmem:[%s152 + $0x40] sm:%s145]
                %163 = vst [vmem:[%s153 + $0x20] sm:%s145] %v162
                %v164 = vld [vmem:[%s152 + $0x50] sm:%s145]
                %165 = vst [vmem:[%s153 + $0x28] sm:%s145] %v164
                %v166 = vld [vmem:[%s152 + $0x60] sm:%s145]
                %167 = vst [vmem:[%s153 + $0x30] sm:%s145] %v166
                %v168 = vld [vmem:[%s152 + $0x70] sm:%s145]
                %169 = vst [vmem:[%s153 + $0x38] sm:%s145] %v168
                %v170 = vld [vmem:[%s152 + $0x80] sm:%s145]
                %171 = vst [vmem:[%s153 + $0x40] sm:%s145] %v170
                %v172 = vld [vmem:[%s152 + $0x90] sm:%s145]
                %173 = vst [vmem:[%s153 + $0x48] sm:%s145] %v172
                %v174 = vld [vmem:[%s152 + $0xa0] sm:%s145]
                %175 = vst [vmem:[%s153 + $0x50] sm:%s145] %v174
                %v176 = vld [vmem:[%s152 + $0xb0] sm:%s145]
                %177 = vst [vmem:[%s153 + $0x58] sm:%s145] %v176
                %v178 = vld [vmem:[%s152 + $0xc0] sm:%s145]
                %179 = vst [vmem:[%s153 + $0x60] sm:%s145] %v178
                %v180 = vld [vmem:[%s152 + $0xd0] sm:%s145]
                %181 = vst [vmem:[%s153 + $0x68] sm:%s145] %v180
                %v182 = vld [vmem:[%s152 + $0xe0] sm:%s145]
                %183 = vst [vmem:[%s153 + $0x70] sm:%s145] %v182
                %v184 = vld [vmem:[%s152 + $0xf0] sm:%s145]
                %185 = vst [vmem:[%s153 + $0x78] sm:%s145] %v184
                %v186 = vld [vmem:[%s152 + $0x100] sm:%s145]
                %187 = vst [vmem:[%s153 + $0x80] sm:%s145] %v186
                %v188 = vld [vmem:[%s152 + $0x110] sm:%s145]
                %189 = vst [vmem:[%s153 + $0x88] sm:%s145] %v188
              $region45: #{net_head17_forward.26} parent=39 // loop_footer
                %s151 = sadd.s32 1, %s147
              $region46: #{net_head17_forward.26} parent=39 // loop_footer_branch
                %146 = sbr.rel target = $region42
              $region47: #{net_head17_forward.26} parent=39 // loop_exit
                _
            $region40: #{net_head17_forward.26} parent=31 // pred_fallthru
              _
          $region32: #{net_head17_forward.26} parent=27 // pred_fallthru
            _
          %238 = vnop
        $region28: #{net_head17_forward.26} parent=23 // pred_fallthru
          _
      $region24: #{net_head17_forward.26} parent=5 // pred_fallthru
        _
      %p239 = scmp.le.s32.totalorder 1, %s9
      %p240 = scmp.lt.s32.totalorder %s9, 3
      %p241 = pnand %p239, %p240
      %p242 = pneg %p241
      // Predicated region
      $region63: #{net_head17_forward.26} parent=5 // pred_check
        _
      $region64: #{net_head17_forward.26} parent=5 // pred_check_branch
        %244 = sbr.rel (%p241) target = $region66
      $region65: #{net_head17_forward.26} parent=5 // pred_region
        %s245 = ssub.s32 %s9, 1
        %s246 = sand.u32 %s43, 1
        %s247 = sand.u32 %s43, 1
        %s248 = smul.addr %s247, 144
        %s249 = scalar_lea.vmem [#allocation2], %s248
        // Predicated region
        $region67: #{net_head17_forward.26} parent=65 // pred_check
          %p250 = pneg %p56
        $region68: #{net_head17_forward.26} parent=65 // pred_check_branch
          %252 = sbr.rel (%p250) target = $region70
        $region69: #{net_head17_forward.26} parent=65 // pred_region
          _
        $region70: #{net_head17_forward.26} parent=65 // pred_fallthru
          _
        %p253 = pneg %p30
        %p254 = pneg %p27
        %s255 = sand.u32 %s43, 1
        %s256 = sand.u32 %s43, 1
        %s257 = smul.addr %s256, 144
        %s258 = scalar_lea.vmem [#allocation2], %s257
        %p259 = pneg %p56
        %p260 = pneg %p53
        %p261 = pneg %p77
        %p262 = pneg %p74
        %p263 = pneg %p103
        %p264 = pneg %p100
        %s265 = sand.u32 %s90, 1
        %s266 = sand.u32 %s90, 1
        %s267 = smul.addr %s266, 16
        %s268 = scalar_lea.vmem [#allocation3], %s267
        %s269 = smul.u32 2, %s14
        %s270 = smul.u32 2, %s14
        %v272 = vld [vmem:[%s0] sm:$0xff]
        %v273 = vld [vmem:[%s0 + $0x8] sm:$0xff]
        %v274 = vld [vmem:[%s249] sm:$0xff]
        %v275 = vld [vmem:[%s249 + $0x8] sm:$0xff]
        %v276 = vld [vmem:[%s249 + $0x10] sm:$0xff]
        %v277 = vld [vmem:[%s249 + $0x18] sm:$0xff]
        %v278 = vld [vmem:[%s249 + $0x20] sm:$0xff]
        %v279 = vld [vmem:[%s249 + $0x28] sm:$0xff]
        %v280 = vld [vmem:[%s249 + $0x30] sm:$0xff]
        %v281 = vld [vmem:[%s249 + $0x38] sm:$0xff]
        %v282 = vld [vmem:[%s249 + $0x40] sm:$0xff]
        %v283 = vld [vmem:[%s249 + $0x48] sm:$0xff]
        %v284 = vld [vmem:[%s249 + $0x50] sm:$0xff]
        %v285 = vld [vmem:[%s249 + $0x58] sm:$0xff]
        %v286 = vld [vmem:[%s249 + $0x60] sm:$0xff]
        %v287 = vld [vmem:[%s249 + $0x68] sm:$0xff]
        %v288 = vld [vmem:[%s249 + $0x70] sm:$0xff]
        %v289 = vld [vmem:[%s249 + $0x78] sm:$0xff]
        %v290 = vld [vmem:[%s249 + $0x80] sm:$0xff]
        %v291 = vld [vmem:[%s249 + $0x88] sm:$0xff]
        %v292 = vld [vmem:[%s2] sm:$0xff]
        %v293 = vld [vmem:[%s2 + $0x8] sm:$0xff]
        %295 = vset.pattern.permute.xlu0 0
        %296 = vperm.xlu0 %295, %v292
        %v297 = vpop.permute.xlu0 %296
        %300 = vset.pattern.permute.xlu0 0
        %301 = vperm.xlu0 %300, %v293
        %v302 = vpop.permute.xlu0 %301
        %v306 = vunpack.c.l.b16 %v272
        %v307 = vunpack.c.h.b16 %v272
        %v308 = vunpack.c.l.b16 %v273
        %v309 = vunpack.c.h.b16 %v273
        %v310 = vpack.c.b16 %v308, %v306
        %v311 = vpack.c.b16 %v309, %v307
        %v331 = vunpack.c.l.b16 %v274
        %v332 = vunpack.c.h.b16 %v274
        %v333 = vunpack.c.l.b16 %v275
        %v334 = vunpack.c.h.b16 %v275
        %v335 = vunpack.c.l.b16 %v276
        %v336 = vunpack.c.h.b16 %v276
        %v337 = vunpack.c.l.b16 %v277
        %v338 = vunpack.c.h.b16 %v277
        %v339 = vunpack.c.l.b16 %v278
        %v340 = vunpack.c.h.b16 %v278
        %v341 = vunpack.c.l.b16 %v279
        %v342 = vunpack.c.h.b16 %v279
        %v343 = vunpack.c.l.b16 %v280
        %v344 = vunpack.c.h.b16 %v280
        %v345 = vunpack.c.l.b16 %v281
        %v346 = vunpack.c.h.b16 %v281
        %v347 = vunpack.c.l.b16 %v282
        %v348 = vunpack.c.h.b16 %v282
        %v349 = vunpack.c.l.b16 %v283
        %v350 = vunpack.c.h.b16 %v283
        %v351 = vunpack.c.l.b16 %v284
        %v352 = vunpack.c.h.b16 %v284
        %v353 = vunpack.c.l.b16 %v285
        %v354 = vunpack.c.h.b16 %v285
        %v355 = vunpack.c.l.b16 %v286
        %v356 = vunpack.c.h.b16 %v286
        %v357 = vunpack.c.l.b16 %v287
        %v358 = vunpack.c.h.b16 %v287
        %v359 = vunpack.c.l.b16 %v288
        %v360 = vunpack.c.h.b16 %v288
        %v361 = vunpack.c.l.b16 %v289
        %v362 = vunpack.c.h.b16 %v289
        %v363 = vunpack.c.l.b16 %v290
        %v364 = vunpack.c.h.b16 %v290
        %v365 = vunpack.c.l.b16 %v291
        %v366 = vunpack.c.h.b16 %v291
        %v367 = vpack.c.b16 %v333, %v331
        %v368 = vpack.c.b16 %v334, %v332
        %v369 = vpack.c.b16 %v337, %v335
        %v370 = vpack.c.b16 %v338, %v336
        %v371 = vpack.c.b16 %v341, %v339
        %v372 = vpack.c.b16 %v342, %v340
        %v373 = vpack.c.b16 %v345, %v343
        %v374 = vpack.c.b16 %v346, %v344
        %v375 = vpack.c.b16 %v349, %v347
        %v376 = vpack.c.b16 %v350, %v348
        %v377 = vpack.c.b16 %v353, %v351
        %v378 = vpack.c.b16 %v354, %v352
        %v379 = vpack.c.b16 %v357, %v355
        %v380 = vpack.c.b16 %v358, %v356
        %v381 = vpack.c.b16 %v361, %v359
        %v382 = vpack.c.b16 %v362, %v360
        %v383 = vpack.c.b16 %v365, %v363
        %v384 = vpack.c.b16 %v366, %v364
        %vm403 = vcmask 130048
        %v405 = vsel %vm403, %v311, 0
        %407 = vmatprep.subr.bf16.mxu0 %v382
        %408 = vmatpush1.bf16.msra.mxu0 %v381
        %409 = vmatprep.subr.bf16.mxu0 %v380
        %410 = vmatpush1.bf16.msra.mxu0 %v379
        %411 = vmatprep.subr.bf16.mxu0 %v378
        %412 = vmatpush1.bf16.msra.mxu0 %v377
        %413 = vmatprep.subr.bf16.mxu0 %v376
        %414 = vmatpush1.bf16.msra.mxu0 %v375
        %415 = vmatprep.subr.bf16.mxu0 %v374
        %416 = vmatpush1.bf16.msra.mxu0 %v373
        %417 = vmatprep.subr.bf16.mxu0 %v372
        %418 = vmatpush1.bf16.msra.mxu0 %v371
        %419 = vmatprep.subr.bf16.mxu0 %v370
        %420 = vmatpush1.bf16.msra.mxu0 %v369
        %421 = vmatprep.subr.bf16.mxu0 %v368
        %422 = vmatpush1.bf16.msra.mxu0 %v367
        %423 = vmatprep.subr.bf16.mxu0 0
        %424 = vmatpush2.bf16.msra.mxu0 0
        %425 = vmatprep.subr.bf16.mxu0 0
        %426 = vmatpush2.bf16.msra.mxu0 0
        %427 = vmatprep.subr.bf16.mxu0 0
        %428 = vmatpush2.bf16.msra.mxu0 0
        %429 = vmatprep.subr.bf16.mxu0 0
        %430 = vmatpush2.bf16.msra.mxu0 0
        %431 = vmatprep.subr.bf16.mxu0 0
        %432 = vmatpush2.bf16.msra.mxu0 0
        %433 = vmatprep.subr.bf16.mxu0 0
        %434 = vmatpush2.bf16.msra.mxu0 0
        %435 = vmatprep.subr.bf16.mxu0 0
        %436 = vmatpush2.bf16.msra.mxu0 0
        %437 = vmatprep.subr.bf16.mxu0 %v384
        %438 = vmatpush2.bf16.msra.mxu0 %v383
        %439 = vmatprep.mubr.bf16.mxu0 %v405
        %440 = vmatmul.mubr.bf16.gmra.mxu0 %v310
        %v441 = vpop.f32.mrf.mxu0
        %v442 = vadd.f32 %v297, %v441
        %v443 = vpop.f32.mrf.mxu0
        %v444 = vadd.f32 %v297, %v443
        %v445 = vpop.f32.mrf.mxu0
        %v446 = vadd.f32 %v302, %v445
        %v447 = vpop.f32.mrf.mxu0
        %v448 = vadd.f32 %v302, %v447
        %449 = vdwg.mxu0
        %v450 = vmax.f32 %v442, 0.0
        %v451 = vmax.f32 %v444, 0.0
        %v452 = vmax.f32 %v446, 0.0
        %v453 = vmax.f32 %v448, 0.0
        %v454 = vpack.c.bf16 %v452, %v450
        %v455 = vpack.c.bf16 %v453, %v451
        %v458 = vunpack.c.l.b16 %v454
        %v459 = vunpack.c.l.b16 %v455
        %v460 = vunpack.c.h.b16 %v454
        %v461 = vunpack.c.h.b16 %v455
        %v462 = vpack.c.b16 %v459, %v458
        %v463 = vpack.c.b16 %v461, %v460
        %466 = vst [vmem:[%s268] sm:$0xff] %v462
        %467 = vst [vmem:[%s268 + $0x8] sm:$0xff] %v463
        %s468 = sand.u32 %s90, 1
        %s469 = sand.u32 %s90, 1
        %s470 = smul.addr %s469, 16
        %s471 = scalar_lea.vmem [#allocation3], %s470
        // Predicated region
        $region71: #{net_head17_forward.26} parent=65 // pred_check
          %p472 = pneg %p100
        $region72: #{net_head17_forward.26} parent=65 // pred_check_branch
          %474 = sbr.rel (%p472) target = $region74
        $region73: #{net_head17_forward.26} parent=65 // pred_region
          %s475 = smul.u32 2, %s14
          %s476 = smul.addr %s475, 4
          %s477 = scalar_lea.vmem %s3, %s476
          // Predicated region
          $region75: #{net_head17_forward.26} parent=73 // pred_check
            _
          $region76: #{net_head17_forward.26} parent=73 // pred_check_branch
            %479 = sbr.rel (0) target = $region78
          $region77: #{net_head17_forward.26} parent=73 // pred_region
            // Predicated region
            $region79: #{net_head17_forward.26} parent=77 // pred_check
              _
            $region80: #{net_head17_forward.26} parent=77 // pred_check_branch
              %481 = sbr.rel (0) target = $region82
            $region81: #{net_head17_forward.26} parent=77 // pred_region
              // Predicated region
              $region94: #{net_head17_forward.26} parent=81 // pred_check
                _
              $region95: #{net_head17_forward.26} parent=81 // pred_check_branch
                %499 = sbr.rel (0) target = $region97
              $region96: #{net_head17_forward.26} parent=81 // pred_region
                loop: start=0, step=1, limit=1
                $region98: #{net_head17_forward.26} parent=96 // loop_pre_header
                  _
                $region99: #{net_head17_forward.26} parent=96 // loop_header
                  %s501 = sphi 0, %s505
                  %p502 = scmp.ge.s32.totalorder %s501, 1
                  %s506 = sphi %s471, %s471
                  %s507 = sphi %s477, %s477
                $region100: #{net_head17_forward.26} parent=96 // loop_header_branch
                  %504 = sbr.rel (%p502) target = $region104
                $region101: #{net_head17_forward.26} parent=96 // loop_body
                  %v508 = vld [vmem:[%s506] sm:$0xff]
                  %509 = vst [vmem:[%s507] sm:$0xff] %v508
                  %v510 = vld [vmem:[%s506 + $0x8] sm:$0xff]
                  %511 = vst [vmem:[%s507 + $0x10] sm:$0xff] %v510
                $region102: #{net_head17_forward.26} parent=96 // loop_footer
                  %s505 = sadd.s32 1, %s501
                $region103: #{net_head17_forward.26} parent=96 // loop_footer_branch
                  %500 = sbr.rel target = $region99
                $region104: #{net_head17_forward.26} parent=96 // loop_exit
                  _
              $region97: #{net_head17_forward.26} parent=81 // pred_fallthru
                _
              // Predicated region
              $region105: #{net_head17_forward.26} parent=81 // pred_check
                _
              $region106: #{net_head17_forward.26} parent=81 // pred_check_branch
                %513 = sbr.rel target = $region108
              $region107: #{net_head17_forward.26} parent=81 // pred_region
                _
              $region108: #{net_head17_forward.26} parent=81 // pred_fallthru
                _
            $region82: #{net_head17_forward.26} parent=77 // pred_fallthru
              _
            // Predicated region
            $region83: #{net_head17_forward.26} parent=77 // pred_check
              _
            $region84: #{net_head17_forward.26} parent=77 // pred_check_branch
              %483 = sbr.rel target = $region86
            $region85: #{net_head17_forward.26} parent=77 // pred_region
              %s485 = ssub.s32 256, 1
              loop: start=0, step=1, limit=1
              $region87: #{net_head17_forward.26} parent=85 // loop_pre_header
                _
              $region88: #{net_head17_forward.26} parent=85 // loop_header
                %s487 = sphi 0, %s491
                %p488 = scmp.ge.s32.totalorder %s487, 1
                %s492 = sphi %s471, %s471
                %s493 = sphi %s477, %s477
              $region89: #{net_head17_forward.26} parent=85 // loop_header_branch
                %490 = sbr.rel (%p488) target = $region93
              $region90: #{net_head17_forward.26} parent=85 // loop_body
                %v494 = vld [vmem:[%s492] sm:%s485]
                %495 = vst [vmem:[%s493] sm:%s485] %v494
                %v496 = vld [vmem:[%s492 + $0x8] sm:%s485]
                %497 = vst [vmem:[%s493 + $0x10] sm:%s485] %v496
              $region91: #{net_head17_forward.26} parent=85 // loop_footer
                %s491 = sadd.s32 1, %s487
              $region92: #{net_head17_forward.26} parent=85 // loop_footer_branch
                %486 = sbr.rel target = $region88
              $region93: #{net_head17_forward.26} parent=85 // loop_exit
                _
            $region86: #{net_head17_forward.26} parent=77 // pred_fallthru
              _
          $region78: #{net_head17_forward.26} parent=73 // pred_fallthru
            _
          %514 = vnop
        $region74: #{net_head17_forward.26} parent=65 // pred_fallthru
          _
      $region66: #{net_head17_forward.26} parent=5 // pred_fallthru
        _
      %p515 = scmp.le.s32.totalorder 2, %s9
      // Predicated region
      $region109: #{net_head17_forward.26} parent=5 // pred_check
        %p516 = pneg %p515
      $region110: #{net_head17_forward.26} parent=5 // pred_check_branch
        %518 = sbr.rel (%p516) target = $region112
      $region111: #{net_head17_forward.26} parent=5 // pred_region
        %s519 = ssub.s32 %s9, 2
        // Predicated region
        $region113: #{net_head17_forward.26} parent=111 // pred_check
          %p520 = pneg %p106
        $region114: #{net_head17_forward.26} parent=111 // pred_check_branch
          %522 = sbr.rel (%p520) target = $region116
        $region115: #{net_head17_forward.26} parent=111 // pred_region
          %s523 = sand.u32 %s91, 1
          %s524 = sand.u32 %s91, 1
          %s525 = smul.addr %s524, 16
          %s526 = scalar_lea.vmem [#allocation3], %s525
        $region116: #{net_head17_forward.26} parent=111 // pred_fallthru
          _
      $region112: #{net_head17_forward.26} parent=5 // pred_fallthru
        _
    $region6: #{net_head17_forward.26} parent=1 // loop_footer
      %s13 = sadd.s32 1, %s9
    $region7: #{net_head17_forward.26} parent=1 // loop_footer_branch
      %8 = sbr.rel target = $region3
    $region8: #{net_head17_forward.26} parent=1 // loop_exit
      _

// kernel: net_head17_forward.32
$region0: #{net_head17_forward.32}
  #allocation0 [shape = 'u32[]', space=smem, size = 0x4, offset = 0x4, fixed_abs, tag = 'smem constant byte address 0x4 - core index']
  #allocation1 [shape = 'u32[144,128]{1,0:T(1,128)}', space=vmem, size = 0x12000, scoped, tag = 'internal scratch']
  %s0 = inlined_call_operand.vmem [shape: bf16[32,144], index: 0, kind: input, shape index: {}]
  %s1 = inlined_call_operand.vmem [shape: bf16[144,128], index: 1, kind: input, shape index: {}]
  %s2 = inlined_call_operand.vmem [shape: f32[32,1], index: 2, kind: input, shape index: {}]
  %s3 = inlined_call_operand.vmem [shape: bf16[32,128], index: 3, kind: output, shape index: {}]
  %s4 = sld [smem:[#allocation0]]
  $region22: #{net_head17_forward.32} parent=0
    _
  %s6 = ssub.s32 1, %s4
  %s7 = scalar_select 0, %s6, %s4
  // Predicated region
  $region2: #{net_head17_forward.32} parent=0 // pred_check
    _
  $region3: #{net_head17_forward.32} parent=0 // pred_check_branch
    %9 = sbr.rel (0) target = $region5
  $region4: #{net_head17_forward.32} parent=0 // pred_region
    _
  $region5: #{net_head17_forward.32} parent=0 // pred_fallthru
    _
  // Predicated region
  $region6: #{net_head17_forward.32} parent=0 // pred_check
    _
  $region7: #{net_head17_forward.32} parent=0 // pred_check_branch
    %11 = sbr.rel (0) target = $region9
  $region8: #{net_head17_forward.32} parent=0 // pred_region
    _
  $region9: #{net_head17_forward.32} parent=0 // pred_fallthru
    _
  // Predicated region
  $region10: #{net_head17_forward.32} parent=0 // pred_check
    _
  $region11: #{net_head17_forward.32} parent=0 // pred_check_branch
    %13 = sbr.rel (0) target = $region13
  $region12: #{net_head17_forward.32} parent=0 // pred_region
    _
  $region13: #{net_head17_forward.32} parent=0 // pred_fallthru
    _
  %v15 = vld [vmem:[%s0] sm:$0xff]
  %v16 = vld [vmem:[%s0 + $0x8] sm:$0xff]
  %v17 = vld [vmem:[%s0 + $0x10] sm:$0xff]
  %v18 = vld [vmem:[%s0 + $0x18] sm:$0xff]
  %v19 = vld [vmem:[%s1] sm:$0xf]
  %v20 = vld [vmem:[%s1 + $0x4] sm:$0xf]
  %v21 = vld [vmem:[%s1 + $0x8] sm:$0xf]
  %v22 = vld [vmem:[%s1 + $0xc] sm:$0xf]
  %v23 = vld [vmem:[%s1 + $0x10] sm:$0xf]
  %v24 = vld [vmem:[%s1 + $0x14] sm:$0xf]
  %v25 = vld [vmem:[%s1 + $0x18] sm:$0xf]
  %v26 = vld [vmem:[%s1 + $0x1c] sm:$0xf]
  %v27 = vld [vmem:[%s1 + $0x20] sm:$0xf]
  %v28 = vld [vmem:[%s1 + $0x24] sm:$0xf]
  %v29 = vld [vmem:[%s1 + $0x28] sm:$0xf]
  %v30 = vld [vmem:[%s1 + $0x2c] sm:$0xf]
  %v31 = vld [vmem:[%s1 + $0x30] sm:$0xf]
  %v32 = vld [vmem:[%s1 + $0x34] sm:$0xf]
  %v33 = vld [vmem:[%s1 + $0x38] sm:$0xf]
  %v34 = vld [vmem:[%s1 + $0x3c] sm:$0xf]
  %v35 = vld [vmem:[%s1 + $0x40] sm:$0xf]
  %v36 = vld [vmem:[%s1 + $0x44] sm:$0xf]
  %v37 = vld [vmem:[%s2] sm:$0xff]
  %v38 = vld [vmem:[%s2 + $0x8] sm:$0xff]
  %v39 = vld [vmem:[%s2 + $0x10] sm:$0xff]
  %v40 = vld [vmem:[%s2 + $0x18] sm:$0xff]
  %42 = vset.pattern.permute.xlu0 0
  %43 = vperm.xlu0 %42, %v37
  %v44 = vpop.permute.xlu0 %43
  %47 = vset.pattern.permute.xlu0 0
  %48 = vperm.xlu0 %47, %v38
  %v49 = vpop.permute.xlu0 %48
  %52 = vset.pattern.permute.xlu0 0
  %53 = vperm.xlu0 %52, %v39
  %v54 = vpop.permute.xlu0 %53
  %57 = vset.pattern.permute.xlu0 0
  %58 = vperm.xlu0 %57, %v40
  %v59 = vpop.permute.xlu0 %58
  %v65 = vunpack.c.l.b16 %v15
  %v66 = vunpack.c.h.b16 %v15
  %v67 = vunpack.c.l.b16 %v16
  %v68 = vunpack.c.h.b16 %v16
  %v69 = vunpack.c.l.b16 %v17
  %v70 = vunpack.c.h.b16 %v17
  %v71 = vunpack.c.l.b16 %v18
  %v72 = vunpack.c.h.b16 %v18
  %v73 = vpack.c.b16 %v67, %v65
  %v74 = vpack.c.b16 %v68, %v66
  %v75 = vpack.c.b16 %v71, %v69
  %v76 = vpack.c.b16 %v72, %v70
  %v97 = vunpack.c.l.b16 %v19
  %v98 = vunpack.c.l.b16 %v20
  %v99 = vunpack.c.l.b16 %v21
  %v100 = vunpack.c.l.b16 %v22
  %v101 = vunpack.c.l.b16 %v23
  %v102 = vunpack.c.l.b16 %v24
  %v103 = vunpack.c.l.b16 %v25
  %v104 = vunpack.c.l.b16 %v26
  %v105 = vunpack.c.l.b16 %v27
  %v106 = vunpack.c.l.b16 %v28
  %v107 = vunpack.c.l.b16 %v29
  %v108 = vunpack.c.l.b16 %v30
  %v109 = vunpack.c.l.b16 %v31
  %v110 = vunpack.c.l.b16 %v32
  %v111 = vunpack.c.l.b16 %v33
  %v112 = vunpack.c.l.b16 %v34
  %v113 = vunpack.c.l.b16 %v35
  %v114 = vunpack.c.l.b16 %v36
  %v115 = vpack.c.b16 %v98, %v97
  %v116 = vpack.c.b16 %v100, %v99
  %v117 = vpack.c.b16 %v102, %v101
  %v118 = vpack.c.b16 %v104, %v103
  %v119 = vpack.c.b16 %v106, %v105
  %v120 = vpack.c.b16 %v108, %v107
  %v121 = vpack.c.b16 %v110, %v109
  %v122 = vpack.c.b16 %v112, %v111
  %v123 = vpack.c.b16 %v114, %v113
  %vm133 = vcmask 130048
  %v135 = vsel %vm133, %v74, 0
  %v138 = vsel %vm133, %v76, 0
  %140 = vmatprep.subr.bf16.mxu0 0
  %141 = vmatpush1.bf16.msra.mxu0 %v122
  %142 = vmatprep.subr.bf16.mxu0 0
  %143 = vmatpush1.bf16.msra.mxu0 %v121
  %144 = vmatprep.subr.bf16.mxu0 0
  %145 = vmatpush1.bf16.msra.mxu0 %v120
  %146 = vmatprep.subr.bf16.mxu0 0
  %147 = vmatpush1.bf16.msra.mxu0 %v119
  %148 = vmatprep.subr.bf16.mxu0 0
  %149 = vmatpush1.bf16.msra.mxu0 %v118
  %150 = vmatprep.subr.bf16.mxu0 0
  %151 = vmatpush1.bf16.msra.mxu0 %v117
  %152 = vmatprep.subr.bf16.mxu0 0
  %153 = vmatpush1.bf16.msra.mxu0 %v116
  %154 = vmatprep.subr.bf16.mxu0 0
  %155 = vmatpush1.bf16.msra.mxu0 %v115
  %156 = vmatprep.subr.bf16.mxu0 0
  %157 = vmatpush2.bf16.msra.mxu0 0
  %158 = vmatprep.subr.bf16.mxu0 0
  %159 = vmatpush2.bf16.msra.mxu0 0
  %160 = vmatprep.subr.bf16.mxu0 0
  %161 = vmatpush2.bf16.msra.mxu0 0
  %162 = vmatprep.subr.bf16.mxu0 0
  %163 = vmatpush2.bf16.msra.mxu0 0
  %164 = vmatprep.subr.bf16.mxu0 0
  %165 = vmatpush2.bf16.msra.mxu0 0
  %166 = vmatprep.subr.bf16.mxu0 0
  %167 = vmatpush2.bf16.msra.mxu0 0
  %168 = vmatprep.subr.bf16.mxu0 0
  %169 = vmatpush2.bf16.msra.mxu0 0
  %170 = vmatprep.subr.bf16.mxu0 0
  %171 = vmatpush2.bf16.msra.mxu0 %v123
  %172 = vmatprep.mubr.bf16.mxu0 %v135
  %173 = vmatmul.mubr.bf16.gmra.mxu0 %v73
  %v174 = vpop.f32.mrf.mxu0
  %v175 = vadd.f32 %v44, %v174
  %v176 = vpop.f32.mrf.mxu0
  %v177 = vpop.f32.mrf.mxu0
  %v178 = vadd.f32 %v49, %v177
  %v179 = vpop.f32.mrf.mxu0
  %180 = vmatprep.mubr.bf16.mxu0 %v138
  %181 = vmatmul.mubr.bf16.gmra.mxu0 %v75
  %v182 = vpop.f32.mrf.mxu0
  %v183 = vadd.f32 %v54, %v182
  %v184 = vpop.f32.mrf.mxu0
  %v185 = vpop.f32.mrf.mxu0
  %v186 = vadd.f32 %v59, %v185
  %v187 = vpop.f32.mrf.mxu0
  %188 = vdwg.mxu0
  %v189 = vmax.f32 %v175, 0.0
  %v190 = vmax.f32 %v178, 0.0
  %v191 = vmax.f32 %v183, 0.0
  %v192 = vmax.f32 %v186, 0.0
  %v193 = vpack.c.bf16 %v190, %v189
  %v194 = vpack.c.bf16 %v192, %v191
  %v197 = vunpack.c.l.b16 %v193
  %v198 = vunpack.c.h.b16 %v193
  %v199 = vunpack.c.l.b16 %v194
  %v200 = vunpack.c.h.b16 %v194
  %v201 = vpack.c.b16 %v197, %v197
  %v202 = vpack.c.b16 %v198, %v198
  %v203 = vpack.c.b16 %v199, %v199
  %v204 = vpack.c.b16 %v200, %v200
  %209 = vst [vmem:[%s3] sm:$0xf] %v201
  %210 = vst [vmem:[%s3 + $0x4] sm:$0xf] %v202
  %211 = vst [vmem:[%s3 + $0x8] sm:$0xf] %v203
  %212 = vst [vmem:[%s3 + $0xc] sm:$0xf] %v204
  // Predicated region
  $region14: #{net_head17_forward.32} parent=0 // pred_check
    _
  $region15: #{net_head17_forward.32} parent=0 // pred_check_branch
    %214 = sbr.rel (0) target = $region17
  $region16: #{net_head17_forward.32} parent=0 // pred_region
    _
  $region17: #{net_head17_forward.32} parent=0 // pred_fallthru
    _
  // Predicated region
  $region18: #{net_head17_forward.32} parent=0 // pred_check
    _
  $region19: #{net_head17_forward.32} parent=0 // pred_check_branch
    %216 = sbr.rel (0) target = $region21
  $region20: #{net_head17_forward.32} parent=0 // pred_region
    _
  $region21: #{net_head17_forward.32} parent=0 // pred_fallthru
    _

// kernel: net_head17_forward.33
$region0: #{net_head17_forward.33}
  #allocation0 [shape = 'u32[]', space=smem, size = 0x4, offset = 0x4, fixed_abs, tag = 'smem constant byte address 0x4 - core index']
  #allocation1 [shape = 'u32[144,128]{1,0:T(1,128)}', space=vmem, size = 0x12000, scoped, tag = 'internal scratch']
  %s0 = inlined_call_operand.vmem [shape: bf16[32,288], index: 0, kind: input, shape index: {}]
  %s1 = inlined_call_operand.vmem [shape: bf16[288,128], index: 1, kind: input, shape index: {}]
  %s2 = inlined_call_operand.vmem [shape: f32[32,1], index: 2, kind: input, shape index: {}]
  %s3 = inlined_call_operand.vmem [shape: bf16[32,128], index: 3, kind: output, shape index: {}]
  %s4 = sld [smem:[#allocation0]]
  $region22: #{net_head17_forward.33} parent=0
    _
  %s6 = ssub.s32 1, %s4
  %s7 = scalar_select 0, %s6, %s4
  // Predicated region
  $region2: #{net_head17_forward.33} parent=0 // pred_check
    _
  $region3: #{net_head17_forward.33} parent=0 // pred_check_branch
    %9 = sbr.rel (0) target = $region5
  $region4: #{net_head17_forward.33} parent=0 // pred_region
    _
  $region5: #{net_head17_forward.33} parent=0 // pred_fallthru
    _
  // Predicated region
  $region6: #{net_head17_forward.33} parent=0 // pred_check
    _
  $region7: #{net_head17_forward.33} parent=0 // pred_check_branch
    %11 = sbr.rel (0) target = $region9
  $region8: #{net_head17_forward.33} parent=0 // pred_region
    _
  $region9: #{net_head17_forward.33} parent=0 // pred_fallthru
    _
  // Predicated region
  $region10: #{net_head17_forward.33} parent=0 // pred_check
    _
  $region11: #{net_head17_forward.33} parent=0 // pred_check_branch
    %13 = sbr.rel (0) target = $region13
  $region12: #{net_head17_forward.33} parent=0 // pred_region
    _
  $region13: #{net_head17_forward.33} parent=0 // pred_fallthru
    _
  %v15 = vld [vmem:[%s0] sm:$0xff]
  %v16 = vld [vmem:[%s0 + $0x8] sm:$0xf]
  %v17 = vld [vmem:[%s0 + $0xc] sm:$0xff]
  %v18 = vld [vmem:[%s0 + $0x14] sm:$0xf]
  %v19 = vld [vmem:[%s0 + $0x18] sm:$0xff]
  %v20 = vld [vmem:[%s0 + $0x20] sm:$0xf]
  %v21 = vld [vmem:[%s0 + $0x24] sm:$0xff]
  %v22 = vld [vmem:[%s0 + $0x2c] sm:$0xf]
  %v23 = vld [vmem:[%s1] sm:$0xf]
  %v24 = vld [vmem:[%s1 + $0x4] sm:$0xf]
  %v25 = vld [vmem:[%s1 + $0x8] sm:$0xf]
  %v26 = vld [vmem:[%s1 + $0xc] sm:$0xf]
  %v27 = vld [vmem:[%s1 + $0x10] sm:$0xf]
  %v28 = vld [vmem:[%s1 + $0x14] sm:$0xf]
  %v29 = vld [vmem:[%s1 + $0x18] sm:$0xf]
  %v30 = vld [vmem:[%s1 + $0x1c] sm:$0xf]
  %v31 = vld [vmem:[%s1 + $0x20] sm:$0xf]
  %v32 = vld [vmem:[%s1 + $0x24] sm:$0xf]
  %v33 = vld [vmem:[%s1 + $0x28] sm:$0xf]
  %v34 = vld [vmem:[%s1 + $0x2c] sm:$0xf]
  %v35 = vld [vmem:[%s1 + $0x30] sm:$0xf]
  %v36 = vld [vmem:[%s1 + $0x34] sm:$0xf]
  %v37 = vld [vmem:[%s1 + $0x38] sm:$0xf]
  %v38 = vld [vmem:[%s1 + $0x3c] sm:$0xf]
  %v39 = vld [vmem:[%s1 + $0x40] sm:$0xf]
  %v40 = vld [vmem:[%s1 + $0x44] sm:$0xf]
  %v41 = vld [vmem:[%s1 + $0x48] sm:$0xf]
  %v42 = vld [vmem:[%s1 + $0x4c] sm:$0xf]
  %v43 = vld [vmem:[%s1 + $0x50] sm:$0xf]
  %v44 = vld [vmem:[%s1 + $0x54] sm:$0xf]
  %v45 = vld [vmem:[%s1 + $0x58] sm:$0xf]
  %v46 = vld [vmem:[%s1 + $0x5c] sm:$0xf]
  %v47 = vld [vmem:[%s1 + $0x60] sm:$0xf]
  %v48 = vld [vmem:[%s1 + $0x64] sm:$0xf]
  %v49 = vld [vmem:[%s1 + $0x68] sm:$0xf]
  %v50 = vld [vmem:[%s1 + $0x6c] sm:$0xf]
  %v51 = vld [vmem:[%s1 + $0x70] sm:$0xf]
  %v52 = vld [vmem:[%s1 + $0x74] sm:$0xf]
  %v53 = vld [vmem:[%s1 + $0x78] sm:$0xf]
  %v54 = vld [vmem:[%s1 + $0x7c] sm:$0xf]
  %v55 = vld [vmem:[%s1 + $0x80] sm:$0xf]
  %v56 = vld [vmem:[%s1 + $0x84] sm:$0xf]
  %v57 = vld [vmem:[%s1 + $0x88] sm:$0xf]
  %v58 = vld [vmem:[%s1 + $0x8c] sm:$0xf]
  %v59 = vld [vmem:[%s2] sm:$0xff]
  %v60 = vld [vmem:[%s2 + $0x8] sm:$0xff]
  %v61 = vld [vmem:[%s2 + $0x10] sm:$0xff]
  %v62 = vld [vmem:[%s2 + $0x18] sm:$0xff]
  %64 = vset.pattern.permute.xlu0 0
  %65 = vperm.xlu0 %64, %v59
  %v66 = vpop.permute.xlu0 %65
  %69 = vset.pattern.permute.xlu0 0
  %70 = vperm.xlu0 %69, %v60
  %v71 = vpop.permute.xlu0 %70
  %74 = vset.pattern.permute.xlu0 0
  %75 = vperm.xlu0 %74, %v61
  %v76 = vpop.permute.xlu0 %75
  %79 = vset.pattern.permute.xlu0 0
  %80 = vperm.xlu0 %79, %v62
  %v81 = vpop.permute.xlu0 %80
  %v91 = vunpack.c.l.b16 %v15
  %v92 = vunpack.c.h.b16 %v15
  %v93 = vunpack.c.l.b16 %v16
  %v94 = vunpack.c.l.b16 %v17
  %v95 = vunpack.c.h.b16 %v17
  %v96 = vunpack.c.l.b16 %v18
  %v97 = vunpack.c.l.b16 %v19
  %v98 = vunpack.c.h.b16 %v19
  %v99 = vunpack.c.l.b16 %v20
  %v100 = vunpack.c.l.b16 %v21
  %v101 = vunpack.c.h.b16 %v21
  %v102 = vunpack.c.l.b16 %v22
  %v103 = vpack.c.b16 %v94, %v91
  %v104 = vpack.c.b16 %v95, %v92
  %v105 = vpack.c.b16 %v96, %v93
  %v106 = vpack.c.b16 %v100, %v97
  %v107 = vpack.c.b16 %v101, %v98
  %v108 = vpack.c.b16 %v102, %v99
  %v149 = vunpack.c.l.b16 %v23
  %v150 = vunpack.c.l.b16 %v24
  %v151 = vunpack.c.l.b16 %v25
  %v152 = vunpack.c.l.b16 %v26
  %v153 = vunpack.c.l.b16 %v27
  %v154 = vunpack.c.l.b16 %v28
  %v155 = vunpack.c.l.b16 %v29
  %v156 = vunpack.c.l.b16 %v30
  %v157 = vunpack.c.l.b16 %v31
  %v158 = vunpack.c.l.b16 %v32
  %v159 = vunpack.c.l.b16 %v33
  %v160 = vunpack.c.l.b16 %v34
  %v161 = vunpack.c.l.b16 %v35
  %v162 = vunpack.c.l.b16 %v36
  %v163 = vunpack.c.l.b16 %v37
  %v164 = vunpack.c.l.b16 %v38
  %v165 = vunpack.c.l.b16 %v39
  %v166 = vunpack.c.l.b16 %v40
  %v167 = vunpack.c.l.b16 %v41
  %v168 = vunpack.c.l.b16 %v42
  %v169 = vunpack.c.l.b16 %v43
  %v170 = vunpack.c.l.b16 %v44
  %v171 = vunpack.c.l.b16 %v45
  %v172 = vunpack.c.l.b16 %v46
  %v173 = vunpack.c.l.b16 %v47
  %v174 = vunpack.c.l.b16 %v48
  %v175 = vunpack.c.l.b16 %v49
  %v176 = vunpack.c.l.b16 %v50
  %v177 = vunpack.c.l.b16 %v51
  %v178 = vunpack.c.l.b16 %v52
  %v179 = vunpack.c.l.b16 %v53
  %v180 = vunpack.c.l.b16 %v54
  %v181 = vunpack.c.l.b16 %v55
  %v182 = vunpack.c.l.b16 %v56
  %v183 = vunpack.c.l.b16 %v57
  %v184 = vunpack.c.l.b16 %v58
  %v185 = vpack.c.b16 %v150, %v149
  %v186 = vpack.c.b16 %v152, %v151
  %v187 = vpack.c.b16 %v154, %v153
  %v188 = vpack.c.b16 %v156, %v155
  %v189 = vpack.c.b16 %v158, %v157
  %v190 = vpack.c.b16 %v160, %v159
  %v191 = vpack.c.b16 %v162, %v161
  %v192 = vpack.c.b16 %v164, %v163
  %v193 = vpack.c.b16 %v166, %v165
  %v194 = vpack.c.b16 %v168, %v167
  %v195 = vpack.c.b16 %v170, %v169
  %v196 = vpack.c.b16 %v172, %v171
  %v197 = vpack.c.b16 %v174, %v173
  %v198 = vpack.c.b16 %v176, %v175
  %v199 = vpack.c.b16 %v178, %v177
  %v200 = vpack.c.b16 %v180, %v179
  %v201 = vpack.c.b16 %v182, %v181
  %v202 = vpack.c.b16 %v184, %v183
  %vm221 = vcmask 261120
  %v223 = vsel %vm221, %v105, 0
  %v226 = vsel %vm221, %v108, 0
  %228 = vmatprep.subr.bf16.mxu0 0
  %229 = vmatpush1.bf16.msra.mxu0 %v192
  %230 = vmatprep.subr.bf16.mxu0 0
  %231 = vmatpush1.bf16.msra.mxu0 %v191
  %232 = vmatprep.subr.bf16.mxu0 0
  %233 = vmatpush1.bf16.msra.mxu0 %v190
  %234 = vmatprep.subr.bf16.mxu0 0
  %235 = vmatpush1.bf16.msra.mxu0 %v189
  %236 = vmatprep.subr.bf16.mxu0 0
  %237 = vmatpush1.bf16.msra.mxu0 %v188
  %238 = vmatprep.subr.bf16.mxu0 0
  %239 = vmatpush1.bf16.msra.mxu0 %v187
  %240 = vmatprep.subr.bf16.mxu0 0
  %241 = vmatpush1.bf16.msra.mxu0 %v186
  %242 = vmatprep.subr.bf16.mxu0 0
  %243 = vmatpush1.bf16.msra.mxu0 %v185
  %244 = vmatprep.subr.bf16.mxu0 0
  %245 = vmatpush2.bf16.msra.mxu0 %v200
  %246 = vmatprep.subr.bf16.mxu0 0
  %247 = vmatpush2.bf16.msra.mxu0 %v199
  %248 = vmatprep.subr.bf16.mxu0 0
  %249 = vmatpush2.bf16.msra.mxu0 %v198
  %250 = vmatprep.subr.bf16.mxu0 0
  %251 = vmatpush2.bf16.msra.mxu0 %v197
  %252 = vmatprep.subr.bf16.mxu0 0
  %253 = vmatpush2.bf16.msra.mxu0 %v196
  %254 = vmatprep.subr.bf16.mxu0 0
  %255 = vmatpush2.bf16.msra.mxu0 %v195
  %256 = vmatprep.subr.bf16.mxu0 0
  %257 = vmatpush2.bf16.msra.mxu0 %v194
  %258 = vmatprep.subr.bf16.mxu0 0
  %259 = vmatpush2.bf16.msra.mxu0 %v193
  %260 = vmatprep.mubr.bf16.mxu0 %v104
  %261 = vmatmul.mubr.bf16.gmra.mxu0 %v103
  %v262 = vpop.f32.mrf.mxu0
  %v263 = vadd.f32 %v66, %v262
  %v264 = vpop.f32.mrf.mxu0
  %v265 = vpop.f32.mrf.mxu0
  %v266 = vadd.f32 %v71, %v265
  %v267 = vpop.f32.mrf.mxu0
  %268 = vmatprep.mubr.bf16.mxu0 %v107
  %269 = vmatmul.mubr.bf16.gmra.mxu0 %v106
  %v270 = vpop.f32.mrf.mxu0
  %v271 = vadd.f32 %v76, %v270
  %v272 = vpop.f32.mrf.mxu0
  %v273 = vpop.f32.mrf.mxu0
  %v274 = vadd.f32 %v81, %v273
  %v275 = vpop.f32.mrf.mxu0
  %276 = vdwg.mxu0
  %277 = vmatprep.subr.bf16.mxu0 0
  %278 = vmatpush1.bf16.msra.mxu0 0
  %279 = vmatprep.subr.bf16.mxu0 0
  %280 = vmatpush1.bf16.msra.mxu0 0
  %281 = vmatprep.subr.bf16.mxu0 0
  %282 = vmatpush1.bf16.msra.mxu0 0
  %283 = vmatprep.subr.bf16.mxu0 0
  %284 = vmatpush1.bf16.msra.mxu0 0
  %285 = vmatprep.subr.bf16.mxu0 0
  %286 = vmatpush1.bf16.msra.mxu0 0
  %287 = vmatprep.subr.bf16.mxu0 0
  %288 = vmatpush1.bf16.msra.mxu0 0
  %289 = vmatprep.subr.bf16.mxu0 0
  %290 = vmatpush1.bf16.msra.mxu0 %v202
  %291 = vmatprep.subr.bf16.mxu0 0
  %292 = vmatpush1.bf16.msra.mxu0 %v201
  %293 = vmatprep.subr.bf16.mxu0 0
  %294 = vmatpush2.bf16.msra.mxu0 0
  %295 = vmatprep.subr.bf16.mxu0 0
  %296 = vmatpush2.bf16.msra.mxu0 0
  %297 = vmatprep.subr.bf16.mxu0 0
  %298 = vmatpush2.bf16.msra.mxu0 0
  %299 = vmatprep.subr.bf16.mxu0 0
  %300 = vmatpush2.bf16.msra.mxu0 0
  %301 = vmatprep.subr.bf16.mxu0 0
  %302 = vmatpush2.bf16.msra.mxu0 0
  %303 = vmatprep.subr.bf16.mxu0 0
  %304 = vmatpush2.bf16.msra.mxu0 0
  %305 = vmatprep.subr.bf16.mxu0 0
  %306 = vmatpush2.bf16.msra.mxu0 0
  %307 = vmatprep.subr.bf16.mxu0 0
  %308 = vmatpush2.bf16.msra.mxu0 0
  %309 = vmatprep.mubr.bf16.mxu0 0
  %310 = vmatmul.mubr.bf16.gmra.mxu0 %v223
  %v311 = vpop.f32.mrf.mxu0
  %v312 = vadd.f32 %v263, %v311
  %v313 = vpop.f32.mrf.mxu0
  %v314 = vpop.f32.mrf.mxu0
  %v315 = vadd.f32 %v266, %v314
  %v316 = vpop.f32.mrf.mxu0
  %317 = vmatprep.mubr.bf16.mxu0 0
  %318 = vmatmul.mubr.bf16.gmra.mxu0 %v226
  %v319 = vpop.f32.mrf.mxu0
  %v320 = vadd.f32 %v271, %v319
  %v321 = vpop.f32.mrf.mxu0
  %v322 = vpop.f32.mrf.mxu0
  %v323 = vadd.f32 %v274, %v322
  %v324 = vpop.f32.mrf.mxu0
  %325 = vdwg.mxu0
  %v326 = vpack.c.bf16 %v315, %v312
  %v327 = vpack.c.bf16 %v323, %v320
  %v330 = vunpack.c.l.b16 %v326
  %v331 = vunpack.c.h.b16 %v326
  %v332 = vunpack.c.l.b16 %v327
  %v333 = vunpack.c.h.b16 %v327
  %v334 = vpack.c.b16 %v330, %v330
  %v335 = vpack.c.b16 %v331, %v331
  %v336 = vpack.c.b16 %v332, %v332
  %v337 = vpack.c.b16 %v333, %v333
  %342 = vst [vmem:[%s3] sm:$0xf] %v334
  %343 = vst [vmem:[%s3 + $0x4] sm:$0xf] %v335
  %344 = vst [vmem:[%s3 + $0x8] sm:$0xf] %v336
  %345 = vst [vmem:[%s3 + $0xc] sm:$0xf] %v337
  // Predicated region
  $region14: #{net_head17_forward.33} parent=0 // pred_check
    _
  $region15: #{net_head17_forward.33} parent=0 // pred_check_branch
    %347 = sbr.rel (0) target = $region17
  $region16: #{net_head17_forward.33} parent=0 // pred_region
    _
  $region17: #{net_head17_forward.33} parent=0 // pred_fallthru
    _
  // Predicated region
  $region18: #{net_head17_forward.33} parent=0 // pred_check
    _
  $region19: #{net_head17_forward.33} parent=0 // pred_check_branch
    %349 = sbr.rel (0) target = $region21
  $region20: #{net_head17_forward.33} parent=0 // pred_region
    _
  $region21: #{net_head17_forward.33} parent=0 // pred_fallthru
    _

</llo_original>
